<compile_context>
chip_gen: v7x
topology: tpu7x:2x2x1
jax: 0.10.0
libtpu: 0.0.40
codegen_flags: <defaults>
</compile_context>

<pallas_src>
import jax
import jax.numpy as jnp
from jax.experimental import pallas as pl
from jax.experimental.pallas import tpu as pltpu


def lstm_attn_kernel(x_ref, w_ih_t_ref, w_hh_t_ref, b_ref,
                     ctx_w_ref, ctx_b_ref, pred_w_ref, pred_b_ref,
                     out_ref, xw_ref, seq_ref):
  """One batch tile of TB sequences.

  x_ref:   (T, TB, E) f32 time-major embedded tokens for this tile
  out_ref: (TB, 2)    f32 logits
  xw_ref:  (T*TB, 4H) f32 scratch (hoisted input projection)
  seq_ref: (T*TB, H)  f32 scratch (per-step hidden states, time-major rows)
  """
  T, TB, E = x_ref.shape
  H = w_hh_t_ref.shape[0]

  # Hoisted input projection: one (T*TB, E) @ (E, 4H) bf16 MXU matmul, f32
  # accumulate, written to VMEM scratch so only (TB, 4H) rows are live per step.
  x = x_ref[...].reshape(T * TB, E).astype(jnp.bfloat16)
  xw_ref[...] = jnp.dot(x, w_ih_t_ref[...],
                        preferred_element_type=jnp.float32) + b_ref[...]

  h = jnp.zeros((TB, H), jnp.float32)
  c = jnp.zeros((TB, H), jnp.float32)

  # Fully unrolled recurrence (T is a small compile-time constant; switch to
  # lax.fori_loop(..., unroll=4) if T grows). h/c stay in vregs; the W_hh^T
  # ref is indexed at each dot so no 32-vreg weight slab is kept live.
  for t in range(T):
    gates = xw_ref[pl.ds(t * TB, TB), :] + jnp.dot(
        h.astype(jnp.bfloat16), w_hh_t_ref[...],
        preferred_element_type=jnp.float32)                      # (TB, 4H)
    # Gate order was permuted in the wrapper to (i, f, o, g):
    # one sigmoid over a lane-aligned (TB, 3H) slab, one tanh over (TB, H).
    ifo = jax.nn.sigmoid(gates[:, 0:3 * H])
    g = jnp.tanh(gates[:, 3 * H:4 * H])
    c = ifo[:, H:2 * H] * c + ifo[:, 0:H] * g
    f32_h = ifo[:, 2 * H:3 * H] * jnp.tanh(c)
    h = f32_h
    # Off-critical-path store of this step's hidden state.
    seq_ref[pl.ds(t * TB, TB), :] = h

  # ---- attention over time (softmax(dim=0) per sequence) ----
  ctx_w = ctx_w_ref[...]                                         # (1, H)
  ctx_b = ctx_b_ref[...]                                         # (1, 1)
  att_cols = []
  for t in range(T):
    s_t = seq_ref[pl.ds(t * TB, TB), :]                          # (TB, H)
    att_cols.append(jnp.sum(s_t * ctx_w, axis=1, keepdims=True) + ctx_b)

  m = att_cols[0]
  for t in range(1, T):
    m = jnp.maximum(m, att_cols[t])
  e_cols = [jnp.exp(a - m) for a in att_cols]
  denom = e_cols[0]
  for t in range(1, T):
    denom = denom + e_cols[t]
  inv = pl.reciprocal(denom, approx=True)                        # EUP slot

  pooled = jnp.zeros((TB, H), jnp.float32)
  for t in range(T):
    pooled = pooled + (e_cols[t] * inv) * seq_ref[pl.ds(t * TB, TB), :]

  # ---- prediction layer: two lane-reductions (no MXU push for 2 columns) ----
  pw = pred_w_ref[...]                                           # (2, H)
  l0 = jnp.sum(pooled * pw[0:1, :], axis=1, keepdims=True)       # (TB, 1)
  l1 = jnp.sum(pooled * pw[1:2, :], axis=1, keepdims=True)       # (TB, 1)
  out_ref[...] = jnp.concatenate([l0, l1], axis=1) + pred_b_ref[...]


def _reorder_gates_ifgo_to_ifog(w):
  """Permute PyTorch LSTM gate blocks (i,f,g,o) along axis 0 to (i,f,o,g)."""
  i, f, g, o = jnp.split(w, 4, axis=0)
  return jnp.concatenate([i, f, o, g], axis=0)


def lstm_attention_forward(emb, params, *, batch_tile=8):
  """emb: (B, T, E) float32 embedded sequences. Returns (B, 2) float32 logits.

  Each sequence is processed independently (identical math to the PyTorch
  module's single-sequence forward); B=1, batch_tile=1 reproduces it exactly.
  """
  B, T, E = emb.shape
  H = params["w_hh"].shape[1]
  assert B % batch_tile == 0, "B must be a multiple of batch_tile"

  # Time-major layout so each step's rows are contiguous in the scratch.
  x = jnp.transpose(emb, (1, 0, 2))                              # (T, B, E) f32

  # Weight prep (zero runtime cost inside the kernel):
  #   * permute gate blocks i,f,g,o -> i,f,o,g
  #   * pre-transpose so every in-kernel matmul is row-major row @ matrix
  #   * cast MXU operands to bf16 (f32 accumulation is kept in-kernel)
  w_ih_t = _reorder_gates_ifgo_to_ifog(params["w_ih"]).T.astype(jnp.bfloat16)
  w_hh_t = _reorder_gates_ifgo_to_ifog(params["w_hh"]).T.astype(jnp.bfloat16)
  b = _reorder_gates_ifgo_to_ifog(params["b_ih"] + params["b_hh"])[None, :]
  ctx_w = params["ctx_w"]                          # (1, H) f32
  ctx_b = params["ctx_b"].reshape(1, 1)            # (1, 1) f32
  pred_w = params["pred_w"]                        # (2, H) f32
  pred_b = params["pred_b"][None, :]               # (1, 2) f32

  const = lambda bb: (0, 0)                        # weights: VMEM-resident
  grid = (B // batch_tile,)

  return pl.pallas_call(
      lstm_attn_kernel,
      out_shape=jax.ShapeDtypeStruct((B, 2), jnp.float32),
      grid_spec=pltpu.PrefetchScalarGridSpec(
          num_scalar_prefetch=0,
          grid=grid,
          in_specs=[
              pl.BlockSpec((T, batch_tile, E), lambda bb: (0, bb, 0)),
              pl.BlockSpec((E, 4 * H), const),
              pl.BlockSpec((H, 4 * H), const),
              pl.BlockSpec((1, 4 * H), const),
              pl.BlockSpec((1, H), const),
              pl.BlockSpec((1, 1), const),
              pl.BlockSpec((2, H), const),
              pl.BlockSpec((1, 2), const),
          ],
          out_specs=pl.BlockSpec((batch_tile, 2), lambda bb: (bb, 0)),
          scratch_shapes=[
              pltpu.VMEM((T * batch_tile, 4 * H), jnp.float32),   # xw
              pltpu.VMEM((T * batch_tile, H), jnp.float32),       # hidden states
          ],
      ),
      compiler_params=pltpu.CompilerParams(
          dimension_semantics=("parallel",)),        # shard batch tiles on v7x
  )(x, w_ih_t, w_hh_t, b, ctx_w, ctx_b, pred_w, pred_b)


def reference_forward(emb, params, matmul_dtype=jnp.float32):
  """Pure-JAX reference matching PyTorch LSTM + attention semantics.

  emb: (B, T, E). With matmul_dtype=bf16 it mirrors the kernel's mixed
  precision (bf16 matmul operands, f32 accumulate/elementwise); with f32 it is
  the PyTorch-semantics reference.
  """
  H = params["w_hh"].shape[1]
  w_ih_t = params["w_ih"].T.astype(matmul_dtype)   # (E, 4H), PyTorch gate order
  w_hh_t = params["w_hh"].T.astype(matmul_dtype)   # (H, 4H)
  b = (params["b_ih"] + params["b_hh"])[None, :]   # (1, 4H)

  def single(e):                                   # e: (T, E)
    T = e.shape[0]
    xw = jnp.dot(e.astype(matmul_dtype), w_ih_t,
                 preferred_element_type=jnp.float32) + b
    h = jnp.zeros((1, H), jnp.float32)
    c = jnp.zeros((1, H), jnp.float32)
    outs = []
    for t in range(T):
      gates = xw[t:t + 1] + jnp.dot(h.astype(matmul_dtype), w_hh_t,
                                    preferred_element_type=jnp.float32)
      i = jax.nn.sigmoid(gates[:, 0:H])
      f = jax.nn.sigmoid(gates[:, H:2 * H])
      g = jnp.tanh(gates[:, 2 * H:3 * H])
      o = jax.nn.sigmoid(gates[:, 3 * H:4 * H])
      c_new = f * c + i * g
      h_new = o * jnp.tanh(c_new)
      outs.append(h_new)
      h, c = h_new, c_new
    out = jnp.concatenate(outs, axis=0)                          # (T, H)
    att = out @ params["ctx_w"].T + params["ctx_b"]              # (T, 1)
    w = jax.nn.softmax(att, axis=0)                              # softmax(dim=0)
    pooled = w.T @ out                                           # (1, H)
    return pooled @ params["pred_w"].T + params["pred_b"][None]  # (1, 2)

  return jnp.concatenate([single(emb[i]) for i in range(emb.shape[0])], axis=0)


def init_params(key, vocab, emb_dim, hidden_dim):
  ks = jax.random.split(key, 9)
  s = 0.1
  return {
      "emb_table": jax.random.normal(ks[0], (vocab, emb_dim), jnp.float32) * s,
      "w_ih": jax.random.normal(ks[1], (4 * hidden_dim, emb_dim), jnp.float32) * s,
      "w_hh": jax.random.normal(ks[2], (4 * hidden_dim, hidden_dim), jnp.float32) * s,
      "b_ih": jax.random.normal(ks[3], (4 * hidden_dim,), jnp.float32) * s,
      "b_hh": jax.random.normal(ks[4], (4 * hidden_dim,), jnp.float32) * s,
      "ctx_w": jax.random.normal(ks[5], (1, hidden_dim), jnp.float32) * s,
      "ctx_b": jax.random.normal(ks[6], (1,), jnp.float32) * s,
      "pred_w": jax.random.normal(ks[7], (2, hidden_dim), jnp.float32) * s,
      "pred_b": jax.random.normal(ks[8], (2,), jnp.float32) * s,
  }


if __name__ == "__main__":
  # Small deterministic config: 16 sequences of length 8, emb=64, hidden=128
  # (lane-aligned gates), batch tile of 8 -> grid of 2 "parallel" steps.
  B, T, E, H, VOCAB = 16, 8, 64, 128, 32
  key = jax.random.PRNGKey(0)
  k_param, k_ids = jax.random.split(key)
  params = init_params(k_param, VOCAB, E, H)
  words_to_ids = jax.random.randint(k_ids, (B, T), 0, VOCAB)

  # Embedding lookup (glue, plain JAX gather).
  emb = jnp.take(params["emb_table"], words_to_ids, axis=0)      # (B, T, E)

  logits = lstm_attention_forward(emb, params, batch_tile=8)
  logits = jax.block_until_ready(logits)
  assert logits.shape == (B, 2)

  # 1) Check against a precision-matched reference (bf16 matmul operands,
  #    f32 elsewhere); tolerance leaves room for approx-reciprocal / EUP
  #    transcendental differences.
  ref_matched = reference_forward(emb, params, matmul_dtype=jnp.bfloat16)
  assert jnp.allclose(logits, ref_matched, atol=1e-3, rtol=1e-3), (
      logits, ref_matched)

  # 2) Loose check against the full-f32 PyTorch-semantics reference
  #    (bounds the bf16 weight/activation-cast approximation error).
  ref_f32 = reference_forward(emb, params, matmul_dtype=jnp.float32)
  assert jnp.allclose(logits, ref_f32, atol=2e-2, rtol=2e-2), (logits, ref_f32)

  print("KERNEL_OK")
</pallas_src>

<mosaic_0001>
module attributes {stable_mosaic.version = 11 : i64} {
  func.func @lstm_attn_kernel(%arg0: i32, %arg1: memref<8x8x64xf32, #tpu.memory_space<vmem>>, %arg2: memref<64x512xbf16, #tpu.memory_space<vmem>>, %arg3: memref<128x512xbf16, #tpu.memory_space<vmem>>, %arg4: memref<1x512xf32, #tpu.memory_space<vmem>>, %arg5: memref<1x128xf32, #tpu.memory_space<vmem>>, %arg6: memref<1x1xf32, #tpu.memory_space<vmem>>, %arg7: memref<2x128xf32, #tpu.memory_space<vmem>>, %arg8: memref<1x2xf32, #tpu.memory_space<vmem>>, %arg9: memref<8x2xf32, #tpu.memory_space<vmem>>, %arg10: memref<64x512xf32, #tpu.memory_space<vmem>>, %arg11: memref<64x128xf32, #tpu.memory_space<vmem>>) attributes {dimension_semantics = [#tpu.dimension_semantics<parallel>], iteration_bounds = array<i64: 2>, scalar_prefetch = 0 : i64, scratch_operands = 2 : i64, tpu.core_type = #tpu.core_type<tc>, window_params = [{transform_indices = @transform_0, window_bounds = array<i64: 8, 8, 64>}, {pipeline_mode = #tpu.pipeline_mode<synchronous>, transform_indices = @transform_1, window_bounds = array<i64: 64, 512>}, {pipeline_mode = #tpu.pipeline_mode<synchronous>, transform_indices = @transform_2, window_bounds = array<i64: 128, 512>}, {pipeline_mode = #tpu.pipeline_mode<synchronous>, transform_indices = @transform_3, window_bounds = array<i64: 1, 512>}, {pipeline_mode = #tpu.pipeline_mode<synchronous>, transform_indices = @transform_4, window_bounds = array<i64: 1, 128>}, {pipeline_mode = #tpu.pipeline_mode<synchronous>, transform_indices = @transform_5, window_bounds = array<i64: 1, 1>}, {pipeline_mode = #tpu.pipeline_mode<synchronous>, transform_indices = @transform_6, window_bounds = array<i64: 2, 128>}, {pipeline_mode = #tpu.pipeline_mode<synchronous>, transform_indices = @transform_7, window_bounds = array<i64: 1, 2>}, {transform_indices = @transform_8, window_bounds = array<i64: 8, 2>}]} {
    %c0 = arith.constant 0 : index
    %c0_0 = arith.constant 0 : index
    %c0_1 = arith.constant 0 : index
    %0 = vector.load %arg1[%c0, %c0_0, %c0_1] : memref<8x8x64xf32, #tpu.memory_space<vmem>>, vector<8x8x64xf32>
    %1 = vector.shape_cast %0 : vector<8x8x64xf32> to vector<64x64xf32>
    %2 = arith.truncf %1 : vector<64x64xf32> to vector<64x64xbf16>
    %c0_2 = arith.constant 0 : index
    %c0_3 = arith.constant 0 : index
    %3 = vector.load %arg2[%c0_2, %c0_3] : memref<64x512xbf16, #tpu.memory_space<vmem>>, vector<64x512xbf16>
    %cst = arith.constant dense<0.000000e+00> : vector<64x512xf32>
    %4 = tpu.matmul %2, %3, %cst {dimension_numbers = #tpu.dot_dimension_numbers<[1], [0], [0], [1], [0, 0, 1, 1], [], []>} : vector<64x64xbf16>, vector<64x512xbf16>, vector<64x512xf32> -> vector<64x512xf32>
    %c0_4 = arith.constant 0 : index
    %c0_5 = arith.constant 0 : index
    %5 = vector.load %arg4[%c0_4, %c0_5] : memref<1x512xf32, #tpu.memory_space<vmem>>, vector<1x512xf32>
    %6 = vector.broadcast %5 : vector<1x512xf32> to vector<64x512xf32>
    %7 = arith.addf %4, %6 : vector<64x512xf32>
    %c0_6 = arith.constant 0 : index
    %c0_7 = arith.constant 0 : index
    %8 = vector.load %arg10[%c0_6, %c0_7] : memref<64x512xf32, #tpu.memory_space<vmem>>, vector<64x512xf32>
    tpu.vector_store %arg10[%c0_6, %c0_7], %7 {strides = array<i32>} : memref<64x512xf32, #tpu.memory_space<vmem>>, vector<64x512xf32>,
    %cst_8 = arith.constant 0.000000e+00 : f32
    %9 = vector.broadcast %cst_8 : f32 to vector<8x128xf32>
    %cst_9 = arith.constant 0.000000e+00 : f32
    %10 = vector.broadcast %cst_9 : f32 to vector<8x128xf32>
    %c0_10 = arith.constant 0 : index
    %c0_11 = arith.constant 0 : index
    %11 = vector.load %arg10[%c0_10, %c0_11] : memref<64x512xf32, #tpu.memory_space<vmem>>, vector<8x512xf32>
    %12 = arith.truncf %9 : vector<8x128xf32> to vector<8x128xbf16>
    %c0_12 = arith.constant 0 : index
    %c0_13 = arith.constant 0 : index
    %13 = vector.load %arg3[%c0_12, %c0_13] : memref<128x512xbf16, #tpu.memory_space<vmem>>, vector<128x512xbf16>
    %cst_14 = arith.constant dense<0.000000e+00> : vector<8x512xf32>
    %14 = tpu.matmul %12, %13, %cst_14 {dimension_numbers = #tpu.dot_dimension_numbers<[1], [0], [0], [1], [0, 0, 1, 1], [], []>} : vector<8x128xbf16>, vector<128x512xbf16>, vector<8x512xf32> -> vector<8x512xf32>
    %15 = arith.addf %11, %14 : vector<8x512xf32>
    %16 = vector.extract_strided_slice %15 {offsets = [0, 0], sizes = [8, 384], strides = [1, 1]} : vector<8x512xf32> to vector<8x384xf32>
    %17 = arith.negf %16 : vector<8x384xf32>
    %18 = math.exp %17 : vector<8x384xf32>
    %cst_15 = arith.constant 1.000000e+00 : f32
    %19 = vector.broadcast %cst_15 : f32 to vector<8x384xf32>
    %20 = arith.addf %19, %18 : vector<8x384xf32>
    %21 = arith.divf %19, %20 : vector<8x384xf32>
    %22 = vector.extract_strided_slice %15 {offsets = [0, 384], sizes = [8, 128], strides = [1, 1]} : vector<8x512xf32> to vector<8x128xf32>
    %23 = math.tanh %22 : vector<8x128xf32>
    %24 = vector.extract_strided_slice %21 {offsets = [0, 128], sizes = [8, 128], strides = [1, 1]} : vector<8x384xf32> to vector<8x128xf32>
    %25 = arith.mulf %24, %10 : vector<8x128xf32>
    %26 = vector.extract_strided_slice %21 {offsets = [0, 0], sizes = [8, 128], strides = [1, 1]} : vector<8x384xf32> to vector<8x128xf32>
    %27 = arith.mulf %26, %23 : vector<8x128xf32>
    %28 = arith.addf %25, %27 : vector<8x128xf32>
    %29 = vector.extract_strided_slice %21 {offsets = [0, 256], sizes = [8, 128], strides = [1, 1]} : vector<8x384xf32> to vector<8x128xf32>
    %30 = math.tanh %28 : vector<8x128xf32>
    %31 = arith.mulf %29, %30 : vector<8x128xf32>
    %c0_16 = arith.constant 0 : index
    %c0_17 = arith.constant 0 : index
    %32 = vector.load %arg11[%c0_16, %c0_17] : memref<64x128xf32, #tpu.memory_space<vmem>>, vector<8x128xf32>
    tpu.vector_store %arg11[%c0_16, %c0_17], %31 {strides = array<i32>} : memref<64x128xf32, #tpu.memory_space<vmem>>, vector<8x128xf32>,
    %c8 = arith.constant 8 : index
    %c0_18 = arith.constant 0 : index
    %33 = vector.load %arg10[%c8, %c0_18] : memref<64x512xf32, #tpu.memory_space<vmem>>, vector<8x512xf32>
    %34 = arith.truncf %31 : vector<8x128xf32> to vector<8x128xbf16>
    %c0_19 = arith.constant 0 : index
    %c0_20 = arith.constant 0 : index
    %35 = vector.load %arg3[%c0_19, %c0_20] : memref<128x512xbf16, #tpu.memory_space<vmem>>, vector<128x512xbf16>
    %cst_21 = arith.constant dense<0.000000e+00> : vector<8x512xf32>
    %36 = tpu.matmul %34, %35, %cst_21 {dimension_numbers = #tpu.dot_dimension_numbers<[1], [0], [0], [1], [0, 0, 1, 1], [], []>} : vector<8x128xbf16>, vector<128x512xbf16>, vector<8x512xf32> -> vector<8x512xf32>
    %37 = arith.addf %33, %36 : vector<8x512xf32>
    %38 = vector.extract_strided_slice %37 {offsets = [0, 0], sizes = [8, 384], strides = [1, 1]} : vector<8x512xf32> to vector<8x384xf32>
    %39 = arith.negf %38 : vector<8x384xf32>
    %40 = math.exp %39 : vector<8x384xf32>
    %cst_22 = arith.constant 1.000000e+00 : f32
    %41 = vector.broadcast %cst_22 : f32 to vector<8x384xf32>
    %42 = arith.addf %41, %40 : vector<8x384xf32>
    %43 = arith.divf %41, %42 : vector<8x384xf32>
    %44 = vector.extract_strided_slice %37 {offsets = [0, 384], sizes = [8, 128], strides = [1, 1]} : vector<8x512xf32> to vector<8x128xf32>
    %45 = math.tanh %44 : vector<8x128xf32>
    %46 = vector.extract_strided_slice %43 {offsets = [0, 128], sizes = [8, 128], strides = [1, 1]} : vector<8x384xf32> to vector<8x128xf32>
    %47 = arith.mulf %46, %28 : vector<8x128xf32>
    %48 = vector.extract_strided_slice %43 {offsets = [0, 0], sizes = [8, 128], strides = [1, 1]} : vector<8x384xf32> to vector<8x128xf32>
    %49 = arith.mulf %48, %45 : vector<8x128xf32>
    %50 = arith.addf %47, %49 : vector<8x128xf32>
    %51 = vector.extract_strided_slice %43 {offsets = [0, 256], sizes = [8, 128], strides = [1, 1]} : vector<8x384xf32> to vector<8x128xf32>
    %52 = math.tanh %50 : vector<8x128xf32>
    %53 = arith.mulf %51, %52 : vector<8x128xf32>
    %c8_23 = arith.constant 8 : index
    %c0_24 = arith.constant 0 : index
    %54 = vector.load %arg11[%c8_23, %c0_24] : memref<64x128xf32, #tpu.memory_space<vmem>>, vector<8x128xf32>
    tpu.vector_store %arg11[%c8_23, %c0_24], %53 {strides = array<i32>} : memref<64x128xf32, #tpu.memory_space<vmem>>, vector<8x128xf32>,
    %c16 = arith.constant 16 : index
    %c0_25 = arith.constant 0 : index
    %55 = vector.load %arg10[%c16, %c0_25] : memref<64x512xf32, #tpu.memory_space<vmem>>, vector<8x512xf32>
    %56 = arith.truncf %53 : vector<8x128xf32> to vector<8x128xbf16>
    %c0_26 = arith.constant 0 : index
    %c0_27 = arith.constant 0 : index
    %57 = vector.load %arg3[%c0_26, %c0_27] : memref<128x512xbf16, #tpu.memory_space<vmem>>, vector<128x512xbf16>
    %cst_28 = arith.constant dense<0.000000e+00> : vector<8x512xf32>
    %58 = tpu.matmul %56, %57, %cst_28 {dimension_numbers = #tpu.dot_dimension_numbers<[1], [0], [0], [1], [0, 0, 1, 1], [], []>} : vector<8x128xbf16>, vector<128x512xbf16>, vector<8x512xf32> -> vector<8x512xf32>
    %59 = arith.addf %55, %58 : vector<8x512xf32>
    %60 = vector.extract_strided_slice %59 {offsets = [0, 0], sizes = [8, 384], strides = [1, 1]} : vector<8x512xf32> to vector<8x384xf32>
    %61 = arith.negf %60 : vector<8x384xf32>
    %62 = math.exp %61 : vector<8x384xf32>
    %cst_29 = arith.constant 1.000000e+00 : f32
    %63 = vector.broadcast %cst_29 : f32 to vector<8x384xf32>
    %64 = arith.addf %63, %62 : vector<8x384xf32>
    %65 = arith.divf %63, %64 : vector<8x384xf32>
    %66 = vector.extract_strided_slice %59 {offsets = [0, 384], sizes = [8, 128], strides = [1, 1]} : vector<8x512xf32> to vector<8x128xf32>
    %67 = math.tanh %66 : vector<8x128xf32>
    %68 = vector.extract_strided_slice %65 {offsets = [0, 128], sizes = [8, 128], strides = [1, 1]} : vector<8x384xf32> to vector<8x128xf32>
    %69 = arith.mulf %68, %50 : vector<8x128xf32>
    %70 = vector.extract_strided_slice %65 {offsets = [0, 0], sizes = [8, 128], strides = [1, 1]} : vector<8x384xf32> to vector<8x128xf32>
    %71 = arith.mulf %70, %67 : vector<8x128xf32>
    %72 = arith.addf %69, %71 : vector<8x128xf32>
    %73 = vector.extract_strided_slice %65 {offsets = [0, 256], sizes = [8, 128], strides = [1, 1]} : vector<8x384xf32> to vector<8x128xf32>
    %74 = math.tanh %72 : vector<8x128xf32>
    %75 = arith.mulf %73, %74 : vector<8x128xf32>
    %c16_30 = arith.constant 16 : index
    %c0_31 = arith.constant 0 : index
    %76 = vector.load %arg11[%c16_30, %c0_31] : memref<64x128xf32, #tpu.memory_space<vmem>>, vector<8x128xf32>
    tpu.vector_store %arg11[%c16_30, %c0_31], %75 {strides = array<i32>} : memref<64x128xf32, #tpu.memory_space<vmem>>, vector<8x128xf32>,
    %c24 = arith.constant 24 : index
    %c0_32 = arith.constant 0 : index
    %77 = vector.load %arg10[%c24, %c0_32] : memref<64x512xf32, #tpu.memory_space<vmem>>, vector<8x512xf32>
    %78 = arith.truncf %75 : vector<8x128xf32> to vector<8x128xbf16>
    %c0_33 = arith.constant 0 : index
    %c0_34 = arith.constant 0 : index
    %79 = vector.load %arg3[%c0_33, %c0_34] : memref<128x512xbf16, #tpu.memory_space<vmem>>, vector<128x512xbf16>
    %cst_35 = arith.constant dense<0.000000e+00> : vector<8x512xf32>
    %80 = tpu.matmul %78, %79, %cst_35 {dimension_numbers = #tpu.dot_dimension_numbers<[1], [0], [0], [1], [0, 0, 1, 1], [], []>} : vector<8x128xbf16>, vector<128x512xbf16>, vector<8x512xf32> -> vector<8x512xf32>
    %81 = arith.addf %77, %80 : vector<8x512xf32>
    %82 = vector.extract_strided_slice %81 {offsets = [0, 0], sizes = [8, 384], strides = [1, 1]} : vector<8x512xf32> to vector<8x384xf32>
    %83 = arith.negf %82 : vector<8x384xf32>
    %84 = math.exp %83 : vector<8x384xf32>
    %cst_36 = arith.constant 1.000000e+00 : f32
    %85 = vector.broadcast %cst_36 : f32 to vector<8x384xf32>
    %86 = arith.addf %85, %84 : vector<8x384xf32>
    %87 = arith.divf %85, %86 : vector<8x384xf32>
    %88 = vector.extract_strided_slice %81 {offsets = [0, 384], sizes = [8, 128], strides = [1, 1]} : vector<8x512xf32> to vector<8x128xf32>
    %89 = math.tanh %88 : vector<8x128xf32>
    %90 = vector.extract_strided_slice %87 {offsets = [0, 128], sizes = [8, 128], strides = [1, 1]} : vector<8x384xf32> to vector<8x128xf32>
    %91 = arith.mulf %90, %72 : vector<8x128xf32>
    %92 = vector.extract_strided_slice %87 {offsets = [0, 0], sizes = [8, 128], strides = [1, 1]} : vector<8x384xf32> to vector<8x128xf32>
    %93 = arith.mulf %92, %89 : vector<8x128xf32>
    %94 = arith.addf %91, %93 : vector<8x128xf32>
    %95 = vector.extract_strided_slice %87 {offsets = [0, 256], sizes = [8, 128], strides = [1, 1]} : vector<8x384xf32> to vector<8x128xf32>
    %96 = math.tanh %94 : vector<8x128xf32>
    %97 = arith.mulf %95, %96 : vector<8x128xf32>
    %c24_37 = arith.constant 24 : index
    %c0_38 = arith.constant 0 : index
    %98 = vector.load %arg11[%c24_37, %c0_38] : memref<64x128xf32, #tpu.memory_space<vmem>>, vector<8x128xf32>
    tpu.vector_store %arg11[%c24_37, %c0_38], %97 {strides = array<i32>} : memref<64x128xf32, #tpu.memory_space<vmem>>, vector<8x128xf32>,
    %c32 = arith.constant 32 : index
    %c0_39 = arith.constant 0 : index
    %99 = vector.load %arg10[%c32, %c0_39] : memref<64x512xf32, #tpu.memory_space<vmem>>, vector<8x512xf32>
    %100 = arith.truncf %97 : vector<8x128xf32> to vector<8x128xbf16>
    %c0_40 = arith.constant 0 : index
    %c0_41 = arith.constant 0 : index
    %101 = vector.load %arg3[%c0_40, %c0_41] : memref<128x512xbf16, #tpu.memory_space<vmem>>, vector<128x512xbf16>
    %cst_42 = arith.constant dense<0.000000e+00> : vector<8x512xf32>
    %102 = tpu.matmul %100, %101, %cst_42 {dimension_numbers = #tpu.dot_dimension_numbers<[1], [0], [0], [1], [0, 0, 1, 1], [], []>} : vector<8x128xbf16>, vector<128x512xbf16>, vector<8x512xf32> -> vector<8x512xf32>
    %103 = arith.addf %99, %102 : vector<8x512xf32>
    %104 = vector.extract_strided_slice %103 {offsets = [0, 0], sizes = [8, 384], strides = [1, 1]} : vector<8x512xf32> to vector<8x384xf32>
    %105 = arith.negf %104 : vector<8x384xf32>
    %106 = math.exp %105 : vector<8x384xf32>
    %cst_43 = arith.constant 1.000000e+00 : f32
    %107 = vector.broadcast %cst_43 : f32 to vector<8x384xf32>
    %108 = arith.addf %107, %106 : vector<8x384xf32>
    %109 = arith.divf %107, %108 : vector<8x384xf32>
    %110 = vector.extract_strided_slice %103 {offsets = [0, 384], sizes = [8, 128], strides = [1, 1]} : vector<8x512xf32> to vector<8x128xf32>
    %111 = math.tanh %110 : vector<8x128xf32>
    %112 = vector.extract_strided_slice %109 {offsets = [0, 128], sizes = [8, 128], strides = [1, 1]} : vector<8x384xf32> to vector<8x128xf32>
    %113 = arith.mulf %112, %94 : vector<8x128xf32>
    %114 = vector.extract_strided_slice %109 {offsets = [0, 0], sizes = [8, 128], strides = [1, 1]} : vector<8x384xf32> to vector<8x128xf32>
    %115 = arith.mulf %114, %111 : vector<8x128xf32>
    %116 = arith.addf %113, %115 : vector<8x128xf32>
    %117 = vector.extract_strided_slice %109 {offsets = [0, 256], sizes = [8, 128], strides = [1, 1]} : vector<8x384xf32> to vector<8x128xf32>
    %118 = math.tanh %116 : vector<8x128xf32>
    %119 = arith.mulf %117, %118 : vector<8x128xf32>
    %c32_44 = arith.constant 32 : index
    %c0_45 = arith.constant 0 : index
    %120 = vector.load %arg11[%c32_44, %c0_45] : memref<64x128xf32, #tpu.memory_space<vmem>>, vector<8x128xf32>
    tpu.vector_store %arg11[%c32_44, %c0_45], %119 {strides = array<i32>} : memref<64x128xf32, #tpu.memory_space<vmem>>, vector<8x128xf32>,
    %c40 = arith.constant 40 : index
    %c0_46 = arith.constant 0 : index
    %121 = vector.load %arg10[%c40, %c0_46] : memref<64x512xf32, #tpu.memory_space<vmem>>, vector<8x512xf32>
    %122 = arith.truncf %119 : vector<8x128xf32> to vector<8x128xbf16>
    %c0_47 = arith.constant 0 : index
    %c0_48 = arith.constant 0 : index
    %123 = vector.load %arg3[%c0_47, %c0_48] : memref<128x512xbf16, #tpu.memory_space<vmem>>, vector<128x512xbf16>
    %cst_49 = arith.constant dense<0.000000e+00> : vector<8x512xf32>
    %124 = tpu.matmul %122, %123, %cst_49 {dimension_numbers = #tpu.dot_dimension_numbers<[1], [0], [0], [1], [0, 0, 1, 1], [], []>} : vector<8x128xbf16>, vector<128x512xbf16>, vector<8x512xf32> -> vector<8x512xf32>
    %125 = arith.addf %121, %124 : vector<8x512xf32>
    %126 = vector.extract_strided_slice %125 {offsets = [0, 0], sizes = [8, 384], strides = [1, 1]} : vector<8x512xf32> to vector<8x384xf32>
    %127 = arith.negf %126 : vector<8x384xf32>
    %128 = math.exp %127 : vector<8x384xf32>
    %cst_50 = arith.constant 1.000000e+00 : f32
    %129 = vector.broadcast %cst_50 : f32 to vector<8x384xf32>
    %130 = arith.addf %129, %128 : vector<8x384xf32>
    %131 = arith.divf %129, %130 : vector<8x384xf32>
    %132 = vector.extract_strided_slice %125 {offsets = [0, 384], sizes = [8, 128], strides = [1, 1]} : vector<8x512xf32> to vector<8x128xf32>
    %133 = math.tanh %132 : vector<8x128xf32>
    %134 = vector.extract_strided_slice %131 {offsets = [0, 128], sizes = [8, 128], strides = [1, 1]} : vector<8x384xf32> to vector<8x128xf32>
    %135 = arith.mulf %134, %116 : vector<8x128xf32>
    %136 = vector.extract_strided_slice %131 {offsets = [0, 0], sizes = [8, 128], strides = [1, 1]} : vector<8x384xf32> to vector<8x128xf32>
    %137 = arith.mulf %136, %133 : vector<8x128xf32>
    %138 = arith.addf %135, %137 : vector<8x128xf32>
    %139 = vector.extract_strided_slice %131 {offsets = [0, 256], sizes = [8, 128], strides = [1, 1]} : vector<8x384xf32> to vector<8x128xf32>
    %140 = math.tanh %138 : vector<8x128xf32>
    %141 = arith.mulf %139, %140 : vector<8x128xf32>
    %c40_51 = arith.constant 40 : index
    %c0_52 = arith.constant 0 : index
    %142 = vector.load %arg11[%c40_51, %c0_52] : memref<64x128xf32, #tpu.memory_space<vmem>>, vector<8x128xf32>
    tpu.vector_store %arg11[%c40_51, %c0_52], %141 {strides = array<i32>} : memref<64x128xf32, #tpu.memory_space<vmem>>, vector<8x128xf32>,
    %c48 = arith.constant 48 : index
    %c0_53 = arith.constant 0 : index
    %143 = vector.load %arg10[%c48, %c0_53] : memref<64x512xf32, #tpu.memory_space<vmem>>, vector<8x512xf32>
    %144 = arith.truncf %141 : vector<8x128xf32> to vector<8x128xbf16>
    %c0_54 = arith.constant 0 : index
    %c0_55 = arith.constant 0 : index
    %145 = vector.load %arg3[%c0_54, %c0_55] : memref<128x512xbf16, #tpu.memory_space<vmem>>, vector<128x512xbf16>
    %cst_56 = arith.constant dense<0.000000e+00> : vector<8x512xf32>
    %146 = tpu.matmul %144, %145, %cst_56 {dimension_numbers = #tpu.dot_dimension_numbers<[1], [0], [0], [1], [0, 0, 1, 1], [], []>} : vector<8x128xbf16>, vector<128x512xbf16>, vector<8x512xf32> -> vector<8x512xf32>
    %147 = arith.addf %143, %146 : vector<8x512xf32>
    %148 = vector.extract_strided_slice %147 {offsets = [0, 0], sizes = [8, 384], strides = [1, 1]} : vector<8x512xf32> to vector<8x384xf32>
    %149 = arith.negf %148 : vector<8x384xf32>
    %150 = math.exp %149 : vector<8x384xf32>
    %cst_57 = arith.constant 1.000000e+00 : f32
    %151 = vector.broadcast %cst_57 : f32 to vector<8x384xf32>
    %152 = arith.addf %151, %150 : vector<8x384xf32>
    %153 = arith.divf %151, %152 : vector<8x384xf32>
    %154 = vector.extract_strided_slice %147 {offsets = [0, 384], sizes = [8, 128], strides = [1, 1]} : vector<8x512xf32> to vector<8x128xf32>
    %155 = math.tanh %154 : vector<8x128xf32>
    %156 = vector.extract_strided_slice %153 {offsets = [0, 128], sizes = [8, 128], strides = [1, 1]} : vector<8x384xf32> to vector<8x128xf32>
    %157 = arith.mulf %156, %138 : vector<8x128xf32>
    %158 = vector.extract_strided_slice %153 {offsets = [0, 0], sizes = [8, 128], strides = [1, 1]} : vector<8x384xf32> to vector<8x128xf32>
    %159 = arith.mulf %158, %155 : vector<8x128xf32>
    %160 = arith.addf %157, %159 : vector<8x128xf32>
    %161 = vector.extract_strided_slice %153 {offsets = [0, 256], sizes = [8, 128], strides = [1, 1]} : vector<8x384xf32> to vector<8x128xf32>
    %162 = math.tanh %160 : vector<8x128xf32>
    %163 = arith.mulf %161, %162 : vector<8x128xf32>
    %c48_58 = arith.constant 48 : index
    %c0_59 = arith.constant 0 : index
    %164 = vector.load %arg11[%c48_58, %c0_59] : memref<64x128xf32, #tpu.memory_space<vmem>>, vector<8x128xf32>
    tpu.vector_store %arg11[%c48_58, %c0_59], %163 {strides = array<i32>} : memref<64x128xf32, #tpu.memory_space<vmem>>, vector<8x128xf32>,
    %c56 = arith.constant 56 : index
    %c0_60 = arith.constant 0 : index
    %165 = vector.load %arg10[%c56, %c0_60] : memref<64x512xf32, #tpu.memory_space<vmem>>, vector<8x512xf32>
    %166 = arith.truncf %163 : vector<8x128xf32> to vector<8x128xbf16>
    %c0_61 = arith.constant 0 : index
    %c0_62 = arith.constant 0 : index
    %167 = vector.load %arg3[%c0_61, %c0_62] : memref<128x512xbf16, #tpu.memory_space<vmem>>, vector<128x512xbf16>
    %cst_63 = arith.constant dense<0.000000e+00> : vector<8x512xf32>
    %168 = tpu.matmul %166, %167, %cst_63 {dimension_numbers = #tpu.dot_dimension_numbers<[1], [0], [0], [1], [0, 0, 1, 1], [], []>} : vector<8x128xbf16>, vector<128x512xbf16>, vector<8x512xf32> -> vector<8x512xf32>
    %169 = arith.addf %165, %168 : vector<8x512xf32>
    %170 = vector.extract_strided_slice %169 {offsets = [0, 0], sizes = [8, 384], strides = [1, 1]} : vector<8x512xf32> to vector<8x384xf32>
    %171 = arith.negf %170 : vector<8x384xf32>
    %172 = math.exp %171 : vector<8x384xf32>
    %cst_64 = arith.constant 1.000000e+00 : f32
    %173 = vector.broadcast %cst_64 : f32 to vector<8x384xf32>
    %174 = arith.addf %173, %172 : vector<8x384xf32>
    %175 = arith.divf %173, %174 : vector<8x384xf32>
    %176 = vector.extract_strided_slice %169 {offsets = [0, 384], sizes = [8, 128], strides = [1, 1]} : vector<8x512xf32> to vector<8x128xf32>
    %177 = math.tanh %176 : vector<8x128xf32>
    %178 = vector.extract_strided_slice %175 {offsets = [0, 128], sizes = [8, 128], strides = [1, 1]} : vector<8x384xf32> to vector<8x128xf32>
    %179 = arith.mulf %178, %160 : vector<8x128xf32>
    %180 = vector.extract_strided_slice %175 {offsets = [0, 0], sizes = [8, 128], strides = [1, 1]} : vector<8x384xf32> to vector<8x128xf32>
    %181 = arith.mulf %180, %177 : vector<8x128xf32>
    %182 = arith.addf %179, %181 : vector<8x128xf32>
    %183 = vector.extract_strided_slice %175 {offsets = [0, 256], sizes = [8, 128], strides = [1, 1]} : vector<8x384xf32> to vector<8x128xf32>
    %184 = math.tanh %182 : vector<8x128xf32>
    %185 = arith.mulf %183, %184 : vector<8x128xf32>
    %c56_65 = arith.constant 56 : index
    %c0_66 = arith.constant 0 : index
    %186 = vector.load %arg11[%c56_65, %c0_66] : memref<64x128xf32, #tpu.memory_space<vmem>>, vector<8x128xf32>
    tpu.vector_store %arg11[%c56_65, %c0_66], %185 {strides = array<i32>} : memref<64x128xf32, #tpu.memory_space<vmem>>, vector<8x128xf32>,
    %c0_67 = arith.constant 0 : index
    %c0_68 = arith.constant 0 : index
    %187 = vector.load %arg5[%c0_67, %c0_68] : memref<1x128xf32, #tpu.memory_space<vmem>>, vector<1x128xf32>
    %c0_69 = arith.constant 0 : index
    %c0_70 = arith.constant 0 : index
    %188 = vector.load %arg6[%c0_69, %c0_70] : memref<1x1xf32, #tpu.memory_space<vmem>>, vector<1x1xf32>
    %c0_71 = arith.constant 0 : index
    %c0_72 = arith.constant 0 : index
    %189 = vector.load %arg11[%c0_71, %c0_72] : memref<64x128xf32, #tpu.memory_space<vmem>>, vector<8x128xf32>
    %190 = vector.broadcast %187 : vector<1x128xf32> to vector<8x128xf32>
    %191 = arith.mulf %189, %190 : vector<8x128xf32>
    %cst_73 = arith.constant dense<0.000000e+00> : vector<8xf32>
    %192 = vector.multi_reduction <add>, %191, %cst_73 [1] : vector<8x128xf32> to vector<8xf32>
    %193 = vector.shape_cast %192 : vector<8xf32> to vector<8x1xf32>
    %194 = vector.broadcast %188 : vector<1x1xf32> to vector<8x1xf32>
    %195 = arith.addf %193, %194 : vector<8x1xf32>
    %c8_74 = arith.constant 8 : index
    %c0_75 = arith.constant 0 : index
    %196 = vector.load %arg11[%c8_74, %c0_75] : memref<64x128xf32, #tpu.memory_space<vmem>>, vector<8x128xf32>
    %197 = vector.broadcast %187 : vector<1x128xf32> to vector<8x128xf32>
    %198 = arith.mulf %196, %197 : vector<8x128xf32>
    %cst_76 = arith.constant dense<0.000000e+00> : vector<8xf32>
    %199 = vector.multi_reduction <add>, %198, %cst_76 [1] : vector<8x128xf32> to vector<8xf32>
    %200 = vector.shape_cast %199 : vector<8xf32> to vector<8x1xf32>
    %201 = vector.broadcast %188 : vector<1x1xf32> to vector<8x1xf32>
    %202 = arith.addf %200, %201 : vector<8x1xf32>
    %c16_77 = arith.constant 16 : index
    %c0_78 = arith.constant 0 : index
    %203 = vector.load %arg11[%c16_77, %c0_78] : memref<64x128xf32, #tpu.memory_space<vmem>>, vector<8x128xf32>
    %204 = vector.broadcast %187 : vector<1x128xf32> to vector<8x128xf32>
    %205 = arith.mulf %203, %204 : vector<8x128xf32>
    %cst_79 = arith.constant dense<0.000000e+00> : vector<8xf32>
    %206 = vector.multi_reduction <add>, %205, %cst_79 [1] : vector<8x128xf32> to vector<8xf32>
    %207 = vector.shape_cast %206 : vector<8xf32> to vector<8x1xf32>
    %208 = vector.broadcast %188 : vector<1x1xf32> to vector<8x1xf32>
    %209 = arith.addf %207, %208 : vector<8x1xf32>
    %c24_80 = arith.constant 24 : index
    %c0_81 = arith.constant 0 : index
    %210 = vector.load %arg11[%c24_80, %c0_81] : memref<64x128xf32, #tpu.memory_space<vmem>>, vector<8x128xf32>
    %211 = vector.broadcast %187 : vector<1x128xf32> to vector<8x128xf32>
    %212 = arith.mulf %210, %211 : vector<8x128xf32>
    %cst_82 = arith.constant dense<0.000000e+00> : vector<8xf32>
    %213 = vector.multi_reduction <add>, %212, %cst_82 [1] : vector<8x128xf32> to vector<8xf32>
    %214 = vector.shape_cast %213 : vector<8xf32> to vector<8x1xf32>
    %215 = vector.broadcast %188 : vector<1x1xf32> to vector<8x1xf32>
    %216 = arith.addf %214, %215 : vector<8x1xf32>
    %c32_83 = arith.constant 32 : index
    %c0_84 = arith.constant 0 : index
    %217 = vector.load %arg11[%c32_83, %c0_84] : memref<64x128xf32, #tpu.memory_space<vmem>>, vector<8x128xf32>
    %218 = vector.broadcast %187 : vector<1x128xf32> to vector<8x128xf32>
    %219 = arith.mulf %217, %218 : vector<8x128xf32>
    %cst_85 = arith.constant dense<0.000000e+00> : vector<8xf32>
    %220 = vector.multi_reduction <add>, %219, %cst_85 [1] : vector<8x128xf32> to vector<8xf32>
    %221 = vector.shape_cast %220 : vector<8xf32> to vector<8x1xf32>
    %222 = vector.broadcast %188 : vector<1x1xf32> to vector<8x1xf32>
    %223 = arith.addf %221, %222 : vector<8x1xf32>
    %c40_86 = arith.constant 40 : index
    %c0_87 = arith.constant 0 : index
    %224 = vector.load %arg11[%c40_86, %c0_87] : memref<64x128xf32, #tpu.memory_space<vmem>>, vector<8x128xf32>
    %225 = vector.broadcast %187 : vector<1x128xf32> to vector<8x128xf32>
    %226 = arith.mulf %224, %225 : vector<8x128xf32>
    %cst_88 = arith.constant dense<0.000000e+00> : vector<8xf32>
    %227 = vector.multi_reduction <add>, %226, %cst_88 [1] : vector<8x128xf32> to vector<8xf32>
    %228 = vector.shape_cast %227 : vector<8xf32> to vector<8x1xf32>
    %229 = vector.broadcast %188 : vector<1x1xf32> to vector<8x1xf32>
    %230 = arith.addf %228, %229 : vector<8x1xf32>
    %c48_89 = arith.constant 48 : index
    %c0_90 = arith.constant 0 : index
    %231 = vector.load %arg11[%c48_89, %c0_90] : memref<64x128xf32, #tpu.memory_space<vmem>>, vector<8x128xf32>
    %232 = vector.broadcast %187 : vector<1x128xf32> to vector<8x128xf32>
    %233 = arith.mulf %231, %232 : vector<8x128xf32>
    %cst_91 = arith.constant dense<0.000000e+00> : vector<8xf32>
    %234 = vector.multi_reduction <add>, %233, %cst_91 [1] : vector<8x128xf32> to vector<8xf32>
    %235 = vector.shape_cast %234 : vector<8xf32> to vector<8x1xf32>
    %236 = vector.broadcast %188 : vector<1x1xf32> to vector<8x1xf32>
    %237 = arith.addf %235, %236 : vector<8x1xf32>
    %c56_92 = arith.constant 56 : index
    %c0_93 = arith.constant 0 : index
    %238 = vector.load %arg11[%c56_92, %c0_93] : memref<64x128xf32, #tpu.memory_space<vmem>>, vector<8x128xf32>
    %239 = vector.broadcast %187 : vector<1x128xf32> to vector<8x128xf32>
    %240 = arith.mulf %238, %239 : vector<8x128xf32>
    %cst_94 = arith.constant dense<0.000000e+00> : vector<8xf32>
    %241 = vector.multi_reduction <add>, %240, %cst_94 [1] : vector<8x128xf32> to vector<8xf32>
    %242 = vector.shape_cast %241 : vector<8xf32> to vector<8x1xf32>
    %243 = vector.broadcast %188 : vector<1x1xf32> to vector<8x1xf32>
    %244 = arith.addf %242, %243 : vector<8x1xf32>
    %245 = arith.maximumf %195, %202 : vector<8x1xf32>
    %246 = arith.maximumf %245, %209 : vector<8x1xf32>
    %247 = arith.maximumf %246, %216 : vector<8x1xf32>
    %248 = arith.maximumf %247, %223 : vector<8x1xf32>
    %249 = arith.maximumf %248, %230 : vector<8x1xf32>
    %250 = arith.maximumf %249, %237 : vector<8x1xf32>
    %251 = arith.maximumf %250, %244 : vector<8x1xf32>
    %252 = arith.subf %195, %251 : vector<8x1xf32>
    %253 = math.exp %252 : vector<8x1xf32>
    %254 = arith.subf %202, %251 : vector<8x1xf32>
    %255 = math.exp %254 : vector<8x1xf32>
    %256 = arith.subf %209, %251 : vector<8x1xf32>
    %257 = math.exp %256 : vector<8x1xf32>
    %258 = arith.subf %216, %251 : vector<8x1xf32>
    %259 = math.exp %258 : vector<8x1xf32>
    %260 = arith.subf %223, %251 : vector<8x1xf32>
    %261 = math.exp %260 : vector<8x1xf32>
    %262 = arith.subf %230, %251 : vector<8x1xf32>
    %263 = math.exp %262 : vector<8x1xf32>
    %264 = arith.subf %237, %251 : vector<8x1xf32>
    %265 = math.exp %264 : vector<8x1xf32>
    %266 = arith.subf %244, %251 : vector<8x1xf32>
    %267 = math.exp %266 : vector<8x1xf32>
    %268 = arith.addf %253, %255 : vector<8x1xf32>
    %269 = arith.addf %268, %257 : vector<8x1xf32>
    %270 = arith.addf %269, %259 : vector<8x1xf32>
    %271 = arith.addf %270, %261 : vector<8x1xf32>
    %272 = arith.addf %271, %263 : vector<8x1xf32>
    %273 = arith.addf %272, %265 : vector<8x1xf32>
    %274 = arith.addf %273, %267 : vector<8x1xf32>
    %275 = tpu.reciprocal %274 {approx = true} : vector<8x1xf32> -> vector<8x1xf32>
    %cst_95 = arith.constant 0.000000e+00 : f32
    %276 = vector.broadcast %cst_95 : f32 to vector<8x128xf32>
    %277 = arith.mulf %253, %275 : vector<8x1xf32>
    %c0_96 = arith.constant 0 : index
    %c0_97 = arith.constant 0 : index
    %278 = vector.load %arg11[%c0_96, %c0_97] : memref<64x128xf32, #tpu.memory_space<vmem>>, vector<8x128xf32>
    %279 = vector.broadcast %277 : vector<8x1xf32> to vector<8x128xf32>
    %280 = arith.mulf %279, %278 : vector<8x128xf32>
    %281 = arith.addf %276, %280 : vector<8x128xf32>
    %282 = arith.mulf %255, %275 : vector<8x1xf32>
    %c8_98 = arith.constant 8 : index
    %c0_99 = arith.constant 0 : index
    %283 = vector.load %arg11[%c8_98, %c0_99] : memref<64x128xf32, #tpu.memory_space<vmem>>, vector<8x128xf32>
    %284 = vector.broadcast %282 : vector<8x1xf32> to vector<8x128xf32>
    %285 = arith.mulf %284, %283 : vector<8x128xf32>
    %286 = arith.addf %281, %285 : vector<8x128xf32>
    %287 = arith.mulf %257, %275 : vector<8x1xf32>
    %c16_100 = arith.constant 16 : index
    %c0_101 = arith.constant 0 : index
    %288 = vector.load %arg11[%c16_100, %c0_101] : memref<64x128xf32, #tpu.memory_space<vmem>>, vector<8x128xf32>
    %289 = vector.broadcast %287 : vector<8x1xf32> to vector<8x128xf32>
    %290 = arith.mulf %289, %288 : vector<8x128xf32>
    %291 = arith.addf %286, %290 : vector<8x128xf32>
    %292 = arith.mulf %259, %275 : vector<8x1xf32>
    %c24_102 = arith.constant 24 : index
    %c0_103 = arith.constant 0 : index
    %293 = vector.load %arg11[%c24_102, %c0_103] : memref<64x128xf32, #tpu.memory_space<vmem>>, vector<8x128xf32>
    %294 = vector.broadcast %292 : vector<8x1xf32> to vector<8x128xf32>
    %295 = arith.mulf %294, %293 : vector<8x128xf32>
    %296 = arith.addf %291, %295 : vector<8x128xf32>
    %297 = arith.mulf %261, %275 : vector<8x1xf32>
    %c32_104 = arith.constant 32 : index
    %c0_105 = arith.constant 0 : index
    %298 = vector.load %arg11[%c32_104, %c0_105] : memref<64x128xf32, #tpu.memory_space<vmem>>, vector<8x128xf32>
    %299 = vector.broadcast %297 : vector<8x1xf32> to vector<8x128xf32>
    %300 = arith.mulf %299, %298 : vector<8x128xf32>
    %301 = arith.addf %296, %300 : vector<8x128xf32>
    %302 = arith.mulf %263, %275 : vector<8x1xf32>
    %c40_106 = arith.constant 40 : index
    %c0_107 = arith.constant 0 : index
    %303 = vector.load %arg11[%c40_106, %c0_107] : memref<64x128xf32, #tpu.memory_space<vmem>>, vector<8x128xf32>
    %304 = vector.broadcast %302 : vector<8x1xf32> to vector<8x128xf32>
    %305 = arith.mulf %304, %303 : vector<8x128xf32>
    %306 = arith.addf %301, %305 : vector<8x128xf32>
    %307 = arith.mulf %265, %275 : vector<8x1xf32>
    %c48_108 = arith.constant 48 : index
    %c0_109 = arith.constant 0 : index
    %308 = vector.load %arg11[%c48_108, %c0_109] : memref<64x128xf32, #tpu.memory_space<vmem>>, vector<8x128xf32>
    %309 = vector.broadcast %307 : vector<8x1xf32> to vector<8x128xf32>
    %310 = arith.mulf %309, %308 : vector<8x128xf32>
    %311 = arith.addf %306, %310 : vector<8x128xf32>
    %312 = arith.mulf %267, %275 : vector<8x1xf32>
    %c56_110 = arith.constant 56 : index
    %c0_111 = arith.constant 0 : index
    %313 = vector.load %arg11[%c56_110, %c0_111] : memref<64x128xf32, #tpu.memory_space<vmem>>, vector<8x128xf32>
    %314 = vector.broadcast %312 : vector<8x1xf32> to vector<8x128xf32>
    %315 = arith.mulf %314, %313 : vector<8x128xf32>
    %316 = arith.addf %311, %315 : vector<8x128xf32>
    %c0_112 = arith.constant 0 : index
    %c0_113 = arith.constant 0 : index
    %317 = vector.load %arg7[%c0_112, %c0_113] : memref<2x128xf32, #tpu.memory_space<vmem>>, vector<2x128xf32>
    %318 = vector.extract_strided_slice %317 {offsets = [0, 0], sizes = [1, 128], strides = [1, 1]} : vector<2x128xf32> to vector<1x128xf32>
    %319 = vector.broadcast %318 : vector<1x128xf32> to vector<8x128xf32>
    %320 = arith.mulf %316, %319 : vector<8x128xf32>
    %cst_114 = arith.constant dense<0.000000e+00> : vector<8xf32>
    %321 = vector.multi_reduction <add>, %320, %cst_114 [1] : vector<8x128xf32> to vector<8xf32>
    %322 = vector.shape_cast %321 : vector<8xf32> to vector<8x1xf32>
    %323 = vector.extract_strided_slice %317 {offsets = [1, 0], sizes = [1, 128], strides = [1, 1]} : vector<2x128xf32> to vector<1x128xf32>
    %324 = vector.broadcast %323 : vector<1x128xf32> to vector<8x128xf32>
    %325 = arith.mulf %316, %324 : vector<8x128xf32>
    %cst_115 = arith.constant dense<0.000000e+00> : vector<8xf32>
    %326 = vector.multi_reduction <add>, %325, %cst_115 [1] : vector<8x128xf32> to vector<8xf32>
    %327 = vector.shape_cast %326 : vector<8xf32> to vector<8x1xf32>
    %328 = tpu.concatenate %322, %327 in 1 : vector<8x1xf32>, vector<8x1xf32> -> vector<8x2xf32>
    %c0_116 = arith.constant 0 : index
    %c0_117 = arith.constant 0 : index
    %329 = vector.load %arg8[%c0_116, %c0_117] : memref<1x2xf32, #tpu.memory_space<vmem>>, vector<1x2xf32>
    %330 = vector.broadcast %329 : vector<1x2xf32> to vector<8x2xf32>
    %331 = arith.addf %328, %330 : vector<8x2xf32>
    %c0_118 = arith.constant 0 : index
    %c0_119 = arith.constant 0 : index
    %332 = vector.load %arg9[%c0_118, %c0_119] : memref<8x2xf32, #tpu.memory_space<vmem>>, vector<8x2xf32>
    tpu.vector_store %arg9[%c0_118, %c0_119], %331 {strides = array<i32>} : memref<8x2xf32, #tpu.memory_space<vmem>>, vector<8x2xf32>,
    return
  }
  func.func @transform_0(%arg0: i32) -> (i32, i32, i32) {
    %c0_i32 = arith.constant 0 : i32
    %c0_i32_0 = arith.constant 0 : i32
    %c0_i32_1 = arith.constant 0 : i32
    return %c0_i32, %arg0, %c0_i32_0 : i32, i32, i32
  }
  func.func @transform_1(%arg0: i32) -> (i32, i32) {
    %c0_i32 = arith.constant 0 : i32
    %c0_i32_0 = arith.constant 0 : i32
    %c0_i32_1 = arith.constant 0 : i32
    return %c0_i32, %c0_i32_0 : i32, i32
  }
  func.func @transform_2(%arg0: i32) -> (i32, i32) {
    %c0_i32 = arith.constant 0 : i32
    %c0_i32_0 = arith.constant 0 : i32
    %c0_i32_1 = arith.constant 0 : i32
    return %c0_i32, %c0_i32_0 : i32, i32
  }
  func.func @transform_3(%arg0: i32) -> (i32, i32) {
    %c0_i32 = arith.constant 0 : i32
    %c0_i32_0 = arith.constant 0 : i32
    %c0_i32_1 = arith.constant 0 : i32
    return %c0_i32, %c0_i32_0 : i32, i32
  }
  func.func @transform_4(%arg0: i32) -> (i32, i32) {
    %c0_i32 = arith.constant 0 : i32
    %c0_i32_0 = arith.constant 0 : i32
    %c0_i32_1 = arith.constant 0 : i32
    return %c0_i32, %c0_i32_0 : i32, i32
  }
  func.func @transform_5(%arg0: i32) -> (i32, i32) {
    %c0_i32 = arith.constant 0 : i32
    %c0_i32_0 = arith.constant 0 : i32
    %c0_i32_1 = arith.constant 0 : i32
    return %c0_i32, %c0_i32_0 : i32, i32
  }
  func.func @transform_6(%arg0: i32) -> (i32, i32) {
    %c0_i32 = arith.constant 0 : i32
    %c0_i32_0 = arith.constant 0 : i32
    %c0_i32_1 = arith.constant 0 : i32
    return %c0_i32, %c0_i32_0 : i32, i32
  }
  func.func @transform_7(%arg0: i32) -> (i32, i32) {
    %c0_i32 = arith.constant 0 : i32
    %c0_i32_0 = arith.constant 0 : i32
    %c0_i32_1 = arith.constant 0 : i32
    return %c0_i32, %c0_i32_0 : i32, i32
  }
  func.func @transform_8(%arg0: i32) -> (i32, i32) {
    %c0_i32 = arith.constant 0 : i32
    %c0_i32_0 = arith.constant 0 : i32
    return %arg0, %c0_i32 : i32, i32
  }
}

</mosaic_0001>

<llo_original>
// kernel: tpu_custom_call.1
$region0: #{tpu_custom_call.1}
  #allocation0 [shape = 'u32[]', space=smem, size = 0x4, offset = 0x4, fixed_abs, tag = 'smem constant byte address 0x4 - core index']
  #allocation1 [shape = 'u32[144,128]{1,0:T(1,128)}', space=vmem, size = 0x12000, scoped, tag = 'internal scratch']
  #allocation2 [shape = 'f32[64,512]{1,0:T(8,128)}', space=vmem, size = 0x20000, scoped, tag = 'scratch operand']
  #allocation3 [shape = 'f32[64,128]{1,0:T(8,128)}', space=vmem, size = 0x8000, scoped, tag = 'scratch operand']
  #allocation4 [shape = 'f32[1,1]{1,0:T(1,128)S(1)}', space=vmem, size = 0x200, scoped, tag = 'scoped memory for tpu_custom_call.1']
  %s0 = inlined_call_operand.hbm [shape: f32[8,16,64], index: 0, kind: input, shape index: {}]
  %s1 = inlined_call_operand.hbm [shape: bf16[64,512], index: 1, kind: input, shape index: {}]
  %s2 = inlined_call_operand.hbm [shape: bf16[128,512], index: 2, kind: input, shape index: {}]
  %s3 = inlined_call_operand.vmem [shape: f32[1,512], index: 3, kind: input, shape index: {}]
  %s4 = inlined_call_operand.vmem [shape: f32[1,128], index: 4, kind: input, shape index: {}]
  %s5 = inlined_call_operand.<no memory space> [shape: f32[1,1], index: 5, kind: input, shape index: {}]
  %s6 = inlined_call_operand.vmem [shape: f32[2,128], index: 6, kind: input, shape index: {}]
  %s7 = inlined_call_operand.vmem [shape: f32[1,2], index: 7, kind: input, shape index: {}]
  %s8 = inlined_call_operand.vmem [shape: f32[16,2], index: 8, kind: output, shape index: {}]
  %s9 = sld [smem:[#allocation0]]
  $region77: #{tpu_custom_call.1} parent=0
    _
  %s11 = ssub.s32 1, %s9
  %s12 = scalar_select 0, %s11, %s9
  %v13 = vstv %s5
  %14 = vst [vmem:[#allocation4] sm:$0x1] %v13
  $region1: #{tpu_custom_call.1} parent=0
    #allocation5 [shape = 'u8[65536]{0}', space=vmem, size = 0x10000, scoped, tag = 'input window, operand 0']
    #allocation6 [shape = 's32[2]{0}', space=sflag, size = 0x8, scoped, tag = 'scoped memory for tpu_custom_call.1']
    #allocation7 [shape = 'u8[65536]{0}', space=vmem, size = 0x10000, scoped, tag = 'input window, operand 1, single buffered']
    #allocation8 [shape = 's32[1]{0}', space=sflag, size = 0x4, scoped, tag = 'scoped memory for tpu_custom_call.1']
    #allocation9 [shape = 'u8[131072]{0}', space=vmem, size = 0x20000, scoped, tag = 'input window, operand 2, single buffered']
    %15 = vsyncpa [#allocation6], 0
    %s16 = scalar_lea.sflag [#allocation6], 1
    %17 = vsyncpa %s16, 0
    %18 = vsyncpa [#allocation8], 0
    loop: start=0, step=1, limit=4
    $region2: #{tpu_custom_call.1} parent=1 // loop_pre_header
      _
    $region3: #{tpu_custom_call.1} parent=1 // loop_header
      %s20 = sphi 0, %s24
      %p21 = scmp.ge.s32.totalorder %s20, 4
      %s30 = sphi 0, %s32
      %s33 = sphi 0, %s30
      %s34 = sphi 0, %s33
      %s50 = sphi 0, %s34
      %s54 = sphi 0, %s54
      %s56 = sphi 0, %s54
      %s57 = sphi 0, %s56
      %s71 = sphi 0, %s57
      %s75 = sphi 0, %s75
      %s77 = sphi 0, %s75
      %s78 = sphi 0, %s77
      %s92 = sphi 0, %s78
      %s96 = sphi 0, %s96
      %s98 = sphi 0, %s96
      %s99 = sphi 0, %s98
      %s113 = sphi 0, %s99
      %s117 = sphi 0, %s117
      %s119 = sphi 0, %s117
      %s120 = sphi 0, %s119
      %s134 = sphi 0, %s120
      %s138 = sphi 0, %s138
      %s140 = sphi 0, %s138
      %s141 = sphi 0, %s140
      %s155 = sphi 0, %s141
      %s159 = sphi 0, %s159
      %s161 = sphi 0, %s159
      %s162 = sphi 0, %s161
      %s176 = sphi 0, %s162
      %s180 = sphi 0, %s180
      %s182 = sphi 0, %s180
      %s183 = sphi 0, %s182
      %s197 = sphi 0, %s183
      %s203 = sphi 0, %s205
      %s206 = sphi 0, %s203
      %s207 = sphi 0, %s206
      %s223 = sphi 0, %s207
    $region4: #{tpu_custom_call.1} parent=1 // loop_header_branch
      %23 = sbr.rel (%p21) target = $region8
    $region5: #{tpu_custom_call.1} parent=1 // loop_body
      %s25 = ssub.s32 %s20, 1
      %s26 = ssub.s32 %s20, 2
      %s27 = sadd.s32 %s20, 1
      %s28 = ssub.s32 %s20, %s27
      %p29 = scmp.eq.s32.totalorder %s28, 0
      %s31 = sadd.s32 %s30, 1
      %s32 = scalar_select %p29, %s30, %s31
      %p35 = pneg %p29
      %p36 = scmp.eq.s32.totalorder %s20, 1
      %p37 = por %p35, %p36
      %p38 = scmp.ne.s32.totalorder %s30, %s33
      %p39 = scmp.eq.s32.totalorder %s20, 0
      %p40 = por %p38, %p39
      %p41 = scmp.ne.s32.totalorder %s30, %s33
      %p42 = scmp.eq.s32.totalorder %s25, 1
      %p43 = por %p41, %p42
      %p44 = scmp.ne.s32.totalorder %s33, %s34
      %p45 = scmp.eq.s32.totalorder %s25, 0
      %p46 = por %p44, %p45
      %p47 = scmp.ne.s32.totalorder %s33, %s34
      %p48 = scmp.eq.s32.totalorder %s26, 1
      %p49 = por %p47, %p48
      %p51 = scmp.ne.s32.totalorder %s34, %s50
      %p52 = scmp.eq.s32.totalorder %s26, 0
      %p53 = por %p51, %p52
      %s55 = sadd.s32 %s54, 1
      %p58 = scmp.eq.s32.totalorder %s20, 1
      %p59 = scmp.ne.s32.totalorder %s54, %s56
      %p60 = scmp.eq.s32.totalorder %s20, 0
      %p61 = por %p59, %p60
      %p62 = scmp.ne.s32.totalorder %s54, %s56
      %p63 = scmp.eq.s32.totalorder %s25, 1
      %p64 = por %p62, %p63
      %p65 = scmp.ne.s32.totalorder %s56, %s57
      %p66 = scmp.eq.s32.totalorder %s25, 0
      %p67 = por %p65, %p66
      %p68 = scmp.ne.s32.totalorder %s56, %s57
      %p69 = scmp.eq.s32.totalorder %s26, 1
      %p70 = por %p68, %p69
      %p72 = scmp.ne.s32.totalorder %s57, %s71
      %p73 = scmp.eq.s32.totalorder %s26, 0
      %p74 = por %p72, %p73
      %s76 = sadd.s32 %s75, 1
      %p79 = scmp.eq.s32.totalorder %s20, 1
      %p80 = scmp.ne.s32.totalorder %s75, %s77
      %p81 = scmp.eq.s32.totalorder %s20, 0
      %p82 = por %p80, %p81
      %p83 = scmp.ne.s32.totalorder %s75, %s77
      %p84 = scmp.eq.s32.totalorder %s25, 1
      %p85 = por %p83, %p84
      %p86 = scmp.ne.s32.totalorder %s77, %s78
      %p87 = scmp.eq.s32.totalorder %s25, 0
      %p88 = por %p86, %p87
      %p89 = scmp.ne.s32.totalorder %s77, %s78
      %p90 = scmp.eq.s32.totalorder %s26, 1
      %p91 = por %p89, %p90
      %p93 = scmp.ne.s32.totalorder %s78, %s92
      %p94 = scmp.eq.s32.totalorder %s26, 0
      %p95 = por %p93, %p94
      %s97 = sadd.s32 %s96, 1
      %p100 = scmp.eq.s32.totalorder %s20, 1
      %p101 = scmp.ne.s32.totalorder %s96, %s98
      %p102 = scmp.eq.s32.totalorder %s20, 0
      %p103 = por %p101, %p102
      %p104 = scmp.ne.s32.totalorder %s96, %s98
      %p105 = scmp.eq.s32.totalorder %s25, 1
      %p106 = por %p104, %p105
      %p107 = scmp.ne.s32.totalorder %s98, %s99
      %p108 = scmp.eq.s32.totalorder %s25, 0
      %p109 = por %p107, %p108
      %p110 = scmp.ne.s32.totalorder %s98, %s99
      %p111 = scmp.eq.s32.totalorder %s26, 1
      %p112 = por %p110, %p111
      %p114 = scmp.ne.s32.totalorder %s99, %s113
      %p115 = scmp.eq.s32.totalorder %s26, 0
      %p116 = por %p114, %p115
      %s118 = sadd.s32 %s117, 1
      %p121 = scmp.eq.s32.totalorder %s20, 1
      %p122 = scmp.ne.s32.totalorder %s117, %s119
      %p123 = scmp.eq.s32.totalorder %s20, 0
      %p124 = por %p122, %p123
      %p125 = scmp.ne.s32.totalorder %s117, %s119
      %p126 = scmp.eq.s32.totalorder %s25, 1
      %p127 = por %p125, %p126
      %p128 = scmp.ne.s32.totalorder %s119, %s120
      %p129 = scmp.eq.s32.totalorder %s25, 0
      %p130 = por %p128, %p129
      %p131 = scmp.ne.s32.totalorder %s119, %s120
      %p132 = scmp.eq.s32.totalorder %s26, 1
      %p133 = por %p131, %p132
      %p135 = scmp.ne.s32.totalorder %s120, %s134
      %p136 = scmp.eq.s32.totalorder %s26, 0
      %p137 = por %p135, %p136
      %s139 = sadd.s32 %s138, 1
      %p142 = scmp.eq.s32.totalorder %s20, 1
      %p143 = scmp.ne.s32.totalorder %s138, %s140
      %p144 = scmp.eq.s32.totalorder %s20, 0
      %p145 = por %p143, %p144
      %p146 = scmp.ne.s32.totalorder %s138, %s140
      %p147 = scmp.eq.s32.totalorder %s25, 1
      %p148 = por %p146, %p147
      %p149 = scmp.ne.s32.totalorder %s140, %s141
      %p150 = scmp.eq.s32.totalorder %s25, 0
      %p151 = por %p149, %p150
      %p152 = scmp.ne.s32.totalorder %s140, %s141
      %p153 = scmp.eq.s32.totalorder %s26, 1
      %p154 = por %p152, %p153
      %p156 = scmp.ne.s32.totalorder %s141, %s155
      %p157 = scmp.eq.s32.totalorder %s26, 0
      %p158 = por %p156, %p157
      %s160 = sadd.s32 %s159, 1
      %p163 = scmp.eq.s32.totalorder %s20, 1
      %p164 = scmp.ne.s32.totalorder %s159, %s161
      %p165 = scmp.eq.s32.totalorder %s20, 0
      %p166 = por %p164, %p165
      %p167 = scmp.ne.s32.totalorder %s159, %s161
      %p168 = scmp.eq.s32.totalorder %s25, 1
      %p169 = por %p167, %p168
      %p170 = scmp.ne.s32.totalorder %s161, %s162
      %p171 = scmp.eq.s32.totalorder %s25, 0
      %p172 = por %p170, %p171
      %p173 = scmp.ne.s32.totalorder %s161, %s162
      %p174 = scmp.eq.s32.totalorder %s26, 1
      %p175 = por %p173, %p174
      %p177 = scmp.ne.s32.totalorder %s162, %s176
      %p178 = scmp.eq.s32.totalorder %s26, 0
      %p179 = por %p177, %p178
      %s181 = sadd.s32 %s180, 1
      %p184 = scmp.eq.s32.totalorder %s20, 1
      %p185 = scmp.ne.s32.totalorder %s180, %s182
      %p186 = scmp.eq.s32.totalorder %s20, 0
      %p187 = por %p185, %p186
      %p188 = scmp.ne.s32.totalorder %s180, %s182
      %p189 = scmp.eq.s32.totalorder %s25, 1
      %p190 = por %p188, %p189
      %p191 = scmp.ne.s32.totalorder %s182, %s183
      %p192 = scmp.eq.s32.totalorder %s25, 0
      %p193 = por %p191, %p192
      %p194 = scmp.ne.s32.totalorder %s182, %s183
      %p195 = scmp.eq.s32.totalorder %s26, 1
      %p196 = por %p194, %p195
      %p198 = scmp.ne.s32.totalorder %s183, %s197
      %p199 = scmp.eq.s32.totalorder %s26, 0
      %p200 = por %p198, %p199
      %s201 = ssub.s32 %s20, %s27
      %p202 = scmp.eq.s32.totalorder %s201, 0
      %s204 = sadd.s32 %s203, 1
      %s205 = scalar_select %p202, %s203, %s204
      %p208 = pneg %p202
      %p209 = scmp.eq.s32.totalorder %s20, 1
      %p210 = por %p208, %p209
      %p211 = scmp.ne.s32.totalorder %s203, %s206
      %p212 = scmp.eq.s32.totalorder %s20, 0
      %p213 = por %p211, %p212
      %p214 = scmp.ne.s32.totalorder %s203, %s206
      %p215 = scmp.eq.s32.totalorder %s25, 1
      %p216 = por %p214, %p215
      %p217 = scmp.ne.s32.totalorder %s206, %s207
      %p218 = scmp.eq.s32.totalorder %s25, 0
      %p219 = por %p217, %p218
      %p220 = scmp.ne.s32.totalorder %s206, %s207
      %p221 = scmp.eq.s32.totalorder %s26, 1
      %p222 = por %p220, %p221
      %p224 = scmp.ne.s32.totalorder %s207, %s223
      %p225 = scmp.eq.s32.totalorder %s26, 0
      %p226 = por %p224, %p225
      %p227 = scmp.le.s32.totalorder 1, %s20
      %p228 = scmp.lt.s32.totalorder %s20, 3
      %p229 = pnand %p227, %p228
      %p230 = pneg %p229
      // Predicated region
      $region9: #{tpu_custom_call.1} parent=5 // pred_check
        _
      $region10: #{tpu_custom_call.1} parent=5 // pred_check_branch
        %232 = sbr.rel (%p229) target = $region12
      $region11: #{tpu_custom_call.1} parent=5 // pred_region
        %s233 = ssub.s32 %s20, 1
        // Predicated region
        $region13: #{tpu_custom_call.1} parent=11 // pred_check
          %p234 = pneg %p67
        $region14: #{tpu_custom_call.1} parent=11 // pred_check_branch
          %236 = sbr.rel (%p234) target = $region16
        $region15: #{tpu_custom_call.1} parent=11 // pred_region
          %s238 = ssub.s32 2048, 2048
          %239 = vsyncadd [#allocation8], %s238
          %s240 = sshll.u32 [#allocation7], 4
          %s241 = int_to_ptr.vmem [resolvable:$true] %s240
          %246 = dma.hbm_to_vmem [thread:$0]  %s1, 2048, %s241, [#allocation8], 256, 256, 16
        $region16: #{tpu_custom_call.1} parent=11 // pred_fallthru
          _
        // Predicated region
        $region17: #{tpu_custom_call.1} parent=11 // pred_check
          %p247 = pneg %p88
        $region18: #{tpu_custom_call.1} parent=11 // pred_check_branch
          %249 = sbr.rel (%p247) target = $region20
        $region19: #{tpu_custom_call.1} parent=11 // pred_region
          %s251 = ssub.s32 4096, 4096
          %252 = vsyncadd [#allocation8], %s251
          %s253 = sshll.u32 [#allocation9], 4
          %s254 = int_to_ptr.vmem [resolvable:$true] %s253
          %259 = dma.hbm_to_vmem [thread:$0]  %s2, 4096, %s254, [#allocation8], 256, 256, 16
        $region20: #{tpu_custom_call.1} parent=11 // pred_fallthru
          _
        // Predicated region
        $region21: #{tpu_custom_call.1} parent=11 // pred_check
          %p260 = pneg %p109
        $region22: #{tpu_custom_call.1} parent=11 // pred_check_branch
          %262 = sbr.rel (%p260) target = $region24
        $region23: #{tpu_custom_call.1} parent=11 // pred_region
          _
        $region24: #{tpu_custom_call.1} parent=11 // pred_fallthru
          _
        // Predicated region
        $region25: #{tpu_custom_call.1} parent=11 // pred_check
          %p263 = pneg %p130
        $region26: #{tpu_custom_call.1} parent=11 // pred_check_branch
          %265 = sbr.rel (%p263) target = $region28
        $region27: #{tpu_custom_call.1} parent=11 // pred_region
          _
        $region28: #{tpu_custom_call.1} parent=11 // pred_fallthru
          _
        // Predicated region
        $region29: #{tpu_custom_call.1} parent=11 // pred_check
          %p266 = pneg %p151
        $region30: #{tpu_custom_call.1} parent=11 // pred_check_branch
          %268 = sbr.rel (%p266) target = $region32
        $region31: #{tpu_custom_call.1} parent=11 // pred_region
          _
        $region32: #{tpu_custom_call.1} parent=11 // pred_fallthru
          _
        // Predicated region
        $region33: #{tpu_custom_call.1} parent=11 // pred_check
          %p269 = pneg %p172
        $region34: #{tpu_custom_call.1} parent=11 // pred_check_branch
          %271 = sbr.rel (%p269) target = $region36
        $region35: #{tpu_custom_call.1} parent=11 // pred_region
          _
        $region36: #{tpu_custom_call.1} parent=11 // pred_fallthru
          _
        // Predicated region
        $region37: #{tpu_custom_call.1} parent=11 // pred_check
          %p272 = pneg %p193
        $region38: #{tpu_custom_call.1} parent=11 // pred_check_branch
          %274 = sbr.rel (%p272) target = $region40
        $region39: #{tpu_custom_call.1} parent=11 // pred_region
          _
        $region40: #{tpu_custom_call.1} parent=11 // pred_fallthru
          _
      $region12: #{tpu_custom_call.1} parent=5 // pred_fallthru
        _
      %p275 = scmp.lt.s32.totalorder %s20, 2
      // Predicated region
      $region41: #{tpu_custom_call.1} parent=5 // pred_check
        %p276 = pneg %p275
      $region42: #{tpu_custom_call.1} parent=5 // pred_check_branch
        %278 = sbr.rel (%p276) target = $region44
      $region43: #{tpu_custom_call.1} parent=5 // pred_region
        // Predicated region
        $region45: #{tpu_custom_call.1} parent=43 // pred_check
          %p279 = pneg %p40
        $region46: #{tpu_custom_call.1} parent=43 // pred_check_branch
          %281 = sbr.rel (%p279) target = $region48
        $region47: #{tpu_custom_call.1} parent=43 // pred_region
          %s282 = sand.u32 %s30, 1
          %s283 = scalar_lea.sflag [#allocation6], %s282
          %s284 = sand.u32 %s30, 1
          %s285 = smul.addr %s284, 64
          %s286 = scalar_lea.vmem [#allocation5], %s285
          %s288 = ssub.s32 1024, 1024
          %289 = vsyncadd %s283, %s288
          %s290 = smul.addr %s20, 128
          %s291 = scalar_lea.hbm %s0, %s290
          %s292 = sshll.u32 %s286, 4
          %s293 = int_to_ptr.vmem [resolvable:$true] %s292
          %298 = dma.hbm_to_vmem [thread:$0]  %s291, 1024, %s293, %s283, 256, 128, 8
        $region48: #{tpu_custom_call.1} parent=43 // pred_fallthru
          _
      $region44: #{tpu_custom_call.1} parent=5 // pred_fallthru
        _
      %p299 = scmp.le.s32.totalorder 1, %s20
      %p300 = scmp.lt.s32.totalorder %s20, 3
      %p301 = pnand %p299, %p300
      %p302 = pneg %p301
      // Predicated region
      $region49: #{tpu_custom_call.1} parent=5 // pred_check
        _
      $region50: #{tpu_custom_call.1} parent=5 // pred_check_branch
        %304 = sbr.rel (%p301) target = $region52
      $region51: #{tpu_custom_call.1} parent=5 // pred_region
        %s305 = ssub.s32 %s20, 1
        %s306 = sand.u32 %s33, 1
        %s307 = scalar_lea.sflag [#allocation6], %s306
        %s308 = sand.u32 %s33, 1
        %s309 = smul.addr %s308, 64
        %s310 = scalar_lea.vmem [#allocation5], %s309
        // Predicated region
        $region53: #{tpu_custom_call.1} parent=51 // pred_check
          %p311 = pneg %p46
        $region54: #{tpu_custom_call.1} parent=51 // pred_check_branch
          %313 = sbr.rel (%p311) target = $region56
        $region55: #{tpu_custom_call.1} parent=51 // pred_region
          %314 = dma.done %s307, 1024
        $region56: #{tpu_custom_call.1} parent=51 // pred_fallthru
          _
        // Predicated region
        $region57: #{tpu_custom_call.1} parent=51 // pred_check
          %p315 = pneg %p67
        $region58: #{tpu_custom_call.1} parent=51 // pred_check_branch
          %317 = sbr.rel (%p315) target = $region60
        $region59: #{tpu_custom_call.1} parent=51 // pred_region
          %318 = dma.done [#allocation8], 2048
        $region60: #{tpu_custom_call.1} parent=51 // pred_fallthru
          _
        // Predicated region
        $region61: #{tpu_custom_call.1} parent=51 // pred_check
          %p319 = pneg %p88
        $region62: #{tpu_custom_call.1} parent=51 // pred_check_branch
          %321 = sbr.rel (%p319) target = $region64
        $region63: #{tpu_custom_call.1} parent=51 // pred_region
          %322 = dma.done [#allocation8], 4096
        $region64: #{tpu_custom_call.1} parent=51 // pred_fallthru
          _
        %s323 = sand.u32 %s33, 1
        %s324 = scalar_lea.sflag [#allocation6], %s323
        %s325 = sand.u32 %s33, 1
        %s326 = smul.addr %s325, 64
        %s327 = scalar_lea.vmem [#allocation5], %s326
        %p328 = pneg %p46
        %p329 = pneg %p43
        %p330 = pneg %p67
        %p331 = pneg %p64
        %p332 = pneg %p88
        %p333 = pneg %p85
        %p334 = pneg %p109
        %p335 = pneg %p106
        %p336 = pneg %p130
        %p337 = pneg %p127
        %p338 = pneg %p151
        %p339 = pneg %p148
        %p340 = pneg %p172
        %p341 = pneg %p169
        %p342 = pneg %p193
        %p343 = pneg %p190
        %p344 = pneg %p219
        %p345 = pneg %p216
        %p346 = scmp.lt.s32.totalorder %s25, 1
        %s347 = scalar_select %p346, %s25, 1
        %s348 = smul.addr %s347, 8
        %s349 = scalar_lea.vmem %s8, %s348
        %p350 = scmp.lt.s32.totalorder %s25, 1
        %s351 = scalar_select %p350, %s25, 1
        %s352 = smul.addr %s351, 8
        %s353 = scalar_lea.vmem %s8, %s352
        %v355 = vld [vmem:[%s310] sm:$0xff]
        %v356 = vld [vmem:[%s310 + $0x8] sm:$0xff]
        %v357 = vld [vmem:[%s310 + $0x10] sm:$0xff]
        %v358 = vld [vmem:[%s310 + $0x18] sm:$0xff]
        %v359 = vld [vmem:[%s310 + $0x20] sm:$0xff]
        %v360 = vld [vmem:[%s310 + $0x28] sm:$0xff]
        %v361 = vld [vmem:[%s310 + $0x30] sm:$0xff]
        %v362 = vld [vmem:[%s310 + $0x38] sm:$0xff]
        %v363 = vpack.c.bf16 %v356, %v355
        %v364 = vpack.c.bf16 %v358, %v357
        %v365 = vpack.c.bf16 %v360, %v359
        %v366 = vpack.c.bf16 %v362, %v361
        %v367 = vld [vmem:[#allocation7] sm:$0xff]
        %v368 = vld [vmem:[#allocation7 + $0x8] sm:$0xff]
        %v369 = vld [vmem:[#allocation7 + $0x10] sm:$0xff]
        %v370 = vld [vmem:[#allocation7 + $0x18] sm:$0xff]
        %v371 = vld [vmem:[#allocation7 + $0x20] sm:$0xff]
        %v372 = vld [vmem:[#allocation7 + $0x28] sm:$0xff]
        %v373 = vld [vmem:[#allocation7 + $0x30] sm:$0xff]
        %v374 = vld [vmem:[#allocation7 + $0x38] sm:$0xff]
        %v375 = vld [vmem:[#allocation7 + $0x40] sm:$0xff]
        %v376 = vld [vmem:[#allocation7 + $0x48] sm:$0xff]
        %v377 = vld [vmem:[#allocation7 + $0x50] sm:$0xff]
        %v378 = vld [vmem:[#allocation7 + $0x58] sm:$0xff]
        %v379 = vld [vmem:[#allocation7 + $0x60] sm:$0xff]
        %v380 = vld [vmem:[#allocation7 + $0x68] sm:$0xff]
        %v381 = vld [vmem:[#allocation7 + $0x70] sm:$0xff]
        %v382 = vld [vmem:[#allocation7 + $0x78] sm:$0xff]
        %v383 = vld [vmem:[%s3] sm:$0xf]
        %v385 = vlaneseq
        %v386 = vshrl.u32 %v385, 7
        %v387 = vsub.s32 0, %v386
        %v388 = vrot.slane %v383, %v387
        %v389 = vlaneseq
        %v390 = vshrl.u32 %v389, 7
        %v391 = vsub.s32 1, %v390
        %v392 = vrot.slane %v383, %v391
        %v393 = vlaneseq
        %v394 = vshrl.u32 %v393, 7
        %v395 = vsub.s32 2, %v394
        %v396 = vrot.slane %v383, %v395
        %v397 = vlaneseq
        %v398 = vshrl.u32 %v397, 7
        %v399 = vsub.s32 3, %v398
        %v400 = vrot.slane %v383, %v399
        %v421 = vunpack.c.l.b16 %v367
        %v422 = vunpack.c.h.b16 %v367
        %v423 = vunpack.c.l.b16 %v368
        %v424 = vunpack.c.h.b16 %v368
        %v425 = vunpack.c.l.b16 %v369
        %v426 = vunpack.c.h.b16 %v369
        %v427 = vunpack.c.l.b16 %v370
        %v428 = vunpack.c.h.b16 %v370
        %v429 = vunpack.c.l.b16 %v371
        %v430 = vunpack.c.h.b16 %v371
        %v431 = vunpack.c.l.b16 %v372
        %v432 = vunpack.c.h.b16 %v372
        %v433 = vunpack.c.l.b16 %v373
        %v434 = vunpack.c.h.b16 %v373
        %v435 = vunpack.c.l.b16 %v374
        %v436 = vunpack.c.h.b16 %v374
        %v437 = vunpack.c.l.b16 %v375
        %v438 = vunpack.c.h.b16 %v375
        %v439 = vunpack.c.l.b16 %v376
        %v440 = vunpack.c.h.b16 %v376
        %v441 = vunpack.c.l.b16 %v377
        %v442 = vunpack.c.h.b16 %v377
        %v443 = vunpack.c.l.b16 %v378
        %v444 = vunpack.c.h.b16 %v378
        %v445 = vunpack.c.l.b16 %v379
        %v446 = vunpack.c.h.b16 %v379
        %v447 = vunpack.c.l.b16 %v380
        %v448 = vunpack.c.h.b16 %v380
        %v449 = vunpack.c.l.b16 %v381
        %v450 = vunpack.c.h.b16 %v381
        %v451 = vunpack.c.l.b16 %v382
        %v452 = vunpack.c.h.b16 %v382
        %v453 = vpack.c.b16 %v425, %v421
        %v454 = vpack.c.b16 %v426, %v422
        %v455 = vpack.c.b16 %v427, %v423
        %v456 = vpack.c.b16 %v428, %v424
        %v457 = vpack.c.b16 %v433, %v429
        %v458 = vpack.c.b16 %v434, %v430
        %v459 = vpack.c.b16 %v435, %v431
        %v460 = vpack.c.b16 %v436, %v432
        %v461 = vpack.c.b16 %v441, %v437
        %v462 = vpack.c.b16 %v442, %v438
        %v463 = vpack.c.b16 %v443, %v439
        %v464 = vpack.c.b16 %v444, %v440
        %v465 = vpack.c.b16 %v449, %v445
        %v466 = vpack.c.b16 %v450, %v446
        %v467 = vpack.c.b16 %v451, %v447
        %v468 = vpack.c.b16 %v452, %v448
        %vm485 = vcmask 523264
        %v487 = vsel %vm485, %v363, 0
        %v490 = vsel %vm485, %v364, 0
        %v493 = vsel %vm485, %v365, 0
        %v496 = vsel %vm485, %v366, 0
        %498 = vmatprep.subr.bf16.mxu0 %v454
        %499 = vmatpush1.bf16.msra.mxu0 %v453
        %500 = vmatprep.subr.bf16.mxu0 %v458
        %501 = vmatpush1.bf16.msra.mxu0 %v457
        %502 = vmatprep.subr.bf16.mxu0 %v462
        %503 = vmatpush1.bf16.msra.mxu0 %v461
        %504 = vmatprep.subr.bf16.mxu0 %v466
        %505 = vmatpush1.bf16.msra.mxu0 %v465
        %506 = vmatprep.subr.bf16.mxu0 0
        %507 = vmatpush1.bf16.msra.mxu0 0
        %508 = vmatprep.subr.bf16.mxu0 0
        %509 = vmatpush1.bf16.msra.mxu0 0
        %510 = vmatprep.subr.bf16.mxu0 0
        %511 = vmatpush1.bf16.msra.mxu0 0
        %512 = vmatprep.subr.bf16.mxu0 0
        %513 = vmatpush1.bf16.msra.mxu0 0
        %514 = vmatprep.subr.bf16.mxu0 0
        %515 = vmatpush1.bf16.msra.mxu0 0
        %516 = vmatprep.subr.bf16.mxu0 0
        %517 = vmatpush1.bf16.msra.mxu0 0
        %518 = vmatprep.subr.bf16.mxu0 0
        %519 = vmatpush1.bf16.msra.mxu0 0
        %520 = vmatprep.subr.bf16.mxu0 0
        %521 = vmatpush1.bf16.msra.mxu0 0
        %522 = vmatprep.subr.bf16.mxu0 0
        %523 = vmatpush1.bf16.msra.mxu0 0
        %524 = vmatprep.subr.bf16.mxu0 0
        %525 = vmatpush1.bf16.msra.mxu0 0
        %526 = vmatprep.subr.bf16.mxu0 0
        %527 = vmatpush1.bf16.msra.mxu0 0
        %528 = vmatprep.subr.bf16.mxu0 0
        %529 = vmatpush1.bf16.msra.mxu0 0
        %530 = vmatprep.mubr.bf16.mxu0 0
        %531 = vmatmul.mubr.bf16.gmra.mrb[0].mxu0 %v487
        %v532 = vpop.f32.mrb[0].mxu0
        %v533 = vadd.f32 %v388, %v532
        %v534 = vpop.f32.mrb[0].mxu0
        %v535 = vadd.f32 %v392, %v534
        %v536 = vpop.f32.mrb[0].mxu0
        %v537 = vadd.f32 %v388, %v536
        %v538 = vpop.f32.mrb[0].mxu0
        %v539 = vadd.f32 %v392, %v538
        %540 = vmatprep.mubr.bf16.mxu0 0
        %541 = vmatmul.mubr.bf16.gmra.mrb[0].mxu0 %v490
        %v542 = vpop.f32.mrb[0].mxu0
        %v543 = vadd.f32 %v388, %v542
        %v544 = vpop.f32.mrb[0].mxu0
        %v545 = vadd.f32 %v392, %v544
        %v546 = vpop.f32.mrb[0].mxu0
        %v547 = vadd.f32 %v388, %v546
        %v548 = vpop.f32.mrb[0].mxu0
        %v549 = vadd.f32 %v392, %v548
        %550 = vmatprep.mubr.bf16.mxu0 0
        %551 = vmatmul.mubr.bf16.gmra.mrb[0].mxu0 %v493
        %v552 = vpop.f32.mrb[0].mxu0
        %v553 = vadd.f32 %v388, %v552
        %v554 = vpop.f32.mrb[0].mxu0
        %v555 = vadd.f32 %v392, %v554
        %v556 = vpop.f32.mrb[0].mxu0
        %v557 = vadd.f32 %v388, %v556
        %v558 = vpop.f32.mrb[0].mxu0
        %v559 = vadd.f32 %v392, %v558
        %560 = vmatprep.mubr.bf16.mxu0 0
        %561 = vmatmul.mubr.bf16.gmra.mrb[0].mxu0 %v496
        %v562 = vpop.f32.mrb[0].mxu0
        %v563 = vadd.f32 %v388, %v562
        %v564 = vpop.f32.mrb[0].mxu0
        %v565 = vadd.f32 %v392, %v564
        %v566 = vpop.f32.mrb[0].mxu0
        %v567 = vadd.f32 %v388, %v566
        %v568 = vpop.f32.mrb[0].mxu0
        %v569 = vadd.f32 %v392, %v568
        %570 = vdwg.mxu0
        %571 = vmatprep.subr.bf16.mxu0 %v456
        %572 = vmatpush1.bf16.msra.mxu0 %v455
        %573 = vmatprep.subr.bf16.mxu0 %v460
        %574 = vmatpush1.bf16.msra.mxu0 %v459
        %575 = vmatprep.subr.bf16.mxu0 %v464
        %576 = vmatpush1.bf16.msra.mxu0 %v463
        %577 = vmatprep.subr.bf16.mxu0 %v468
        %578 = vmatpush1.bf16.msra.mxu0 %v467
        %579 = vmatprep.subr.bf16.mxu0 0
        %580 = vmatpush1.bf16.msra.mxu0 0
        %581 = vmatprep.subr.bf16.mxu0 0
        %582 = vmatpush1.bf16.msra.mxu0 0
        %583 = vmatprep.subr.bf16.mxu0 0
        %584 = vmatpush1.bf16.msra.mxu0 0
        %585 = vmatprep.subr.bf16.mxu0 0
        %586 = vmatpush1.bf16.msra.mxu0 0
        %587 = vmatprep.subr.bf16.mxu0 0
        %588 = vmatpush1.bf16.msra.mxu0 0
        %589 = vmatprep.subr.bf16.mxu0 0
        %590 = vmatpush1.bf16.msra.mxu0 0
        %591 = vmatprep.subr.bf16.mxu0 0
        %592 = vmatpush1.bf16.msra.mxu0 0
        %593 = vmatprep.subr.bf16.mxu0 0
        %594 = vmatpush1.bf16.msra.mxu0 0
        %595 = vmatprep.subr.bf16.mxu0 0
        %596 = vmatpush1.bf16.msra.mxu0 0
        %597 = vmatprep.subr.bf16.mxu0 0
        %598 = vmatpush1.bf16.msra.mxu0 0
        %599 = vmatprep.subr.bf16.mxu0 0
        %600 = vmatpush1.bf16.msra.mxu0 0
        %601 = vmatprep.subr.bf16.mxu0 0
        %602 = vmatpush1.bf16.msra.mxu0 0
        %603 = vmatprep.mubr.bf16.mxu0 0
        %604 = vmatmul.mubr.bf16.gmra.mrb[0].mxu0 %v487
        %v605 = vpop.f32.mrb[0].mxu0
        %v606 = vadd.f32 %v396, %v605
        %v607 = vpop.f32.mrb[0].mxu0
        %v608 = vadd.f32 %v400, %v607
        %v609 = vpop.f32.mrb[0].mxu0
        %v610 = vadd.f32 %v396, %v609
        %v611 = vpop.f32.mrb[0].mxu0
        %v612 = vadd.f32 %v400, %v611
        %613 = vmatprep.mubr.bf16.mxu0 0
        %614 = vmatmul.mubr.bf16.gmra.mrb[0].mxu0 %v490
        %v615 = vpop.f32.mrb[0].mxu0
        %v616 = vadd.f32 %v396, %v615
        %v617 = vpop.f32.mrb[0].mxu0
        %v618 = vadd.f32 %v400, %v617
        %v619 = vpop.f32.mrb[0].mxu0
        %v620 = vadd.f32 %v396, %v619
        %v621 = vpop.f32.mrb[0].mxu0
        %v622 = vadd.f32 %v400, %v621
        %623 = vmatprep.mubr.bf16.mxu0 0
        %624 = vmatmul.mubr.bf16.gmra.mrb[0].mxu0 %v493
        %v625 = vpop.f32.mrb[0].mxu0
        %v626 = vadd.f32 %v396, %v625
        %v627 = vpop.f32.mrb[0].mxu0
        %v628 = vadd.f32 %v400, %v627
        %v629 = vpop.f32.mrb[0].mxu0
        %v630 = vadd.f32 %v396, %v629
        %v631 = vpop.f32.mrb[0].mxu0
        %v632 = vadd.f32 %v400, %v631
        %633 = vmatprep.mubr.bf16.mxu0 0
        %634 = vmatmul.mubr.bf16.gmra.mrb[0].mxu0 %v496
        %v635 = vpop.f32.mrb[0].mxu0
        %v636 = vadd.f32 %v396, %v635
        %v637 = vpop.f32.mrb[0].mxu0
        %v638 = vadd.f32 %v400, %v637
        %v639 = vpop.f32.mrb[0].mxu0
        %v640 = vadd.f32 %v396, %v639
        %v641 = vpop.f32.mrb[0].mxu0
        %v642 = vadd.f32 %v400, %v641
        %643 = vdwg.mxu0
        %644 = vst [vmem:[#allocation2] sm:$0xff] %v533
        %645 = vst [vmem:[#allocation2 + $0x8] sm:$0xff] %v535
        %646 = vst [vmem:[#allocation2 + $0x10] sm:$0xff] %v606
        %647 = vst [vmem:[#allocation2 + $0x18] sm:$0xff] %v608
        %648 = vst [vmem:[#allocation2 + $0x20] sm:$0xff] %v537
        %649 = vst [vmem:[#allocation2 + $0x28] sm:$0xff] %v539
        %650 = vst [vmem:[#allocation2 + $0x30] sm:$0xff] %v610
        %651 = vst [vmem:[#allocation2 + $0x38] sm:$0xff] %v612
        %652 = vst [vmem:[#allocation2 + $0x40] sm:$0xff] %v543
        %653 = vst [vmem:[#allocation2 + $0x48] sm:$0xff] %v545
        %654 = vst [vmem:[#allocation2 + $0x50] sm:$0xff] %v616
        %655 = vst [vmem:[#allocation2 + $0x58] sm:$0xff] %v618
        %656 = vst [vmem:[#allocation2 + $0x60] sm:$0xff] %v547
        %657 = vst [vmem:[#allocation2 + $0x68] sm:$0xff] %v549
        %658 = vst [vmem:[#allocation2 + $0x70] sm:$0xff] %v620
        %659 = vst [vmem:[#allocation2 + $0x78] sm:$0xff] %v622
        %660 = vst [vmem:[#allocation2 + $0x80] sm:$0xff] %v553
        %661 = vst [vmem:[#allocation2 + $0x88] sm:$0xff] %v555
        %662 = vst [vmem:[#allocation2 + $0x90] sm:$0xff] %v626
        %663 = vst [vmem:[#allocation2 + $0x98] sm:$0xff] %v628
        %664 = vst [vmem:[#allocation2 + $0xa0] sm:$0xff] %v557
        %665 = vst [vmem:[#allocation2 + $0xa8] sm:$0xff] %v559
        %666 = vst [vmem:[#allocation2 + $0xb0] sm:$0xff] %v630
        %667 = vst [vmem:[#allocation2 + $0xb8] sm:$0xff] %v632
        %668 = vst [vmem:[#allocation2 + $0xc0] sm:$0xff] %v563
        %669 = vst [vmem:[#allocation2 + $0xc8] sm:$0xff] %v565
        %670 = vst [vmem:[#allocation2 + $0xd0] sm:$0xff] %v636
        %671 = vst [vmem:[#allocation2 + $0xd8] sm:$0xff] %v638
        %672 = vst [vmem:[#allocation2 + $0xe0] sm:$0xff] %v567
        %673 = vst [vmem:[#allocation2 + $0xe8] sm:$0xff] %v569
        %674 = vst [vmem:[#allocation2 + $0xf0] sm:$0xff] %v640
        %675 = vst [vmem:[#allocation2 + $0xf8] sm:$0xff] %v642
        %v676 = vld [vmem:[#allocation2] sm:$0xff]
        %v677 = vld [vmem:[#allocation2 + $0x8] sm:$0xff]
        %v678 = vld [vmem:[#allocation2 + $0x10] sm:$0xff]
        %v679 = vld [vmem:[#allocation2 + $0x18] sm:$0xff]
        %v680 = vld [vmem:[#allocation9] sm:$0xff]
        %v681 = vld [vmem:[#allocation9 + $0x8] sm:$0xff]
        %v682 = vld [vmem:[#allocation9 + $0x10] sm:$0xff]
        %v683 = vld [vmem:[#allocation9 + $0x18] sm:$0xff]
        %v684 = vld [vmem:[#allocation9 + $0x20] sm:$0xff]
        %v685 = vld [vmem:[#allocation9 + $0x28] sm:$0xff]
        %v686 = vld [vmem:[#allocation9 + $0x30] sm:$0xff]
        %v687 = vld [vmem:[#allocation9 + $0x38] sm:$0xff]
        %v688 = vld [vmem:[#allocation9 + $0x40] sm:$0xff]
        %v689 = vld [vmem:[#allocation9 + $0x48] sm:$0xff]
        %v690 = vld [vmem:[#allocation9 + $0x50] sm:$0xff]
        %v691 = vld [vmem:[#allocation9 + $0x58] sm:$0xff]
        %v692 = vld [vmem:[#allocation9 + $0x60] sm:$0xff]
        %v693 = vld [vmem:[#allocation9 + $0x68] sm:$0xff]
        %v694 = vld [vmem:[#allocation9 + $0x70] sm:$0xff]
        %v695 = vld [vmem:[#allocation9 + $0x78] sm:$0xff]
        %v696 = vld [vmem:[#allocation9 + $0x80] sm:$0xff]
        %v697 = vld [vmem:[#allocation9 + $0x88] sm:$0xff]
        %v698 = vld [vmem:[#allocation9 + $0x90] sm:$0xff]
        %v699 = vld [vmem:[#allocation9 + $0x98] sm:$0xff]
        %v700 = vld [vmem:[#allocation9 + $0xa0] sm:$0xff]
        %v701 = vld [vmem:[#allocation9 + $0xa8] sm:$0xff]
        %v702 = vld [vmem:[#allocation9 + $0xb0] sm:$0xff]
        %v703 = vld [vmem:[#allocation9 + $0xb8] sm:$0xff]
        %v704 = vld [vmem:[#allocation9 + $0xc0] sm:$0xff]
        %v705 = vld [vmem:[#allocation9 + $0xc8] sm:$0xff]
        %v706 = vld [vmem:[#allocation9 + $0xd0] sm:$0xff]
        %v707 = vld [vmem:[#allocation9 + $0xd8] sm:$0xff]
        %v708 = vld [vmem:[#allocation9 + $0xe0] sm:$0xff]
        %v709 = vld [vmem:[#allocation9 + $0xe8] sm:$0xff]
        %v710 = vld [vmem:[#allocation9 + $0xf0] sm:$0xff]
        %v711 = vld [vmem:[#allocation9 + $0xf8] sm:$0xff]
        %v744 = vunpack.c.l.b16 %v680
        %v745 = vunpack.c.h.b16 %v680
        %v746 = vunpack.c.l.b16 %v681
        %v747 = vunpack.c.h.b16 %v681
        %v748 = vunpack.c.l.b16 %v682
        %v749 = vunpack.c.h.b16 %v682
        %v750 = vunpack.c.l.b16 %v683
        %v751 = vunpack.c.h.b16 %v683
        %v752 = vunpack.c.l.b16 %v684
        %v753 = vunpack.c.h.b16 %v684
        %v754 = vunpack.c.l.b16 %v685
        %v755 = vunpack.c.h.b16 %v685
        %v756 = vunpack.c.l.b16 %v686
        %v757 = vunpack.c.h.b16 %v686
        %v758 = vunpack.c.l.b16 %v687
        %v759 = vunpack.c.h.b16 %v687
        %v760 = vunpack.c.l.b16 %v688
        %v761 = vunpack.c.h.b16 %v688
        %v762 = vunpack.c.l.b16 %v689
        %v763 = vunpack.c.h.b16 %v689
        %v764 = vunpack.c.l.b16 %v690
        %v765 = vunpack.c.h.b16 %v690
        %v766 = vunpack.c.l.b16 %v691
        %v767 = vunpack.c.h.b16 %v691
        %v768 = vunpack.c.l.b16 %v692
        %v769 = vunpack.c.h.b16 %v692
        %v770 = vunpack.c.l.b16 %v693
        %v771 = vunpack.c.h.b16 %v693
        %v772 = vunpack.c.l.b16 %v694
        %v773 = vunpack.c.h.b16 %v694
        %v774 = vunpack.c.l.b16 %v695
        %v775 = vunpack.c.h.b16 %v695
        %v776 = vunpack.c.l.b16 %v696
        %v777 = vunpack.c.h.b16 %v696
        %v778 = vunpack.c.l.b16 %v697
        %v779 = vunpack.c.h.b16 %v697
        %v780 = vunpack.c.l.b16 %v698
        %v781 = vunpack.c.h.b16 %v698
        %v782 = vunpack.c.l.b16 %v699
        %v783 = vunpack.c.h.b16 %v699
        %v784 = vunpack.c.l.b16 %v700
        %v785 = vunpack.c.h.b16 %v700
        %v786 = vunpack.c.l.b16 %v701
        %v787 = vunpack.c.h.b16 %v701
        %v788 = vunpack.c.l.b16 %v702
        %v789 = vunpack.c.h.b16 %v702
        %v790 = vunpack.c.l.b16 %v703
        %v791 = vunpack.c.h.b16 %v703
        %v792 = vunpack.c.l.b16 %v704
        %v793 = vunpack.c.h.b16 %v704
        %v794 = vunpack.c.l.b16 %v705
        %v795 = vunpack.c.h.b16 %v705
        %v796 = vunpack.c.l.b16 %v706
        %v797 = vunpack.c.h.b16 %v706
        %v798 = vunpack.c.l.b16 %v707
        %v799 = vunpack.c.h.b16 %v707
        %v800 = vunpack.c.l.b16 %v708
        %v801 = vunpack.c.h.b16 %v708
        %v802 = vunpack.c.l.b16 %v709
        %v803 = vunpack.c.h.b16 %v709
        %v804 = vunpack.c.l.b16 %v710
        %v805 = vunpack.c.h.b16 %v710
        %v806 = vunpack.c.l.b16 %v711
        %v807 = vunpack.c.h.b16 %v711
        %v808 = vpack.c.b16 %v748, %v744
        %v809 = vpack.c.b16 %v749, %v745
        %v810 = vpack.c.b16 %v750, %v746
        %v811 = vpack.c.b16 %v751, %v747
        %v812 = vpack.c.b16 %v756, %v752
        %v813 = vpack.c.b16 %v757, %v753
        %v814 = vpack.c.b16 %v758, %v754
        %v815 = vpack.c.b16 %v759, %v755
        %v816 = vpack.c.b16 %v764, %v760
        %v817 = vpack.c.b16 %v765, %v761
        %v818 = vpack.c.b16 %v766, %v762
        %v819 = vpack.c.b16 %v767, %v763
        %v820 = vpack.c.b16 %v772, %v768
        %v821 = vpack.c.b16 %v773, %v769
        %v822 = vpack.c.b16 %v774, %v770
        %v823 = vpack.c.b16 %v775, %v771
        %v824 = vpack.c.b16 %v780, %v776
        %v825 = vpack.c.b16 %v781, %v777
        %v826 = vpack.c.b16 %v782, %v778
        %v827 = vpack.c.b16 %v783, %v779
        %v828 = vpack.c.b16 %v788, %v784
        %v829 = vpack.c.b16 %v789, %v785
        %v830 = vpack.c.b16 %v790, %v786
        %v831 = vpack.c.b16 %v791, %v787
        %v832 = vpack.c.b16 %v796, %v792
        %v833 = vpack.c.b16 %v797, %v793
        %v834 = vpack.c.b16 %v798, %v794
        %v835 = vpack.c.b16 %v799, %v795
        %v836 = vpack.c.b16 %v804, %v800
        %v837 = vpack.c.b16 %v805, %v801
        %v838 = vpack.c.b16 %v806, %v802
        %v839 = vpack.c.b16 %v807, %v803
        %872 = vmatprep.subr.bf16.mxu0 %v809
        %873 = vmatpush1.bf16.msra.mxu0 %v808
        %874 = vmatprep.subr.bf16.mxu0 %v813
        %875 = vmatpush1.bf16.msra.mxu0 %v812
        %876 = vmatprep.subr.bf16.mxu0 %v817
        %877 = vmatpush1.bf16.msra.mxu0 %v816
        %878 = vmatprep.subr.bf16.mxu0 %v821
        %879 = vmatpush1.bf16.msra.mxu0 %v820
        %880 = vmatprep.subr.bf16.mxu0 %v825
        %881 = vmatpush1.bf16.msra.mxu0 %v824
        %882 = vmatprep.subr.bf16.mxu0 %v829
        %883 = vmatpush1.bf16.msra.mxu0 %v828
        %884 = vmatprep.subr.bf16.mxu0 %v833
        %885 = vmatpush1.bf16.msra.mxu0 %v832
        %886 = vmatprep.subr.bf16.mxu0 %v837
        %887 = vmatpush1.bf16.msra.mxu0 %v836
        %888 = vmatprep.subr.bf16.mxu0 0
        %889 = vmatpush1.bf16.msra.mxu0 0
        %890 = vmatprep.subr.bf16.mxu0 0
        %891 = vmatpush1.bf16.msra.mxu0 0
        %892 = vmatprep.subr.bf16.mxu0 0
        %893 = vmatpush1.bf16.msra.mxu0 0
        %894 = vmatprep.subr.bf16.mxu0 0
        %895 = vmatpush1.bf16.msra.mxu0 0
        %896 = vmatprep.subr.bf16.mxu0 0
        %897 = vmatpush1.bf16.msra.mxu0 0
        %898 = vmatprep.subr.bf16.mxu0 0
        %899 = vmatpush1.bf16.msra.mxu0 0
        %900 = vmatprep.subr.bf16.mxu0 0
        %901 = vmatpush1.bf16.msra.mxu0 0
        %902 = vmatprep.subr.bf16.mxu0 0
        %903 = vmatpush1.bf16.msra.mxu0 0
        %904 = vmatprep.mubr.bf16.mxu0 0
        %905 = vmatmul.mubr.bf16.gmra.mrb[0].mxu0 0
        %v906 = vpop.f32.mrb[0].mxu0
        %v907 = vadd.f32 0.0, %v906
        %v908 = vpop.f32.mrb[0].mxu0
        %v909 = vadd.f32 0.0, %v908
        %v910 = vpop.f32.mrb[0].mxu0
        %v911 = vpop.f32.mrb[0].mxu0
        %912 = vdwg.mxu0
        %913 = vmatprep.subr.bf16.mxu0 %v811
        %914 = vmatpush1.bf16.msra.mxu0 %v810
        %915 = vmatprep.subr.bf16.mxu0 %v815
        %916 = vmatpush1.bf16.msra.mxu0 %v814
        %917 = vmatprep.subr.bf16.mxu0 %v819
        %918 = vmatpush1.bf16.msra.mxu0 %v818
        %919 = vmatprep.subr.bf16.mxu0 %v823
        %920 = vmatpush1.bf16.msra.mxu0 %v822
        %921 = vmatprep.subr.bf16.mxu0 %v827
        %922 = vmatpush1.bf16.msra.mxu0 %v826
        %923 = vmatprep.subr.bf16.mxu0 %v831
        %924 = vmatpush1.bf16.msra.mxu0 %v830
        %925 = vmatprep.subr.bf16.mxu0 %v835
        %926 = vmatpush1.bf16.msra.mxu0 %v834
        %927 = vmatprep.subr.bf16.mxu0 %v839
        %928 = vmatpush1.bf16.msra.mxu0 %v838
        %929 = vmatprep.subr.bf16.mxu0 0
        %930 = vmatpush1.bf16.msra.mxu0 0
        %931 = vmatprep.subr.bf16.mxu0 0
        %932 = vmatpush1.bf16.msra.mxu0 0
        %933 = vmatprep.subr.bf16.mxu0 0
        %934 = vmatpush1.bf16.msra.mxu0 0
        %935 = vmatprep.subr.bf16.mxu0 0
        %936 = vmatpush1.bf16.msra.mxu0 0
        %937 = vmatprep.subr.bf16.mxu0 0
        %938 = vmatpush1.bf16.msra.mxu0 0
        %939 = vmatprep.subr.bf16.mxu0 0
        %940 = vmatpush1.bf16.msra.mxu0 0
        %941 = vmatprep.subr.bf16.mxu0 0
        %942 = vmatpush1.bf16.msra.mxu0 0
        %943 = vmatprep.subr.bf16.mxu0 0
        %944 = vmatpush1.bf16.msra.mxu0 0
        %945 = vmatprep.mubr.bf16.mxu0 0
        %946 = vmatmul.mubr.bf16.gmra.mrb[0].mxu0 0
        %v947 = vpop.f32.mrb[0].mxu0
        %v948 = vadd.f32 0.0, %v947
        %v949 = vpop.f32.mrb[0].mxu0
        %v950 = vadd.f32 0.0, %v949
        %v951 = vpop.f32.mrb[0].mxu0
        %v952 = vpop.f32.mrb[0].mxu0
        %953 = vdwg.mxu0
        %v954 = vadd.f32 %v676, %v907
        %v955 = vadd.f32 %v677, %v909
        %v956 = vadd.f32 %v678, %v948
        %v957 = vadd.f32 %v679, %v950
        %v958 = vxor.u32 %v954, 2147483648
        %v959 = vxor.u32 %v955, 2147483648
        %v960 = vxor.u32 %v956, 2147483648
        %v961 = vmul.f32 %v958, 1.442695
        %v962 = vpow.pop %v961
        %v963 = vmul.f32 %v959, 1.442695
        %v964 = vpow.pop %v963
        %v965 = vmul.f32 %v960, 1.442695
        %v966 = vpow.pop %v965
        %v967 = vadd.f32 %v962, 1.0
        %v968 = vadd.f32 %v964, 1.0
        %v969 = vadd.f32 %v966, 1.0
        %v970 = vrcp.pop %v967
        %v971 = vmul.f32 1.0, %v970
        %v972 = vrcp.pop %v968
        %v973 = vmul.f32 1.0, %v972
        %v974 = vrcp.pop %v969
        %v975 = vmul.f32 1.0, %v974
        %v976 = vtanh.pop %v957
        %v977 = vmul.f32 %v973, 0.0
        %v978 = vmul.f32 %v971, %v976
        %v979 = vadd.f32 %v977, %v978
        %v980 = vtanh.pop %v979
        %v981 = vmul.f32 %v975, %v980
        %982 = vst [vmem:[#allocation3] sm:$0xff] %v981
        %v983 = vld [vmem:[#allocation2 + $0x20] sm:$0xff]
        %v984 = vld [vmem:[#allocation2 + $0x28] sm:$0xff]
        %v985 = vld [vmem:[#allocation2 + $0x30] sm:$0xff]
        %v986 = vld [vmem:[#allocation2 + $0x38] sm:$0xff]
        %v987 = vpack.c.bf16 %v981, %v981
        %v988 = vld [vmem:[#allocation9] sm:$0xff]
        %v989 = vld [vmem:[#allocation9 + $0x8] sm:$0xff]
        %v990 = vld [vmem:[#allocation9 + $0x10] sm:$0xff]
        %v991 = vld [vmem:[#allocation9 + $0x18] sm:$0xff]
        %v992 = vld [vmem:[#allocation9 + $0x20] sm:$0xff]
        %v993 = vld [vmem:[#allocation9 + $0x28] sm:$0xff]
        %v994 = vld [vmem:[#allocation9 + $0x30] sm:$0xff]
        %v995 = vld [vmem:[#allocation9 + $0x38] sm:$0xff]
        %v996 = vld [vmem:[#allocation9 + $0x40] sm:$0xff]
        %v997 = vld [vmem:[#allocation9 + $0x48] sm:$0xff]
        %v998 = vld [vmem:[#allocation9 + $0x50] sm:$0xff]
        %v999 = vld [vmem:[#allocation9 + $0x58] sm:$0xff]
        %v1000 = vld [vmem:[#allocation9 + $0x60] sm:$0xff]
        %v1001 = vld [vmem:[#allocation9 + $0x68] sm:$0xff]
        %v1002 = vld [vmem:[#allocation9 + $0x70] sm:$0xff]
        %v1003 = vld [vmem:[#allocation9 + $0x78] sm:$0xff]
        %v1004 = vld [vmem:[#allocation9 + $0x80] sm:$0xff]
        %v1005 = vld [vmem:[#allocation9 + $0x88] sm:$0xff]
        %v1006 = vld [vmem:[#allocation9 + $0x90] sm:$0xff]
        %v1007 = vld [vmem:[#allocation9 + $0x98] sm:$0xff]
        %v1008 = vld [vmem:[#allocation9 + $0xa0] sm:$0xff]
        %v1009 = vld [vmem:[#allocation9 + $0xa8] sm:$0xff]
        %v1010 = vld [vmem:[#allocation9 + $0xb0] sm:$0xff]
        %v1011 = vld [vmem:[#allocation9 + $0xb8] sm:$0xff]
        %v1012 = vld [vmem:[#allocation9 + $0xc0] sm:$0xff]
        %v1013 = vld [vmem:[#allocation9 + $0xc8] sm:$0xff]
        %v1014 = vld [vmem:[#allocation9 + $0xd0] sm:$0xff]
        %v1015 = vld [vmem:[#allocation9 + $0xd8] sm:$0xff]
        %v1016 = vld [vmem:[#allocation9 + $0xe0] sm:$0xff]
        %v1017 = vld [vmem:[#allocation9 + $0xe8] sm:$0xff]
        %v1018 = vld [vmem:[#allocation9 + $0xf0] sm:$0xff]
        %v1019 = vld [vmem:[#allocation9 + $0xf8] sm:$0xff]
        %v1052 = vunpack.c.l.b16 %v988
        %v1053 = vunpack.c.h.b16 %v988
        %v1054 = vunpack.c.l.b16 %v989
        %v1055 = vunpack.c.h.b16 %v989
        %v1056 = vunpack.c.l.b16 %v990
        %v1057 = vunpack.c.h.b16 %v990
        %v1058 = vunpack.c.l.b16 %v991
        %v1059 = vunpack.c.h.b16 %v991
        %v1060 = vunpack.c.l.b16 %v992
        %v1061 = vunpack.c.h.b16 %v992
        %v1062 = vunpack.c.l.b16 %v993
        %v1063 = vunpack.c.h.b16 %v993
        %v1064 = vunpack.c.l.b16 %v994
        %v1065 = vunpack.c.h.b16 %v994
        %v1066 = vunpack.c.l.b16 %v995
        %v1067 = vunpack.c.h.b16 %v995
        %v1068 = vunpack.c.l.b16 %v996
        %v1069 = vunpack.c.h.b16 %v996
        %v1070 = vunpack.c.l.b16 %v997
        %v1071 = vunpack.c.h.b16 %v997
        %v1072 = vunpack.c.l.b16 %v998
        %v1073 = vunpack.c.h.b16 %v998
        %v1074 = vunpack.c.l.b16 %v999
        %v1075 = vunpack.c.h.b16 %v999
        %v1076 = vunpack.c.l.b16 %v1000
        %v1077 = vunpack.c.h.b16 %v1000
        %v1078 = vunpack.c.l.b16 %v1001
        %v1079 = vunpack.c.h.b16 %v1001
        %v1080 = vunpack.c.l.b16 %v1002
        %v1081 = vunpack.c.h.b16 %v1002
        %v1082 = vunpack.c.l.b16 %v1003
        %v1083 = vunpack.c.h.b16 %v1003
        %v1084 = vunpack.c.l.b16 %v1004
        %v1085 = vunpack.c.h.b16 %v1004
        %v1086 = vunpack.c.l.b16 %v1005
        %v1087 = vunpack.c.h.b16 %v1005
        %v1088 = vunpack.c.l.b16 %v1006
        %v1089 = vunpack.c.h.b16 %v1006
        %v1090 = vunpack.c.l.b16 %v1007
        %v1091 = vunpack.c.h.b16 %v1007
        %v1092 = vunpack.c.l.b16 %v1008
        %v1093 = vunpack.c.h.b16 %v1008
        %v1094 = vunpack.c.l.b16 %v1009
        %v1095 = vunpack.c.h.b16 %v1009
        %v1096 = vunpack.c.l.b16 %v1010
        %v1097 = vunpack.c.h.b16 %v1010
        %v1098 = vunpack.c.l.b16 %v1011
        %v1099 = vunpack.c.h.b16 %v1011
        %v1100 = vunpack.c.l.b16 %v1012
        %v1101 = vunpack.c.h.b16 %v1012
        %v1102 = vunpack.c.l.b16 %v1013
        %v1103 = vunpack.c.h.b16 %v1013
        %v1104 = vunpack.c.l.b16 %v1014
        %v1105 = vunpack.c.h.b16 %v1014
        %v1106 = vunpack.c.l.b16 %v1015
        %v1107 = vunpack.c.h.b16 %v1015
        %v1108 = vunpack.c.l.b16 %v1016
        %v1109 = vunpack.c.h.b16 %v1016
        %v1110 = vunpack.c.l.b16 %v1017
        %v1111 = vunpack.c.h.b16 %v1017
        %v1112 = vunpack.c.l.b16 %v1018
        %v1113 = vunpack.c.h.b16 %v1018
        %v1114 = vunpack.c.l.b16 %v1019
        %v1115 = vunpack.c.h.b16 %v1019
        %v1116 = vpack.c.b16 %v1056, %v1052
        %v1117 = vpack.c.b16 %v1057, %v1053
        %v1118 = vpack.c.b16 %v1058, %v1054
        %v1119 = vpack.c.b16 %v1059, %v1055
        %v1120 = vpack.c.b16 %v1064, %v1060
        %v1121 = vpack.c.b16 %v1065, %v1061
        %v1122 = vpack.c.b16 %v1066, %v1062
        %v1123 = vpack.c.b16 %v1067, %v1063
        %v1124 = vpack.c.b16 %v1072, %v1068
        %v1125 = vpack.c.b16 %v1073, %v1069
        %v1126 = vpack.c.b16 %v1074, %v1070
        %v1127 = vpack.c.b16 %v1075, %v1071
        %v1128 = vpack.c.b16 %v1080, %v1076
        %v1129 = vpack.c.b16 %v1081, %v1077
        %v1130 = vpack.c.b16 %v1082, %v1078
        %v1131 = vpack.c.b16 %v1083, %v1079
        %v1132 = vpack.c.b16 %v1088, %v1084
        %v1133 = vpack.c.b16 %v1089, %v1085
        %v1134 = vpack.c.b16 %v1090, %v1086
        %v1135 = vpack.c.b16 %v1091, %v1087
        %v1136 = vpack.c.b16 %v1096, %v1092
        %v1137 = vpack.c.b16 %v1097, %v1093
        %v1138 = vpack.c.b16 %v1098, %v1094
        %v1139 = vpack.c.b16 %v1099, %v1095
        %v1140 = vpack.c.b16 %v1104, %v1100
        %v1141 = vpack.c.b16 %v1105, %v1101
        %v1142 = vpack.c.b16 %v1106, %v1102
        %v1143 = vpack.c.b16 %v1107, %v1103
        %v1144 = vpack.c.b16 %v1112, %v1108
        %v1145 = vpack.c.b16 %v1113, %v1109
        %v1146 = vpack.c.b16 %v1114, %v1110
        %v1147 = vpack.c.b16 %v1115, %v1111
        %1180 = vmatprep.subr.bf16.mxu0 %v1117
        %1181 = vmatpush1.bf16.msra.mxu0 %v1116
        %1182 = vmatprep.subr.bf16.mxu0 %v1121
        %1183 = vmatpush1.bf16.msra.mxu0 %v1120
        %1184 = vmatprep.subr.bf16.mxu0 %v1125
        %1185 = vmatpush1.bf16.msra.mxu0 %v1124
        %1186 = vmatprep.subr.bf16.mxu0 %v1129
        %1187 = vmatpush1.bf16.msra.mxu0 %v1128
        %1188 = vmatprep.subr.bf16.mxu0 %v1133
        %1189 = vmatpush1.bf16.msra.mxu0 %v1132
        %1190 = vmatprep.subr.bf16.mxu0 %v1137
        %1191 = vmatpush1.bf16.msra.mxu0 %v1136
        %1192 = vmatprep.subr.bf16.mxu0 %v1141
        %1193 = vmatpush1.bf16.msra.mxu0 %v1140
        %1194 = vmatprep.subr.bf16.mxu0 %v1145
        %1195 = vmatpush1.bf16.msra.mxu0 %v1144
        %1196 = vmatprep.subr.bf16.mxu0 0
        %1197 = vmatpush1.bf16.msra.mxu0 0
        %1198 = vmatprep.subr.bf16.mxu0 0
        %1199 = vmatpush1.bf16.msra.mxu0 0
        %1200 = vmatprep.subr.bf16.mxu0 0
        %1201 = vmatpush1.bf16.msra.mxu0 0
        %1202 = vmatprep.subr.bf16.mxu0 0
        %1203 = vmatpush1.bf16.msra.mxu0 0
        %1204 = vmatprep.subr.bf16.mxu0 0
        %1205 = vmatpush1.bf16.msra.mxu0 0
        %1206 = vmatprep.subr.bf16.mxu0 0
        %1207 = vmatpush1.bf16.msra.mxu0 0
        %1208 = vmatprep.subr.bf16.mxu0 0
        %1209 = vmatpush1.bf16.msra.mxu0 0
        %1210 = vmatprep.subr.bf16.mxu0 0
        %1211 = vmatpush1.bf16.msra.mxu0 0
        %1212 = vmatprep.mubr.bf16.mxu0 0
        %1213 = vmatmul.mubr.bf16.gmra.mrb[0].mxu0 %v987
        %v1214 = vpop.f32.mrb[0].mxu0
        %v1215 = vadd.f32 0.0, %v1214
        %v1216 = vpop.f32.mrb[0].mxu0
        %v1217 = vadd.f32 0.0, %v1216
        %v1218 = vpop.f32.mrb[0].mxu0
        %v1219 = vpop.f32.mrb[0].mxu0
        %1220 = vdwg.mxu0
        %1221 = vmatprep.subr.bf16.mxu0 %v1119
        %1222 = vmatpush1.bf16.msra.mxu0 %v1118
        %1223 = vmatprep.subr.bf16.mxu0 %v1123
        %1224 = vmatpush1.bf16.msra.mxu0 %v1122
        %1225 = vmatprep.subr.bf16.mxu0 %v1127
        %1226 = vmatpush1.bf16.msra.mxu0 %v1126
        %1227 = vmatprep.subr.bf16.mxu0 %v1131
        %1228 = vmatpush1.bf16.msra.mxu0 %v1130
        %1229 = vmatprep.subr.bf16.mxu0 %v1135
        %1230 = vmatpush1.bf16.msra.mxu0 %v1134
        %1231 = vmatprep.subr.bf16.mxu0 %v1139
        %1232 = vmatpush1.bf16.msra.mxu0 %v1138
        %1233 = vmatprep.subr.bf16.mxu0 %v1143
        %1234 = vmatpush1.bf16.msra.mxu0 %v1142
        %1235 = vmatprep.subr.bf16.mxu0 %v1147
        %1236 = vmatpush1.bf16.msra.mxu0 %v1146
        %1237 = vmatprep.subr.bf16.mxu0 0
        %1238 = vmatpush1.bf16.msra.mxu0 0
        %1239 = vmatprep.subr.bf16.mxu0 0
        %1240 = vmatpush1.bf16.msra.mxu0 0
        %1241 = vmatprep.subr.bf16.mxu0 0
        %1242 = vmatpush1.bf16.msra.mxu0 0
        %1243 = vmatprep.subr.bf16.mxu0 0
        %1244 = vmatpush1.bf16.msra.mxu0 0
        %1245 = vmatprep.subr.bf16.mxu0 0
        %1246 = vmatpush1.bf16.msra.mxu0 0
        %1247 = vmatprep.subr.bf16.mxu0 0
        %1248 = vmatpush1.bf16.msra.mxu0 0
        %1249 = vmatprep.subr.bf16.mxu0 0
        %1250 = vmatpush1.bf16.msra.mxu0 0
        %1251 = vmatprep.subr.bf16.mxu0 0
        %1252 = vmatpush1.bf16.msra.mxu0 0
        %1253 = vmatprep.mubr.bf16.mxu0 0
        %1254 = vmatmul.mubr.bf16.gmra.mrb[0].mxu0 %v987
        %v1255 = vpop.f32.mrb[0].mxu0
        %v1256 = vadd.f32 0.0, %v1255
        %v1257 = vpop.f32.mrb[0].mxu0
        %v1258 = vadd.f32 0.0, %v1257
        %v1259 = vpop.f32.mrb[0].mxu0
        %v1260 = vpop.f32.mrb[0].mxu0
        %1261 = vdwg.mxu0
        %v1262 = vadd.f32 %v983, %v1215
        %v1263 = vadd.f32 %v984, %v1217
        %v1264 = vadd.f32 %v985, %v1256
        %v1265 = vadd.f32 %v986, %v1258
        %v1266 = vxor.u32 %v1262, 2147483648
        %v1267 = vxor.u32 %v1263, 2147483648
        %v1268 = vxor.u32 %v1264, 2147483648
        %v1269 = vmul.f32 %v1266, 1.442695
        %v1270 = vpow.pop %v1269
        %v1271 = vmul.f32 %v1267, 1.442695
        %v1272 = vpow.pop %v1271
        %v1273 = vmul.f32 %v1268, 1.442695
        %v1274 = vpow.pop %v1273
        %v1275 = vadd.f32 %v1270, 1.0
        %v1276 = vadd.f32 %v1272, 1.0
        %v1277 = vadd.f32 %v1274, 1.0
        %v1278 = vrcp.pop %v1275
        %v1279 = vmul.f32 1.0, %v1278
        %v1280 = vrcp.pop %v1276
        %v1281 = vmul.f32 1.0, %v1280
        %v1282 = vrcp.pop %v1277
        %v1283 = vmul.f32 1.0, %v1282
        %v1284 = vtanh.pop %v1265
        %v1285 = vmul.f32 %v1281, %v979
        %v1286 = vmul.f32 %v1279, %v1284
        %v1287 = vadd.f32 %v1285, %v1286
        %v1288 = vtanh.pop %v1287
        %v1289 = vmul.f32 %v1283, %v1288
        %1290 = vst [vmem:[#allocation3 + $0x8] sm:$0xff] %v1289
        %v1291 = vld [vmem:[#allocation2 + $0x40] sm:$0xff]
        %v1292 = vld [vmem:[#allocation2 + $0x48] sm:$0xff]
        %v1293 = vld [vmem:[#allocation2 + $0x50] sm:$0xff]
        %v1294 = vld [vmem:[#allocation2 + $0x58] sm:$0xff]
        %v1295 = vpack.c.bf16 %v1289, %v1289
        %v1296 = vld [vmem:[#allocation9] sm:$0xff]
        %v1297 = vld [vmem:[#allocation9 + $0x8] sm:$0xff]
        %v1298 = vld [vmem:[#allocation9 + $0x10] sm:$0xff]
        %v1299 = vld [vmem:[#allocation9 + $0x18] sm:$0xff]
        %v1300 = vld [vmem:[#allocation9 + $0x20] sm:$0xff]
        %v1301 = vld [vmem:[#allocation9 + $0x28] sm:$0xff]
        %v1302 = vld [vmem:[#allocation9 + $0x30] sm:$0xff]
        %v1303 = vld [vmem:[#allocation9 + $0x38] sm:$0xff]
        %v1304 = vld [vmem:[#allocation9 + $0x40] sm:$0xff]
        %v1305 = vld [vmem:[#allocation9 + $0x48] sm:$0xff]
        %v1306 = vld [vmem:[#allocation9 + $0x50] sm:$0xff]
        %v1307 = vld [vmem:[#allocation9 + $0x58] sm:$0xff]
        %v1308 = vld [vmem:[#allocation9 + $0x60] sm:$0xff]
        %v1309 = vld [vmem:[#allocation9 + $0x68] sm:$0xff]
        %v1310 = vld [vmem:[#allocation9 + $0x70] sm:$0xff]
        %v1311 = vld [vmem:[#allocation9 + $0x78] sm:$0xff]
        %v1312 = vld [vmem:[#allocation9 + $0x80] sm:$0xff]
        %v1313 = vld [vmem:[#allocation9 + $0x88] sm:$0xff]
        %v1314 = vld [vmem:[#allocation9 + $0x90] sm:$0xff]
        %v1315 = vld [vmem:[#allocation9 + $0x98] sm:$0xff]
        %v1316 = vld [vmem:[#allocation9 + $0xa0] sm:$0xff]
        %v1317 = vld [vmem:[#allocation9 + $0xa8] sm:$0xff]
        %v1318 = vld [vmem:[#allocation9 + $0xb0] sm:$0xff]
        %v1319 = vld [vmem:[#allocation9 + $0xb8] sm:$0xff]
        %v1320 = vld [vmem:[#allocation9 + $0xc0] sm:$0xff]
        %v1321 = vld [vmem:[#allocation9 + $0xc8] sm:$0xff]
        %v1322 = vld [vmem:[#allocation9 + $0xd0] sm:$0xff]
        %v1323 = vld [vmem:[#allocation9 + $0xd8] sm:$0xff]
        %v1324 = vld [vmem:[#allocation9 + $0xe0] sm:$0xff]
        %v1325 = vld [vmem:[#allocation9 + $0xe8] sm:$0xff]
        %v1326 = vld [vmem:[#allocation9 + $0xf0] sm:$0xff]
        %v1327 = vld [vmem:[#allocation9 + $0xf8] sm:$0xff]
        %v1360 = vunpack.c.l.b16 %v1296
        %v1361 = vunpack.c.h.b16 %v1296
        %v1362 = vunpack.c.l.b16 %v1297
        %v1363 = vunpack.c.h.b16 %v1297
        %v1364 = vunpack.c.l.b16 %v1298
        %v1365 = vunpack.c.h.b16 %v1298
        %v1366 = vunpack.c.l.b16 %v1299
        %v1367 = vunpack.c.h.b16 %v1299
        %v1368 = vunpack.c.l.b16 %v1300
        %v1369 = vunpack.c.h.b16 %v1300
        %v1370 = vunpack.c.l.b16 %v1301
        %v1371 = vunpack.c.h.b16 %v1301
        %v1372 = vunpack.c.l.b16 %v1302
        %v1373 = vunpack.c.h.b16 %v1302
        %v1374 = vunpack.c.l.b16 %v1303
        %v1375 = vunpack.c.h.b16 %v1303
        %v1376 = vunpack.c.l.b16 %v1304
        %v1377 = vunpack.c.h.b16 %v1304
        %v1378 = vunpack.c.l.b16 %v1305
        %v1379 = vunpack.c.h.b16 %v1305
        %v1380 = vunpack.c.l.b16 %v1306
        %v1381 = vunpack.c.h.b16 %v1306
        %v1382 = vunpack.c.l.b16 %v1307
        %v1383 = vunpack.c.h.b16 %v1307
        %v1384 = vunpack.c.l.b16 %v1308
        %v1385 = vunpack.c.h.b16 %v1308
        %v1386 = vunpack.c.l.b16 %v1309
        %v1387 = vunpack.c.h.b16 %v1309
        %v1388 = vunpack.c.l.b16 %v1310
        %v1389 = vunpack.c.h.b16 %v1310
        %v1390 = vunpack.c.l.b16 %v1311
        %v1391 = vunpack.c.h.b16 %v1311
        %v1392 = vunpack.c.l.b16 %v1312
        %v1393 = vunpack.c.h.b16 %v1312
        %v1394 = vunpack.c.l.b16 %v1313
        %v1395 = vunpack.c.h.b16 %v1313
        %v1396 = vunpack.c.l.b16 %v1314
        %v1397 = vunpack.c.h.b16 %v1314
        %v1398 = vunpack.c.l.b16 %v1315
        %v1399 = vunpack.c.h.b16 %v1315
        %v1400 = vunpack.c.l.b16 %v1316
        %v1401 = vunpack.c.h.b16 %v1316
        %v1402 = vunpack.c.l.b16 %v1317
        %v1403 = vunpack.c.h.b16 %v1317
        %v1404 = vunpack.c.l.b16 %v1318
        %v1405 = vunpack.c.h.b16 %v1318
        %v1406 = vunpack.c.l.b16 %v1319
        %v1407 = vunpack.c.h.b16 %v1319
        %v1408 = vunpack.c.l.b16 %v1320
        %v1409 = vunpack.c.h.b16 %v1320
        %v1410 = vunpack.c.l.b16 %v1321
        %v1411 = vunpack.c.h.b16 %v1321
        %v1412 = vunpack.c.l.b16 %v1322
        %v1413 = vunpack.c.h.b16 %v1322
        %v1414 = vunpack.c.l.b16 %v1323
        %v1415 = vunpack.c.h.b16 %v1323
        %v1416 = vunpack.c.l.b16 %v1324
        %v1417 = vunpack.c.h.b16 %v1324
        %v1418 = vunpack.c.l.b16 %v1325
        %v1419 = vunpack.c.h.b16 %v1325
        %v1420 = vunpack.c.l.b16 %v1326
        %v1421 = vunpack.c.h.b16 %v1326
        %v1422 = vunpack.c.l.b16 %v1327
        %v1423 = vunpack.c.h.b16 %v1327
        %v1424 = vpack.c.b16 %v1364, %v1360
        %v1425 = vpack.c.b16 %v1365, %v1361
        %v1426 = vpack.c.b16 %v1366, %v1362
        %v1427 = vpack.c.b16 %v1367, %v1363
        %v1428 = vpack.c.b16 %v1372, %v1368
        %v1429 = vpack.c.b16 %v1373, %v1369
        %v1430 = vpack.c.b16 %v1374, %v1370
        %v1431 = vpack.c.b16 %v1375, %v1371
        %v1432 = vpack.c.b16 %v1380, %v1376
        %v1433 = vpack.c.b16 %v1381, %v1377
        %v1434 = vpack.c.b16 %v1382, %v1378
        %v1435 = vpack.c.b16 %v1383, %v1379
        %v1436 = vpack.c.b16 %v1388, %v1384
        %v1437 = vpack.c.b16 %v1389, %v1385
        %v1438 = vpack.c.b16 %v1390, %v1386
        %v1439 = vpack.c.b16 %v1391, %v1387
        %v1440 = vpack.c.b16 %v1396, %v1392
        %v1441 = vpack.c.b16 %v1397, %v1393
        %v1442 = vpack.c.b16 %v1398, %v1394
        %v1443 = vpack.c.b16 %v1399, %v1395
        %v1444 = vpack.c.b16 %v1404, %v1400
        %v1445 = vpack.c.b16 %v1405, %v1401
        %v1446 = vpack.c.b16 %v1406, %v1402
        %v1447 = vpack.c.b16 %v1407, %v1403
        %v1448 = vpack.c.b16 %v1412, %v1408
        %v1449 = vpack.c.b16 %v1413, %v1409
        %v1450 = vpack.c.b16 %v1414, %v1410
        %v1451 = vpack.c.b16 %v1415, %v1411
        %v1452 = vpack.c.b16 %v1420, %v1416
        %v1453 = vpack.c.b16 %v1421, %v1417
        %v1454 = vpack.c.b16 %v1422, %v1418
        %v1455 = vpack.c.b16 %v1423, %v1419
        %1488 = vmatprep.subr.bf16.mxu0 %v1425
        %1489 = vmatpush1.bf16.msra.mxu0 %v1424
        %1490 = vmatprep.subr.bf16.mxu0 %v1429
        %1491 = vmatpush1.bf16.msra.mxu0 %v1428
        %1492 = vmatprep.subr.bf16.mxu0 %v1433
        %1493 = vmatpush1.bf16.msra.mxu0 %v1432
        %1494 = vmatprep.subr.bf16.mxu0 %v1437
        %1495 = vmatpush1.bf16.msra.mxu0 %v1436
        %1496 = vmatprep.subr.bf16.mxu0 %v1441
        %1497 = vmatpush1.bf16.msra.mxu0 %v1440
        %1498 = vmatprep.subr.bf16.mxu0 %v1445
        %1499 = vmatpush1.bf16.msra.mxu0 %v1444
        %1500 = vmatprep.subr.bf16.mxu0 %v1449
        %1501 = vmatpush1.bf16.msra.mxu0 %v1448
        %1502 = vmatprep.subr.bf16.mxu0 %v1453
        %1503 = vmatpush1.bf16.msra.mxu0 %v1452
        %1504 = vmatprep.subr.bf16.mxu0 0
        %1505 = vmatpush1.bf16.msra.mxu0 0
        %1506 = vmatprep.subr.bf16.mxu0 0
        %1507 = vmatpush1.bf16.msra.mxu0 0
        %1508 = vmatprep.subr.bf16.mxu0 0
        %1509 = vmatpush1.bf16.msra.mxu0 0
        %1510 = vmatprep.subr.bf16.mxu0 0
        %1511 = vmatpush1.bf16.msra.mxu0 0
        %1512 = vmatprep.subr.bf16.mxu0 0
        %1513 = vmatpush1.bf16.msra.mxu0 0
        %1514 = vmatprep.subr.bf16.mxu0 0
        %1515 = vmatpush1.bf16.msra.mxu0 0
        %1516 = vmatprep.subr.bf16.mxu0 0
        %1517 = vmatpush1.bf16.msra.mxu0 0
        %1518 = vmatprep.subr.bf16.mxu0 0
        %1519 = vmatpush1.bf16.msra.mxu0 0
        %1520 = vmatprep.mubr.bf16.mxu0 0
        %1521 = vmatmul.mubr.bf16.gmra.mrb[0].mxu0 %v1295
        %v1522 = vpop.f32.mrb[0].mxu0
        %v1523 = vadd.f32 0.0, %v1522
        %v1524 = vpop.f32.mrb[0].mxu0
        %v1525 = vadd.f32 0.0, %v1524
        %v1526 = vpop.f32.mrb[0].mxu0
        %v1527 = vpop.f32.mrb[0].mxu0
        %1528 = vdwg.mxu0
        %1529 = vmatprep.subr.bf16.mxu0 %v1427
        %1530 = vmatpush1.bf16.msra.mxu0 %v1426
        %1531 = vmatprep.subr.bf16.mxu0 %v1431
        %1532 = vmatpush1.bf16.msra.mxu0 %v1430
        %1533 = vmatprep.subr.bf16.mxu0 %v1435
        %1534 = vmatpush1.bf16.msra.mxu0 %v1434
        %1535 = vmatprep.subr.bf16.mxu0 %v1439
        %1536 = vmatpush1.bf16.msra.mxu0 %v1438
        %1537 = vmatprep.subr.bf16.mxu0 %v1443
        %1538 = vmatpush1.bf16.msra.mxu0 %v1442
        %1539 = vmatprep.subr.bf16.mxu0 %v1447
        %1540 = vmatpush1.bf16.msra.mxu0 %v1446
        %1541 = vmatprep.subr.bf16.mxu0 %v1451
        %1542 = vmatpush1.bf16.msra.mxu0 %v1450
        %1543 = vmatprep.subr.bf16.mxu0 %v1455
        %1544 = vmatpush1.bf16.msra.mxu0 %v1454
        %1545 = vmatprep.subr.bf16.mxu0 0
        %1546 = vmatpush1.bf16.msra.mxu0 0
        %1547 = vmatprep.subr.bf16.mxu0 0
        %1548 = vmatpush1.bf16.msra.mxu0 0
        %1549 = vmatprep.subr.bf16.mxu0 0
        %1550 = vmatpush1.bf16.msra.mxu0 0
        %1551 = vmatprep.subr.bf16.mxu0 0
        %1552 = vmatpush1.bf16.msra.mxu0 0
        %1553 = vmatprep.subr.bf16.mxu0 0
        %1554 = vmatpush1.bf16.msra.mxu0 0
        %1555 = vmatprep.subr.bf16.mxu0 0
        %1556 = vmatpush1.bf16.msra.mxu0 0
        %1557 = vmatprep.subr.bf16.mxu0 0
        %1558 = vmatpush1.bf16.msra.mxu0 0
        %1559 = vmatprep.subr.bf16.mxu0 0
        %1560 = vmatpush1.bf16.msra.mxu0 0
        %1561 = vmatprep.mubr.bf16.mxu0 0
        %1562 = vmatmul.mubr.bf16.gmra.mrb[0].mxu0 %v1295
        %v1563 = vpop.f32.mrb[0].mxu0
        %v1564 = vadd.f32 0.0, %v1563
        %v1565 = vpop.f32.mrb[0].mxu0
        %v1566 = vadd.f32 0.0, %v1565
        %v1567 = vpop.f32.mrb[0].mxu0
        %v1568 = vpop.f32.mrb[0].mxu0
        %1569 = vdwg.mxu0
        %v1570 = vadd.f32 %v1291, %v1523
        %v1571 = vadd.f32 %v1292, %v1525
        %v1572 = vadd.f32 %v1293, %v1564
        %v1573 = vadd.f32 %v1294, %v1566
        %v1574 = vxor.u32 %v1570, 2147483648
        %v1575 = vxor.u32 %v1571, 2147483648
        %v1576 = vxor.u32 %v1572, 2147483648
        %v1577 = vmul.f32 %v1574, 1.442695
        %v1578 = vpow.pop %v1577
        %v1579 = vmul.f32 %v1575, 1.442695
        %v1580 = vpow.pop %v1579
        %v1581 = vmul.f32 %v1576, 1.442695
        %v1582 = vpow.pop %v1581
        %v1583 = vadd.f32 %v1578, 1.0
        %v1584 = vadd.f32 %v1580, 1.0
        %v1585 = vadd.f32 %v1582, 1.0
        %v1586 = vrcp.pop %v1583
        %v1587 = vmul.f32 1.0, %v1586
        %v1588 = vrcp.pop %v1584
        %v1589 = vmul.f32 1.0, %v1588
        %v1590 = vrcp.pop %v1585
        %v1591 = vmul.f32 1.0, %v1590
        %v1592 = vtanh.pop %v1573
        %v1593 = vmul.f32 %v1589, %v1287
        %v1594 = vmul.f32 %v1587, %v1592
        %v1595 = vadd.f32 %v1593, %v1594
        %v1596 = vtanh.pop %v1595
        %v1597 = vmul.f32 %v1591, %v1596
        %1598 = vst [vmem:[#allocation3 + $0x10] sm:$0xff] %v1597
        %v1599 = vld [vmem:[#allocation2 + $0x60] sm:$0xff]
        %v1600 = vld [vmem:[#allocation2 + $0x68] sm:$0xff]
        %v1601 = vld [vmem:[#allocation2 + $0x70] sm:$0xff]
        %v1602 = vld [vmem:[#allocation2 + $0x78] sm:$0xff]
        %v1603 = vpack.c.bf16 %v1597, %v1597
        %v1604 = vld [vmem:[#allocation9] sm:$0xff]
        %v1605 = vld [vmem:[#allocation9 + $0x8] sm:$0xff]
        %v1606 = vld [vmem:[#allocation9 + $0x10] sm:$0xff]
        %v1607 = vld [vmem:[#allocation9 + $0x18] sm:$0xff]
        %v1608 = vld [vmem:[#allocation9 + $0x20] sm:$0xff]
        %v1609 = vld [vmem:[#allocation9 + $0x28] sm:$0xff]
        %v1610 = vld [vmem:[#allocation9 + $0x30] sm:$0xff]
        %v1611 = vld [vmem:[#allocation9 + $0x38] sm:$0xff]
        %v1612 = vld [vmem:[#allocation9 + $0x40] sm:$0xff]
        %v1613 = vld [vmem:[#allocation9 + $0x48] sm:$0xff]
        %v1614 = vld [vmem:[#allocation9 + $0x50] sm:$0xff]
        %v1615 = vld [vmem:[#allocation9 + $0x58] sm:$0xff]
        %v1616 = vld [vmem:[#allocation9 + $0x60] sm:$0xff]
        %v1617 = vld [vmem:[#allocation9 + $0x68] sm:$0xff]
        %v1618 = vld [vmem:[#allocation9 + $0x70] sm:$0xff]
        %v1619 = vld [vmem:[#allocation9 + $0x78] sm:$0xff]
        %v1620 = vld [vmem:[#allocation9 + $0x80] sm:$0xff]
        %v1621 = vld [vmem:[#allocation9 + $0x88] sm:$0xff]
        %v1622 = vld [vmem:[#allocation9 + $0x90] sm:$0xff]
        %v1623 = vld [vmem:[#allocation9 + $0x98] sm:$0xff]
        %v1624 = vld [vmem:[#allocation9 + $0xa0] sm:$0xff]
        %v1625 = vld [vmem:[#allocation9 + $0xa8] sm:$0xff]
        %v1626 = vld [vmem:[#allocation9 + $0xb0] sm:$0xff]
        %v1627 = vld [vmem:[#allocation9 + $0xb8] sm:$0xff]
        %v1628 = vld [vmem:[#allocation9 + $0xc0] sm:$0xff]
        %v1629 = vld [vmem:[#allocation9 + $0xc8] sm:$0xff]
        %v1630 = vld [vmem:[#allocation9 + $0xd0] sm:$0xff]
        %v1631 = vld [vmem:[#allocation9 + $0xd8] sm:$0xff]
        %v1632 = vld [vmem:[#allocation9 + $0xe0] sm:$0xff]
        %v1633 = vld [vmem:[#allocation9 + $0xe8] sm:$0xff]
        %v1634 = vld [vmem:[#allocation9 + $0xf0] sm:$0xff]
        %v1635 = vld [vmem:[#allocation9 + $0xf8] sm:$0xff]
        %v1668 = vunpack.c.l.b16 %v1604
        %v1669 = vunpack.c.h.b16 %v1604
        %v1670 = vunpack.c.l.b16 %v1605
        %v1671 = vunpack.c.h.b16 %v1605
        %v1672 = vunpack.c.l.b16 %v1606
        %v1673 = vunpack.c.h.b16 %v1606
        %v1674 = vunpack.c.l.b16 %v1607
        %v1675 = vunpack.c.h.b16 %v1607
        %v1676 = vunpack.c.l.b16 %v1608
        %v1677 = vunpack.c.h.b16 %v1608
        %v1678 = vunpack.c.l.b16 %v1609
        %v1679 = vunpack.c.h.b16 %v1609
        %v1680 = vunpack.c.l.b16 %v1610
        %v1681 = vunpack.c.h.b16 %v1610
        %v1682 = vunpack.c.l.b16 %v1611
        %v1683 = vunpack.c.h.b16 %v1611
        %v1684 = vunpack.c.l.b16 %v1612
        %v1685 = vunpack.c.h.b16 %v1612
        %v1686 = vunpack.c.l.b16 %v1613
        %v1687 = vunpack.c.h.b16 %v1613
        %v1688 = vunpack.c.l.b16 %v1614
        %v1689 = vunpack.c.h.b16 %v1614
        %v1690 = vunpack.c.l.b16 %v1615
        %v1691 = vunpack.c.h.b16 %v1615
        %v1692 = vunpack.c.l.b16 %v1616
        %v1693 = vunpack.c.h.b16 %v1616
        %v1694 = vunpack.c.l.b16 %v1617
        %v1695 = vunpack.c.h.b16 %v1617
        %v1696 = vunpack.c.l.b16 %v1618
        %v1697 = vunpack.c.h.b16 %v1618
        %v1698 = vunpack.c.l.b16 %v1619
        %v1699 = vunpack.c.h.b16 %v1619
        %v1700 = vunpack.c.l.b16 %v1620
        %v1701 = vunpack.c.h.b16 %v1620
        %v1702 = vunpack.c.l.b16 %v1621
        %v1703 = vunpack.c.h.b16 %v1621
        %v1704 = vunpack.c.l.b16 %v1622
        %v1705 = vunpack.c.h.b16 %v1622
        %v1706 = vunpack.c.l.b16 %v1623
        %v1707 = vunpack.c.h.b16 %v1623
        %v1708 = vunpack.c.l.b16 %v1624
        %v1709 = vunpack.c.h.b16 %v1624
        %v1710 = vunpack.c.l.b16 %v1625
        %v1711 = vunpack.c.h.b16 %v1625
        %v1712 = vunpack.c.l.b16 %v1626
        %v1713 = vunpack.c.h.b16 %v1626
        %v1714 = vunpack.c.l.b16 %v1627
        %v1715 = vunpack.c.h.b16 %v1627
        %v1716 = vunpack.c.l.b16 %v1628
        %v1717 = vunpack.c.h.b16 %v1628
        %v1718 = vunpack.c.l.b16 %v1629
        %v1719 = vunpack.c.h.b16 %v1629
        %v1720 = vunpack.c.l.b16 %v1630
        %v1721 = vunpack.c.h.b16 %v1630
        %v1722 = vunpack.c.l.b16 %v1631
        %v1723 = vunpack.c.h.b16 %v1631
        %v1724 = vunpack.c.l.b16 %v1632
        %v1725 = vunpack.c.h.b16 %v1632
        %v1726 = vunpack.c.l.b16 %v1633
        %v1727 = vunpack.c.h.b16 %v1633
        %v1728 = vunpack.c.l.b16 %v1634
        %v1729 = vunpack.c.h.b16 %v1634
        %v1730 = vunpack.c.l.b16 %v1635
        %v1731 = vunpack.c.h.b16 %v1635
        %v1732 = vpack.c.b16 %v1672, %v1668
        %v1733 = vpack.c.b16 %v1673, %v1669
        %v1734 = vpack.c.b16 %v1674, %v1670
        %v1735 = vpack.c.b16 %v1675, %v1671
        %v1736 = vpack.c.b16 %v1680, %v1676
        %v1737 = vpack.c.b16 %v1681, %v1677
        %v1738 = vpack.c.b16 %v1682, %v1678
        %v1739 = vpack.c.b16 %v1683, %v1679
        %v1740 = vpack.c.b16 %v1688, %v1684
        %v1741 = vpack.c.b16 %v1689, %v1685
        %v1742 = vpack.c.b16 %v1690, %v1686
        %v1743 = vpack.c.b16 %v1691, %v1687
        %v1744 = vpack.c.b16 %v1696, %v1692
        %v1745 = vpack.c.b16 %v1697, %v1693
        %v1746 = vpack.c.b16 %v1698, %v1694
        %v1747 = vpack.c.b16 %v1699, %v1695
        %v1748 = vpack.c.b16 %v1704, %v1700
        %v1749 = vpack.c.b16 %v1705, %v1701
        %v1750 = vpack.c.b16 %v1706, %v1702
        %v1751 = vpack.c.b16 %v1707, %v1703
        %v1752 = vpack.c.b16 %v1712, %v1708
        %v1753 = vpack.c.b16 %v1713, %v1709
        %v1754 = vpack.c.b16 %v1714, %v1710
        %v1755 = vpack.c.b16 %v1715, %v1711
        %v1756 = vpack.c.b16 %v1720, %v1716
        %v1757 = vpack.c.b16 %v1721, %v1717
        %v1758 = vpack.c.b16 %v1722, %v1718
        %v1759 = vpack.c.b16 %v1723, %v1719
        %v1760 = vpack.c.b16 %v1728, %v1724
        %v1761 = vpack.c.b16 %v1729, %v1725
        %v1762 = vpack.c.b16 %v1730, %v1726
        %v1763 = vpack.c.b16 %v1731, %v1727
        %1796 = vmatprep.subr.bf16.mxu0 %v1733
        %1797 = vmatpush1.bf16.msra.mxu0 %v1732
        %1798 = vmatprep.subr.bf16.mxu0 %v1737
        %1799 = vmatpush1.bf16.msra.mxu0 %v1736
        %1800 = vmatprep.subr.bf16.mxu0 %v1741
        %1801 = vmatpush1.bf16.msra.mxu0 %v1740
        %1802 = vmatprep.subr.bf16.mxu0 %v1745
        %1803 = vmatpush1.bf16.msra.mxu0 %v1744
        %1804 = vmatprep.subr.bf16.mxu0 %v1749
        %1805 = vmatpush1.bf16.msra.mxu0 %v1748
        %1806 = vmatprep.subr.bf16.mxu0 %v1753
        %1807 = vmatpush1.bf16.msra.mxu0 %v1752
        %1808 = vmatprep.subr.bf16.mxu0 %v1757
        %1809 = vmatpush1.bf16.msra.mxu0 %v1756
        %1810 = vmatprep.subr.bf16.mxu0 %v1761
        %1811 = vmatpush1.bf16.msra.mxu0 %v1760
        %1812 = vmatprep.subr.bf16.mxu0 0
        %1813 = vmatpush1.bf16.msra.mxu0 0
        %1814 = vmatprep.subr.bf16.mxu0 0
        %1815 = vmatpush1.bf16.msra.mxu0 0
        %1816 = vmatprep.subr.bf16.mxu0 0
        %1817 = vmatpush1.bf16.msra.mxu0 0
        %1818 = vmatprep.subr.bf16.mxu0 0
        %1819 = vmatpush1.bf16.msra.mxu0 0
        %1820 = vmatprep.subr.bf16.mxu0 0
        %1821 = vmatpush1.bf16.msra.mxu0 0
        %1822 = vmatprep.subr.bf16.mxu0 0
        %1823 = vmatpush1.bf16.msra.mxu0 0
        %1824 = vmatprep.subr.bf16.mxu0 0
        %1825 = vmatpush1.bf16.msra.mxu0 0
        %1826 = vmatprep.subr.bf16.mxu0 0
        %1827 = vmatpush1.bf16.msra.mxu0 0
        %1828 = vmatprep.mubr.bf16.mxu0 0
        %1829 = vmatmul.mubr.bf16.gmra.mrb[0].mxu0 %v1603
        %v1830 = vpop.f32.mrb[0].mxu0
        %v1831 = vadd.f32 0.0, %v1830
        %v1832 = vpop.f32.mrb[0].mxu0
        %v1833 = vadd.f32 0.0, %v1832
        %v1834 = vpop.f32.mrb[0].mxu0
        %v1835 = vpop.f32.mrb[0].mxu0
        %1836 = vdwg.mxu0
        %1837 = vmatprep.subr.bf16.mxu0 %v1735
        %1838 = vmatpush1.bf16.msra.mxu0 %v1734
        %1839 = vmatprep.subr.bf16.mxu0 %v1739
        %1840 = vmatpush1.bf16.msra.mxu0 %v1738
        %1841 = vmatprep.subr.bf16.mxu0 %v1743
        %1842 = vmatpush1.bf16.msra.mxu0 %v1742
        %1843 = vmatprep.subr.bf16.mxu0 %v1747
        %1844 = vmatpush1.bf16.msra.mxu0 %v1746
        %1845 = vmatprep.subr.bf16.mxu0 %v1751
        %1846 = vmatpush1.bf16.msra.mxu0 %v1750
        %1847 = vmatprep.subr.bf16.mxu0 %v1755
        %1848 = vmatpush1.bf16.msra.mxu0 %v1754
        %1849 = vmatprep.subr.bf16.mxu0 %v1759
        %1850 = vmatpush1.bf16.msra.mxu0 %v1758
        %1851 = vmatprep.subr.bf16.mxu0 %v1763
        %1852 = vmatpush1.bf16.msra.mxu0 %v1762
        %1853 = vmatprep.subr.bf16.mxu0 0
        %1854 = vmatpush1.bf16.msra.mxu0 0
        %1855 = vmatprep.subr.bf16.mxu0 0
        %1856 = vmatpush1.bf16.msra.mxu0 0
        %1857 = vmatprep.subr.bf16.mxu0 0
        %1858 = vmatpush1.bf16.msra.mxu0 0
        %1859 = vmatprep.subr.bf16.mxu0 0
        %1860 = vmatpush1.bf16.msra.mxu0 0
        %1861 = vmatprep.subr.bf16.mxu0 0
        %1862 = vmatpush1.bf16.msra.mxu0 0
        %1863 = vmatprep.subr.bf16.mxu0 0
        %1864 = vmatpush1.bf16.msra.mxu0 0
        %1865 = vmatprep.subr.bf16.mxu0 0
        %1866 = vmatpush1.bf16.msra.mxu0 0
        %1867 = vmatprep.subr.bf16.mxu0 0
        %1868 = vmatpush1.bf16.msra.mxu0 0
        %1869 = vmatprep.mubr.bf16.mxu0 0
        %1870 = vmatmul.mubr.bf16.gmra.mrb[0].mxu0 %v1603
        %v1871 = vpop.f32.mrb[0].mxu0
        %v1872 = vadd.f32 0.0, %v1871
        %v1873 = vpop.f32.mrb[0].mxu0
        %v1874 = vadd.f32 0.0, %v1873
        %v1875 = vpop.f32.mrb[0].mxu0
        %v1876 = vpop.f32.mrb[0].mxu0
        %1877 = vdwg.mxu0
        %v1878 = vadd.f32 %v1599, %v1831
        %v1879 = vadd.f32 %v1600, %v1833
        %v1880 = vadd.f32 %v1601, %v1872
        %v1881 = vadd.f32 %v1602, %v1874
        %v1882 = vxor.u32 %v1878, 2147483648
        %v1883 = vxor.u32 %v1879, 2147483648
        %v1884 = vxor.u32 %v1880, 2147483648
        %v1885 = vmul.f32 %v1882, 1.442695
        %v1886 = vpow.pop %v1885
        %v1887 = vmul.f32 %v1883, 1.442695
        %v1888 = vpow.pop %v1887
        %v1889 = vmul.f32 %v1884, 1.442695
        %v1890 = vpow.pop %v1889
        %v1891 = vadd.f32 %v1886, 1.0
        %v1892 = vadd.f32 %v1888, 1.0
        %v1893 = vadd.f32 %v1890, 1.0
        %v1894 = vrcp.pop %v1891
        %v1895 = vmul.f32 1.0, %v1894
        %v1896 = vrcp.pop %v1892
        %v1897 = vmul.f32 1.0, %v1896
        %v1898 = vrcp.pop %v1893
        %v1899 = vmul.f32 1.0, %v1898
        %v1900 = vtanh.pop %v1881
        %v1901 = vmul.f32 %v1897, %v1595
        %v1902 = vmul.f32 %v1895, %v1900
        %v1903 = vadd.f32 %v1901, %v1902
        %v1904 = vtanh.pop %v1903
        %v1905 = vmul.f32 %v1899, %v1904
        %1906 = vst [vmem:[#allocation3 + $0x18] sm:$0xff] %v1905
        %v1907 = vld [vmem:[#allocation2 + $0x80] sm:$0xff]
        %v1908 = vld [vmem:[#allocation2 + $0x88] sm:$0xff]
        %v1909 = vld [vmem:[#allocation2 + $0x90] sm:$0xff]
        %v1910 = vld [vmem:[#allocation2 + $0x98] sm:$0xff]
        %v1911 = vpack.c.bf16 %v1905, %v1905
        %v1912 = vld [vmem:[#allocation9] sm:$0xff]
        %v1913 = vld [vmem:[#allocation9 + $0x8] sm:$0xff]
        %v1914 = vld [vmem:[#allocation9 + $0x10] sm:$0xff]
        %v1915 = vld [vmem:[#allocation9 + $0x18] sm:$0xff]
        %v1916 = vld [vmem:[#allocation9 + $0x20] sm:$0xff]
        %v1917 = vld [vmem:[#allocation9 + $0x28] sm:$0xff]
        %v1918 = vld [vmem:[#allocation9 + $0x30] sm:$0xff]
        %v1919 = vld [vmem:[#allocation9 + $0x38] sm:$0xff]
        %v1920 = vld [vmem:[#allocation9 + $0x40] sm:$0xff]
        %v1921 = vld [vmem:[#allocation9 + $0x48] sm:$0xff]
        %v1922 = vld [vmem:[#allocation9 + $0x50] sm:$0xff]
        %v1923 = vld [vmem:[#allocation9 + $0x58] sm:$0xff]
        %v1924 = vld [vmem:[#allocation9 + $0x60] sm:$0xff]
        %v1925 = vld [vmem:[#allocation9 + $0x68] sm:$0xff]
        %v1926 = vld [vmem:[#allocation9 + $0x70] sm:$0xff]
        %v1927 = vld [vmem:[#allocation9 + $0x78] sm:$0xff]
        %v1928 = vld [vmem:[#allocation9 + $0x80] sm:$0xff]
        %v1929 = vld [vmem:[#allocation9 + $0x88] sm:$0xff]
        %v1930 = vld [vmem:[#allocation9 + $0x90] sm:$0xff]
        %v1931 = vld [vmem:[#allocation9 + $0x98] sm:$0xff]
        %v1932 = vld [vmem:[#allocation9 + $0xa0] sm:$0xff]
        %v1933 = vld [vmem:[#allocation9 + $0xa8] sm:$0xff]
        %v1934 = vld [vmem:[#allocation9 + $0xb0] sm:$0xff]
        %v1935 = vld [vmem:[#allocation9 + $0xb8] sm:$0xff]
        %v1936 = vld [vmem:[#allocation9 + $0xc0] sm:$0xff]
        %v1937 = vld [vmem:[#allocation9 + $0xc8] sm:$0xff]
        %v1938 = vld [vmem:[#allocation9 + $0xd0] sm:$0xff]
        %v1939 = vld [vmem:[#allocation9 + $0xd8] sm:$0xff]
        %v1940 = vld [vmem:[#allocation9 + $0xe0] sm:$0xff]
        %v1941 = vld [vmem:[#allocation9 + $0xe8] sm:$0xff]
        %v1942 = vld [vmem:[#allocation9 + $0xf0] sm:$0xff]
        %v1943 = vld [vmem:[#allocation9 + $0xf8] sm:$0xff]
        %v1976 = vunpack.c.l.b16 %v1912
        %v1977 = vunpack.c.h.b16 %v1912
        %v1978 = vunpack.c.l.b16 %v1913
        %v1979 = vunpack.c.h.b16 %v1913
        %v1980 = vunpack.c.l.b16 %v1914
        %v1981 = vunpack.c.h.b16 %v1914
        %v1982 = vunpack.c.l.b16 %v1915
        %v1983 = vunpack.c.h.b16 %v1915
        %v1984 = vunpack.c.l.b16 %v1916
        %v1985 = vunpack.c.h.b16 %v1916
        %v1986 = vunpack.c.l.b16 %v1917
        %v1987 = vunpack.c.h.b16 %v1917
        %v1988 = vunpack.c.l.b16 %v1918
        %v1989 = vunpack.c.h.b16 %v1918
        %v1990 = vunpack.c.l.b16 %v1919
        %v1991 = vunpack.c.h.b16 %v1919
        %v1992 = vunpack.c.l.b16 %v1920
        %v1993 = vunpack.c.h.b16 %v1920
        %v1994 = vunpack.c.l.b16 %v1921
        %v1995 = vunpack.c.h.b16 %v1921
        %v1996 = vunpack.c.l.b16 %v1922
        %v1997 = vunpack.c.h.b16 %v1922
        %v1998 = vunpack.c.l.b16 %v1923
        %v1999 = vunpack.c.h.b16 %v1923
        %v2000 = vunpack.c.l.b16 %v1924
        %v2001 = vunpack.c.h.b16 %v1924
        %v2002 = vunpack.c.l.b16 %v1925
        %v2003 = vunpack.c.h.b16 %v1925
        %v2004 = vunpack.c.l.b16 %v1926
        %v2005 = vunpack.c.h.b16 %v1926
        %v2006 = vunpack.c.l.b16 %v1927
        %v2007 = vunpack.c.h.b16 %v1927
        %v2008 = vunpack.c.l.b16 %v1928
        %v2009 = vunpack.c.h.b16 %v1928
        %v2010 = vunpack.c.l.b16 %v1929
        %v2011 = vunpack.c.h.b16 %v1929
        %v2012 = vunpack.c.l.b16 %v1930
        %v2013 = vunpack.c.h.b16 %v1930
        %v2014 = vunpack.c.l.b16 %v1931
        %v2015 = vunpack.c.h.b16 %v1931
        %v2016 = vunpack.c.l.b16 %v1932
        %v2017 = vunpack.c.h.b16 %v1932
        %v2018 = vunpack.c.l.b16 %v1933
        %v2019 = vunpack.c.h.b16 %v1933
        %v2020 = vunpack.c.l.b16 %v1934
        %v2021 = vunpack.c.h.b16 %v1934
        %v2022 = vunpack.c.l.b16 %v1935
        %v2023 = vunpack.c.h.b16 %v1935
        %v2024 = vunpack.c.l.b16 %v1936
        %v2025 = vunpack.c.h.b16 %v1936
        %v2026 = vunpack.c.l.b16 %v1937
        %v2027 = vunpack.c.h.b16 %v1937
        %v2028 = vunpack.c.l.b16 %v1938
        %v2029 = vunpack.c.h.b16 %v1938
        %v2030 = vunpack.c.l.b16 %v1939
        %v2031 = vunpack.c.h.b16 %v1939
        %v2032 = vunpack.c.l.b16 %v1940
        %v2033 = vunpack.c.h.b16 %v1940
        %v2034 = vunpack.c.l.b16 %v1941
        %v2035 = vunpack.c.h.b16 %v1941
        %v2036 = vunpack.c.l.b16 %v1942
        %v2037 = vunpack.c.h.b16 %v1942
        %v2038 = vunpack.c.l.b16 %v1943
        %v2039 = vunpack.c.h.b16 %v1943
        %v2040 = vpack.c.b16 %v1980, %v1976
        %v2041 = vpack.c.b16 %v1981, %v1977
        %v2042 = vpack.c.b16 %v1982, %v1978
        %v2043 = vpack.c.b16 %v1983, %v1979
        %v2044 = vpack.c.b16 %v1988, %v1984
        %v2045 = vpack.c.b16 %v1989, %v1985
        %v2046 = vpack.c.b16 %v1990, %v1986
        %v2047 = vpack.c.b16 %v1991, %v1987
        %v2048 = vpack.c.b16 %v1996, %v1992
        %v2049 = vpack.c.b16 %v1997, %v1993
        %v2050 = vpack.c.b16 %v1998, %v1994
        %v2051 = vpack.c.b16 %v1999, %v1995
        %v2052 = vpack.c.b16 %v2004, %v2000
        %v2053 = vpack.c.b16 %v2005, %v2001
        %v2054 = vpack.c.b16 %v2006, %v2002
        %v2055 = vpack.c.b16 %v2007, %v2003
        %v2056 = vpack.c.b16 %v2012, %v2008
        %v2057 = vpack.c.b16 %v2013, %v2009
        %v2058 = vpack.c.b16 %v2014, %v2010
        %v2059 = vpack.c.b16 %v2015, %v2011
        %v2060 = vpack.c.b16 %v2020, %v2016
        %v2061 = vpack.c.b16 %v2021, %v2017
        %v2062 = vpack.c.b16 %v2022, %v2018
        %v2063 = vpack.c.b16 %v2023, %v2019
        %v2064 = vpack.c.b16 %v2028, %v2024
        %v2065 = vpack.c.b16 %v2029, %v2025
        %v2066 = vpack.c.b16 %v2030, %v2026
        %v2067 = vpack.c.b16 %v2031, %v2027
        %v2068 = vpack.c.b16 %v2036, %v2032
        %v2069 = vpack.c.b16 %v2037, %v2033
        %v2070 = vpack.c.b16 %v2038, %v2034
        %v2071 = vpack.c.b16 %v2039, %v2035
        %2104 = vmatprep.subr.bf16.mxu0 %v2041
        %2105 = vmatpush1.bf16.msra.mxu0 %v2040
        %2106 = vmatprep.subr.bf16.mxu0 %v2045
        %2107 = vmatpush1.bf16.msra.mxu0 %v2044
        %2108 = vmatprep.subr.bf16.mxu0 %v2049
        %2109 = vmatpush1.bf16.msra.mxu0 %v2048
        %2110 = vmatprep.subr.bf16.mxu0 %v2053
        %2111 = vmatpush1.bf16.msra.mxu0 %v2052
        %2112 = vmatprep.subr.bf16.mxu0 %v2057
        %2113 = vmatpush1.bf16.msra.mxu0 %v2056
        %2114 = vmatprep.subr.bf16.mxu0 %v2061
        %2115 = vmatpush1.bf16.msra.mxu0 %v2060
        %2116 = vmatprep.subr.bf16.mxu0 %v2065
        %2117 = vmatpush1.bf16.msra.mxu0 %v2064
        %2118 = vmatprep.subr.bf16.mxu0 %v2069
        %2119 = vmatpush1.bf16.msra.mxu0 %v2068
        %2120 = vmatprep.subr.bf16.mxu0 0
        %2121 = vmatpush1.bf16.msra.mxu0 0
        %2122 = vmatprep.subr.bf16.mxu0 0
        %2123 = vmatpush1.bf16.msra.mxu0 0
        %2124 = vmatprep.subr.bf16.mxu0 0
        %2125 = vmatpush1.bf16.msra.mxu0 0
        %2126 = vmatprep.subr.bf16.mxu0 0
        %2127 = vmatpush1.bf16.msra.mxu0 0
        %2128 = vmatprep.subr.bf16.mxu0 0
        %2129 = vmatpush1.bf16.msra.mxu0 0
        %2130 = vmatprep.subr.bf16.mxu0 0
        %2131 = vmatpush1.bf16.msra.mxu0 0
        %2132 = vmatprep.subr.bf16.mxu0 0
        %2133 = vmatpush1.bf16.msra.mxu0 0
        %2134 = vmatprep.subr.bf16.mxu0 0
        %2135 = vmatpush1.bf16.msra.mxu0 0
        %2136 = vmatprep.mubr.bf16.mxu0 0
        %2137 = vmatmul.mubr.bf16.gmra.mrb[0].mxu0 %v1911
        %v2138 = vpop.f32.mrb[0].mxu0
        %v2139 = vadd.f32 0.0, %v2138
        %v2140 = vpop.f32.mrb[0].mxu0
        %v2141 = vadd.f32 0.0, %v2140
        %v2142 = vpop.f32.mrb[0].mxu0
        %v2143 = vpop.f32.mrb[0].mxu0
        %2144 = vdwg.mxu0
        %2145 = vmatprep.subr.bf16.mxu0 %v2043
        %2146 = vmatpush1.bf16.msra.mxu0 %v2042
        %2147 = vmatprep.subr.bf16.mxu0 %v2047
        %2148 = vmatpush1.bf16.msra.mxu0 %v2046
        %2149 = vmatprep.subr.bf16.mxu0 %v2051
        %2150 = vmatpush1.bf16.msra.mxu0 %v2050
        %2151 = vmatprep.subr.bf16.mxu0 %v2055
        %2152 = vmatpush1.bf16.msra.mxu0 %v2054
        %2153 = vmatprep.subr.bf16.mxu0 %v2059
        %2154 = vmatpush1.bf16.msra.mxu0 %v2058
        %2155 = vmatprep.subr.bf16.mxu0 %v2063
        %2156 = vmatpush1.bf16.msra.mxu0 %v2062
        %2157 = vmatprep.subr.bf16.mxu0 %v2067
        %2158 = vmatpush1.bf16.msra.mxu0 %v2066
        %2159 = vmatprep.subr.bf16.mxu0 %v2071
        %2160 = vmatpush1.bf16.msra.mxu0 %v2070
        %2161 = vmatprep.subr.bf16.mxu0 0
        %2162 = vmatpush1.bf16.msra.mxu0 0
        %2163 = vmatprep.subr.bf16.mxu0 0
        %2164 = vmatpush1.bf16.msra.mxu0 0
        %2165 = vmatprep.subr.bf16.mxu0 0
        %2166 = vmatpush1.bf16.msra.mxu0 0
        %2167 = vmatprep.subr.bf16.mxu0 0
        %2168 = vmatpush1.bf16.msra.mxu0 0
        %2169 = vmatprep.subr.bf16.mxu0 0
        %2170 = vmatpush1.bf16.msra.mxu0 0
        %2171 = vmatprep.subr.bf16.mxu0 0
        %2172 = vmatpush1.bf16.msra.mxu0 0
        %2173 = vmatprep.subr.bf16.mxu0 0
        %2174 = vmatpush1.bf16.msra.mxu0 0
        %2175 = vmatprep.subr.bf16.mxu0 0
        %2176 = vmatpush1.bf16.msra.mxu0 0
        %2177 = vmatprep.mubr.bf16.mxu0 0
        %2178 = vmatmul.mubr.bf16.gmra.mrb[0].mxu0 %v1911
        %v2179 = vpop.f32.mrb[0].mxu0
        %v2180 = vadd.f32 0.0, %v2179
        %v2181 = vpop.f32.mrb[0].mxu0
        %v2182 = vadd.f32 0.0, %v2181
        %v2183 = vpop.f32.mrb[0].mxu0
        %v2184 = vpop.f32.mrb[0].mxu0
        %2185 = vdwg.mxu0
        %v2186 = vadd.f32 %v1907, %v2139
        %v2187 = vadd.f32 %v1908, %v2141
        %v2188 = vadd.f32 %v1909, %v2180
        %v2189 = vadd.f32 %v1910, %v2182
        %v2190 = vxor.u32 %v2186, 2147483648
        %v2191 = vxor.u32 %v2187, 2147483648
        %v2192 = vxor.u32 %v2188, 2147483648
        %v2193 = vmul.f32 %v2190, 1.442695
        %v2194 = vpow.pop %v2193
        %v2195 = vmul.f32 %v2191, 1.442695
        %v2196 = vpow.pop %v2195
        %v2197 = vmul.f32 %v2192, 1.442695
        %v2198 = vpow.pop %v2197
        %v2199 = vadd.f32 %v2194, 1.0
        %v2200 = vadd.f32 %v2196, 1.0
        %v2201 = vadd.f32 %v2198, 1.0
        %v2202 = vrcp.pop %v2199
        %v2203 = vmul.f32 1.0, %v2202
        %v2204 = vrcp.pop %v2200
        %v2205 = vmul.f32 1.0, %v2204
        %v2206 = vrcp.pop %v2201
        %v2207 = vmul.f32 1.0, %v2206
        %v2208 = vtanh.pop %v2189
        %v2209 = vmul.f32 %v2205, %v1903
        %v2210 = vmul.f32 %v2203, %v2208
        %v2211 = vadd.f32 %v2209, %v2210
        %v2212 = vtanh.pop %v2211
        %v2213 = vmul.f32 %v2207, %v2212
        %2214 = vst [vmem:[#allocation3 + $0x20] sm:$0xff] %v2213
        %v2215 = vld [vmem:[#allocation2 + $0xa0] sm:$0xff]
        %v2216 = vld [vmem:[#allocation2 + $0xa8] sm:$0xff]
        %v2217 = vld [vmem:[#allocation2 + $0xb0] sm:$0xff]
        %v2218 = vld [vmem:[#allocation2 + $0xb8] sm:$0xff]
        %v2219 = vpack.c.bf16 %v2213, %v2213
        %v2220 = vld [vmem:[#allocation9] sm:$0xff]
        %v2221 = vld [vmem:[#allocation9 + $0x8] sm:$0xff]
        %v2222 = vld [vmem:[#allocation9 + $0x10] sm:$0xff]
        %v2223 = vld [vmem:[#allocation9 + $0x18] sm:$0xff]
        %v2224 = vld [vmem:[#allocation9 + $0x20] sm:$0xff]
        %v2225 = vld [vmem:[#allocation9 + $0x28] sm:$0xff]
        %v2226 = vld [vmem:[#allocation9 + $0x30] sm:$0xff]
        %v2227 = vld [vmem:[#allocation9 + $0x38] sm:$0xff]
        %v2228 = vld [vmem:[#allocation9 + $0x40] sm:$0xff]
        %v2229 = vld [vmem:[#allocation9 + $0x48] sm:$0xff]
        %v2230 = vld [vmem:[#allocation9 + $0x50] sm:$0xff]
        %v2231 = vld [vmem:[#allocation9 + $0x58] sm:$0xff]
        %v2232 = vld [vmem:[#allocation9 + $0x60] sm:$0xff]
        %v2233 = vld [vmem:[#allocation9 + $0x68] sm:$0xff]
        %v2234 = vld [vmem:[#allocation9 + $0x70] sm:$0xff]
        %v2235 = vld [vmem:[#allocation9 + $0x78] sm:$0xff]
        %v2236 = vld [vmem:[#allocation9 + $0x80] sm:$0xff]
        %v2237 = vld [vmem:[#allocation9 + $0x88] sm:$0xff]
        %v2238 = vld [vmem:[#allocation9 + $0x90] sm:$0xff]
        %v2239 = vld [vmem:[#allocation9 + $0x98] sm:$0xff]
        %v2240 = vld [vmem:[#allocation9 + $0xa0] sm:$0xff]
        %v2241 = vld [vmem:[#allocation9 + $0xa8] sm:$0xff]
        %v2242 = vld [vmem:[#allocation9 + $0xb0] sm:$0xff]
        %v2243 = vld [vmem:[#allocation9 + $0xb8] sm:$0xff]
        %v2244 = vld [vmem:[#allocation9 + $0xc0] sm:$0xff]
        %v2245 = vld [vmem:[#allocation9 + $0xc8] sm:$0xff]
        %v2246 = vld [vmem:[#allocation9 + $0xd0] sm:$0xff]
        %v2247 = vld [vmem:[#allocation9 + $0xd8] sm:$0xff]
        %v2248 = vld [vmem:[#allocation9 + $0xe0] sm:$0xff]
        %v2249 = vld [vmem:[#allocation9 + $0xe8] sm:$0xff]
        %v2250 = vld [vmem:[#allocation9 + $0xf0] sm:$0xff]
        %v2251 = vld [vmem:[#allocation9 + $0xf8] sm:$0xff]
        %v2284 = vunpack.c.l.b16 %v2220
        %v2285 = vunpack.c.h.b16 %v2220
        %v2286 = vunpack.c.l.b16 %v2221
        %v2287 = vunpack.c.h.b16 %v2221
        %v2288 = vunpack.c.l.b16 %v2222
        %v2289 = vunpack.c.h.b16 %v2222
        %v2290 = vunpack.c.l.b16 %v2223
        %v2291 = vunpack.c.h.b16 %v2223
        %v2292 = vunpack.c.l.b16 %v2224
        %v2293 = vunpack.c.h.b16 %v2224
        %v2294 = vunpack.c.l.b16 %v2225
        %v2295 = vunpack.c.h.b16 %v2225
        %v2296 = vunpack.c.l.b16 %v2226
        %v2297 = vunpack.c.h.b16 %v2226
        %v2298 = vunpack.c.l.b16 %v2227
        %v2299 = vunpack.c.h.b16 %v2227
        %v2300 = vunpack.c.l.b16 %v2228
        %v2301 = vunpack.c.h.b16 %v2228
        %v2302 = vunpack.c.l.b16 %v2229
        %v2303 = vunpack.c.h.b16 %v2229
        %v2304 = vunpack.c.l.b16 %v2230
        %v2305 = vunpack.c.h.b16 %v2230
        %v2306 = vunpack.c.l.b16 %v2231
        %v2307 = vunpack.c.h.b16 %v2231
        %v2308 = vunpack.c.l.b16 %v2232
        %v2309 = vunpack.c.h.b16 %v2232
        %v2310 = vunpack.c.l.b16 %v2233
        %v2311 = vunpack.c.h.b16 %v2233
        %v2312 = vunpack.c.l.b16 %v2234
        %v2313 = vunpack.c.h.b16 %v2234
        %v2314 = vunpack.c.l.b16 %v2235
        %v2315 = vunpack.c.h.b16 %v2235
        %v2316 = vunpack.c.l.b16 %v2236
        %v2317 = vunpack.c.h.b16 %v2236
        %v2318 = vunpack.c.l.b16 %v2237
        %v2319 = vunpack.c.h.b16 %v2237
        %v2320 = vunpack.c.l.b16 %v2238
        %v2321 = vunpack.c.h.b16 %v2238
        %v2322 = vunpack.c.l.b16 %v2239
        %v2323 = vunpack.c.h.b16 %v2239
        %v2324 = vunpack.c.l.b16 %v2240
        %v2325 = vunpack.c.h.b16 %v2240
        %v2326 = vunpack.c.l.b16 %v2241
        %v2327 = vunpack.c.h.b16 %v2241
        %v2328 = vunpack.c.l.b16 %v2242
        %v2329 = vunpack.c.h.b16 %v2242
        %v2330 = vunpack.c.l.b16 %v2243
        %v2331 = vunpack.c.h.b16 %v2243
        %v2332 = vunpack.c.l.b16 %v2244
        %v2333 = vunpack.c.h.b16 %v2244
        %v2334 = vunpack.c.l.b16 %v2245
        %v2335 = vunpack.c.h.b16 %v2245
        %v2336 = vunpack.c.l.b16 %v2246
        %v2337 = vunpack.c.h.b16 %v2246
        %v2338 = vunpack.c.l.b16 %v2247
        %v2339 = vunpack.c.h.b16 %v2247
        %v2340 = vunpack.c.l.b16 %v2248
        %v2341 = vunpack.c.h.b16 %v2248
        %v2342 = vunpack.c.l.b16 %v2249
        %v2343 = vunpack.c.h.b16 %v2249
        %v2344 = vunpack.c.l.b16 %v2250
        %v2345 = vunpack.c.h.b16 %v2250
        %v2346 = vunpack.c.l.b16 %v2251
        %v2347 = vunpack.c.h.b16 %v2251
        %v2348 = vpack.c.b16 %v2288, %v2284
        %v2349 = vpack.c.b16 %v2289, %v2285
        %v2350 = vpack.c.b16 %v2290, %v2286
        %v2351 = vpack.c.b16 %v2291, %v2287
        %v2352 = vpack.c.b16 %v2296, %v2292
        %v2353 = vpack.c.b16 %v2297, %v2293
        %v2354 = vpack.c.b16 %v2298, %v2294
        %v2355 = vpack.c.b16 %v2299, %v2295
        %v2356 = vpack.c.b16 %v2304, %v2300
        %v2357 = vpack.c.b16 %v2305, %v2301
        %v2358 = vpack.c.b16 %v2306, %v2302
        %v2359 = vpack.c.b16 %v2307, %v2303
        %v2360 = vpack.c.b16 %v2312, %v2308
        %v2361 = vpack.c.b16 %v2313, %v2309
        %v2362 = vpack.c.b16 %v2314, %v2310
        %v2363 = vpack.c.b16 %v2315, %v2311
        %v2364 = vpack.c.b16 %v2320, %v2316
        %v2365 = vpack.c.b16 %v2321, %v2317
        %v2366 = vpack.c.b16 %v2322, %v2318
        %v2367 = vpack.c.b16 %v2323, %v2319
        %v2368 = vpack.c.b16 %v2328, %v2324
        %v2369 = vpack.c.b16 %v2329, %v2325
        %v2370 = vpack.c.b16 %v2330, %v2326
        %v2371 = vpack.c.b16 %v2331, %v2327
        %v2372 = vpack.c.b16 %v2336, %v2332
        %v2373 = vpack.c.b16 %v2337, %v2333
        %v2374 = vpack.c.b16 %v2338, %v2334
        %v2375 = vpack.c.b16 %v2339, %v2335
        %v2376 = vpack.c.b16 %v2344, %v2340
        %v2377 = vpack.c.b16 %v2345, %v2341
        %v2378 = vpack.c.b16 %v2346, %v2342
        %v2379 = vpack.c.b16 %v2347, %v2343
        %2412 = vmatprep.subr.bf16.mxu0 %v2349
        %2413 = vmatpush1.bf16.msra.mxu0 %v2348
        %2414 = vmatprep.subr.bf16.mxu0 %v2353
        %2415 = vmatpush1.bf16.msra.mxu0 %v2352
        %2416 = vmatprep.subr.bf16.mxu0 %v2357
        %2417 = vmatpush1.bf16.msra.mxu0 %v2356
        %2418 = vmatprep.subr.bf16.mxu0 %v2361
        %2419 = vmatpush1.bf16.msra.mxu0 %v2360
        %2420 = vmatprep.subr.bf16.mxu0 %v2365
        %2421 = vmatpush1.bf16.msra.mxu0 %v2364
        %2422 = vmatprep.subr.bf16.mxu0 %v2369
        %2423 = vmatpush1.bf16.msra.mxu0 %v2368
        %2424 = vmatprep.subr.bf16.mxu0 %v2373
        %2425 = vmatpush1.bf16.msra.mxu0 %v2372
        %2426 = vmatprep.subr.bf16.mxu0 %v2377
        %2427 = vmatpush1.bf16.msra.mxu0 %v2376
        %2428 = vmatprep.subr.bf16.mxu0 0
        %2429 = vmatpush1.bf16.msra.mxu0 0
        %2430 = vmatprep.subr.bf16.mxu0 0
        %2431 = vmatpush1.bf16.msra.mxu0 0
        %2432 = vmatprep.subr.bf16.mxu0 0
        %2433 = vmatpush1.bf16.msra.mxu0 0
        %2434 = vmatprep.subr.bf16.mxu0 0
        %2435 = vmatpush1.bf16.msra.mxu0 0
        %2436 = vmatprep.subr.bf16.mxu0 0
        %2437 = vmatpush1.bf16.msra.mxu0 0
        %2438 = vmatprep.subr.bf16.mxu0 0
        %2439 = vmatpush1.bf16.msra.mxu0 0
        %2440 = vmatprep.subr.bf16.mxu0 0
        %2441 = vmatpush1.bf16.msra.mxu0 0
        %2442 = vmatprep.subr.bf16.mxu0 0
        %2443 = vmatpush1.bf16.msra.mxu0 0
        %2444 = vmatprep.mubr.bf16.mxu0 0
        %2445 = vmatmul.mubr.bf16.gmra.mrb[0].mxu0 %v2219
        %v2446 = vpop.f32.mrb[0].mxu0
        %v2447 = vadd.f32 0.0, %v2446
        %v2448 = vpop.f32.mrb[0].mxu0
        %v2449 = vadd.f32 0.0, %v2448
        %v2450 = vpop.f32.mrb[0].mxu0
        %v2451 = vpop.f32.mrb[0].mxu0
        %2452 = vdwg.mxu0
        %2453 = vmatprep.subr.bf16.mxu0 %v2351
        %2454 = vmatpush1.bf16.msra.mxu0 %v2350
        %2455 = vmatprep.subr.bf16.mxu0 %v2355
        %2456 = vmatpush1.bf16.msra.mxu0 %v2354
        %2457 = vmatprep.subr.bf16.mxu0 %v2359
        %2458 = vmatpush1.bf16.msra.mxu0 %v2358
        %2459 = vmatprep.subr.bf16.mxu0 %v2363
        %2460 = vmatpush1.bf16.msra.mxu0 %v2362
        %2461 = vmatprep.subr.bf16.mxu0 %v2367
        %2462 = vmatpush1.bf16.msra.mxu0 %v2366
        %2463 = vmatprep.subr.bf16.mxu0 %v2371
        %2464 = vmatpush1.bf16.msra.mxu0 %v2370
        %2465 = vmatprep.subr.bf16.mxu0 %v2375
        %2466 = vmatpush1.bf16.msra.mxu0 %v2374
        %2467 = vmatprep.subr.bf16.mxu0 %v2379
        %2468 = vmatpush1.bf16.msra.mxu0 %v2378
        %2469 = vmatprep.subr.bf16.mxu0 0
        %2470 = vmatpush1.bf16.msra.mxu0 0
        %2471 = vmatprep.subr.bf16.mxu0 0
        %2472 = vmatpush1.bf16.msra.mxu0 0
        %2473 = vmatprep.subr.bf16.mxu0 0
        %2474 = vmatpush1.bf16.msra.mxu0 0
        %2475 = vmatprep.subr.bf16.mxu0 0
        %2476 = vmatpush1.bf16.msra.mxu0 0
        %2477 = vmatprep.subr.bf16.mxu0 0
        %2478 = vmatpush1.bf16.msra.mxu0 0
        %2479 = vmatprep.subr.bf16.mxu0 0
        %2480 = vmatpush1.bf16.msra.mxu0 0
        %2481 = vmatprep.subr.bf16.mxu0 0
        %2482 = vmatpush1.bf16.msra.mxu0 0
        %2483 = vmatprep.subr.bf16.mxu0 0
        %2484 = vmatpush1.bf16.msra.mxu0 0
        %2485 = vmatprep.mubr.bf16.mxu0 0
        %2486 = vmatmul.mubr.bf16.gmra.mrb[0].mxu0 %v2219
        %v2487 = vpop.f32.mrb[0].mxu0
        %v2488 = vadd.f32 0.0, %v2487
        %v2489 = vpop.f32.mrb[0].mxu0
        %v2490 = vadd.f32 0.0, %v2489
        %v2491 = vpop.f32.mrb[0].mxu0
        %v2492 = vpop.f32.mrb[0].mxu0
        %2493 = vdwg.mxu0
        %v2494 = vadd.f32 %v2215, %v2447
        %v2495 = vadd.f32 %v2216, %v2449
        %v2496 = vadd.f32 %v2217, %v2488
        %v2497 = vadd.f32 %v2218, %v2490
        %v2498 = vxor.u32 %v2494, 2147483648
        %v2499 = vxor.u32 %v2495, 2147483648
        %v2500 = vxor.u32 %v2496, 2147483648
        %v2501 = vmul.f32 %v2498, 1.442695
        %v2502 = vpow.pop %v2501
        %v2503 = vmul.f32 %v2499, 1.442695
        %v2504 = vpow.pop %v2503
        %v2505 = vmul.f32 %v2500, 1.442695
        %v2506 = vpow.pop %v2505
        %v2507 = vadd.f32 %v2502, 1.0
        %v2508 = vadd.f32 %v2504, 1.0
        %v2509 = vadd.f32 %v2506, 1.0
        %v2510 = vrcp.pop %v2507
        %v2511 = vmul.f32 1.0, %v2510
        %v2512 = vrcp.pop %v2508
        %v2513 = vmul.f32 1.0, %v2512
        %v2514 = vrcp.pop %v2509
        %v2515 = vmul.f32 1.0, %v2514
        %v2516 = vtanh.pop %v2497
        %v2517 = vmul.f32 %v2513, %v2211
        %v2518 = vmul.f32 %v2511, %v2516
        %v2519 = vadd.f32 %v2517, %v2518
        %v2520 = vtanh.pop %v2519
        %v2521 = vmul.f32 %v2515, %v2520
        %2522 = vst [vmem:[#allocation3 + $0x28] sm:$0xff] %v2521
        %v2523 = vld [vmem:[#allocation2 + $0xc0] sm:$0xff]
        %v2524 = vld [vmem:[#allocation2 + $0xc8] sm:$0xff]
        %v2525 = vld [vmem:[#allocation2 + $0xd0] sm:$0xff]
        %v2526 = vld [vmem:[#allocation2 + $0xd8] sm:$0xff]
        %v2527 = vpack.c.bf16 %v2521, %v2521
        %v2528 = vld [vmem:[#allocation9] sm:$0xff]
        %v2529 = vld [vmem:[#allocation9 + $0x8] sm:$0xff]
        %v2530 = vld [vmem:[#allocation9 + $0x10] sm:$0xff]
        %v2531 = vld [vmem:[#allocation9 + $0x18] sm:$0xff]
        %v2532 = vld [vmem:[#allocation9 + $0x20] sm:$0xff]
        %v2533 = vld [vmem:[#allocation9 + $0x28] sm:$0xff]
        %v2534 = vld [vmem:[#allocation9 + $0x30] sm:$0xff]
        %v2535 = vld [vmem:[#allocation9 + $0x38] sm:$0xff]
        %v2536 = vld [vmem:[#allocation9 + $0x40] sm:$0xff]
        %v2537 = vld [vmem:[#allocation9 + $0x48] sm:$0xff]
        %v2538 = vld [vmem:[#allocation9 + $0x50] sm:$0xff]
        %v2539 = vld [vmem:[#allocation9 + $0x58] sm:$0xff]
        %v2540 = vld [vmem:[#allocation9 + $0x60] sm:$0xff]
        %v2541 = vld [vmem:[#allocation9 + $0x68] sm:$0xff]
        %v2542 = vld [vmem:[#allocation9 + $0x70] sm:$0xff]
        %v2543 = vld [vmem:[#allocation9 + $0x78] sm:$0xff]
        %v2544 = vld [vmem:[#allocation9 + $0x80] sm:$0xff]
        %v2545 = vld [vmem:[#allocation9 + $0x88] sm:$0xff]
        %v2546 = vld [vmem:[#allocation9 + $0x90] sm:$0xff]
        %v2547 = vld [vmem:[#allocation9 + $0x98] sm:$0xff]
        %v2548 = vld [vmem:[#allocation9 + $0xa0] sm:$0xff]
        %v2549 = vld [vmem:[#allocation9 + $0xa8] sm:$0xff]
        %v2550 = vld [vmem:[#allocation9 + $0xb0] sm:$0xff]
        %v2551 = vld [vmem:[#allocation9 + $0xb8] sm:$0xff]
        %v2552 = vld [vmem:[#allocation9 + $0xc0] sm:$0xff]
        %v2553 = vld [vmem:[#allocation9 + $0xc8] sm:$0xff]
        %v2554 = vld [vmem:[#allocation9 + $0xd0] sm:$0xff]
        %v2555 = vld [vmem:[#allocation9 + $0xd8] sm:$0xff]
        %v2556 = vld [vmem:[#allocation9 + $0xe0] sm:$0xff]
        %v2557 = vld [vmem:[#allocation9 + $0xe8] sm:$0xff]
        %v2558 = vld [vmem:[#allocation9 + $0xf0] sm:$0xff]
        %v2559 = vld [vmem:[#allocation9 + $0xf8] sm:$0xff]
        %v2592 = vunpack.c.l.b16 %v2528
        %v2593 = vunpack.c.h.b16 %v2528
        %v2594 = vunpack.c.l.b16 %v2529
        %v2595 = vunpack.c.h.b16 %v2529
        %v2596 = vunpack.c.l.b16 %v2530
        %v2597 = vunpack.c.h.b16 %v2530
        %v2598 = vunpack.c.l.b16 %v2531
        %v2599 = vunpack.c.h.b16 %v2531
        %v2600 = vunpack.c.l.b16 %v2532
        %v2601 = vunpack.c.h.b16 %v2532
        %v2602 = vunpack.c.l.b16 %v2533
        %v2603 = vunpack.c.h.b16 %v2533
        %v2604 = vunpack.c.l.b16 %v2534
        %v2605 = vunpack.c.h.b16 %v2534
        %v2606 = vunpack.c.l.b16 %v2535
        %v2607 = vunpack.c.h.b16 %v2535
        %v2608 = vunpack.c.l.b16 %v2536
        %v2609 = vunpack.c.h.b16 %v2536
        %v2610 = vunpack.c.l.b16 %v2537
        %v2611 = vunpack.c.h.b16 %v2537
        %v2612 = vunpack.c.l.b16 %v2538
        %v2613 = vunpack.c.h.b16 %v2538
        %v2614 = vunpack.c.l.b16 %v2539
        %v2615 = vunpack.c.h.b16 %v2539
        %v2616 = vunpack.c.l.b16 %v2540
        %v2617 = vunpack.c.h.b16 %v2540
        %v2618 = vunpack.c.l.b16 %v2541
        %v2619 = vunpack.c.h.b16 %v2541
        %v2620 = vunpack.c.l.b16 %v2542
        %v2621 = vunpack.c.h.b16 %v2542
        %v2622 = vunpack.c.l.b16 %v2543
        %v2623 = vunpack.c.h.b16 %v2543
        %v2624 = vunpack.c.l.b16 %v2544
        %v2625 = vunpack.c.h.b16 %v2544
        %v2626 = vunpack.c.l.b16 %v2545
        %v2627 = vunpack.c.h.b16 %v2545
        %v2628 = vunpack.c.l.b16 %v2546
        %v2629 = vunpack.c.h.b16 %v2546
        %v2630 = vunpack.c.l.b16 %v2547
        %v2631 = vunpack.c.h.b16 %v2547
        %v2632 = vunpack.c.l.b16 %v2548
        %v2633 = vunpack.c.h.b16 %v2548
        %v2634 = vunpack.c.l.b16 %v2549
        %v2635 = vunpack.c.h.b16 %v2549
        %v2636 = vunpack.c.l.b16 %v2550
        %v2637 = vunpack.c.h.b16 %v2550
        %v2638 = vunpack.c.l.b16 %v2551
        %v2639 = vunpack.c.h.b16 %v2551
        %v2640 = vunpack.c.l.b16 %v2552
        %v2641 = vunpack.c.h.b16 %v2552
        %v2642 = vunpack.c.l.b16 %v2553
        %v2643 = vunpack.c.h.b16 %v2553
        %v2644 = vunpack.c.l.b16 %v2554
        %v2645 = vunpack.c.h.b16 %v2554
        %v2646 = vunpack.c.l.b16 %v2555
        %v2647 = vunpack.c.h.b16 %v2555
        %v2648 = vunpack.c.l.b16 %v2556
        %v2649 = vunpack.c.h.b16 %v2556
        %v2650 = vunpack.c.l.b16 %v2557
        %v2651 = vunpack.c.h.b16 %v2557
        %v2652 = vunpack.c.l.b16 %v2558
        %v2653 = vunpack.c.h.b16 %v2558
        %v2654 = vunpack.c.l.b16 %v2559
        %v2655 = vunpack.c.h.b16 %v2559
        %v2656 = vpack.c.b16 %v2596, %v2592
        %v2657 = vpack.c.b16 %v2597, %v2593
        %v2658 = vpack.c.b16 %v2598, %v2594
        %v2659 = vpack.c.b16 %v2599, %v2595
        %v2660 = vpack.c.b16 %v2604, %v2600
        %v2661 = vpack.c.b16 %v2605, %v2601
        %v2662 = vpack.c.b16 %v2606, %v2602
        %v2663 = vpack.c.b16 %v2607, %v2603
        %v2664 = vpack.c.b16 %v2612, %v2608
        %v2665 = vpack.c.b16 %v2613, %v2609
        %v2666 = vpack.c.b16 %v2614, %v2610
        %v2667 = vpack.c.b16 %v2615, %v2611
        %v2668 = vpack.c.b16 %v2620, %v2616
        %v2669 = vpack.c.b16 %v2621, %v2617
        %v2670 = vpack.c.b16 %v2622, %v2618
        %v2671 = vpack.c.b16 %v2623, %v2619
        %v2672 = vpack.c.b16 %v2628, %v2624
        %v2673 = vpack.c.b16 %v2629, %v2625
        %v2674 = vpack.c.b16 %v2630, %v2626
        %v2675 = vpack.c.b16 %v2631, %v2627
        %v2676 = vpack.c.b16 %v2636, %v2632
        %v2677 = vpack.c.b16 %v2637, %v2633
        %v2678 = vpack.c.b16 %v2638, %v2634
        %v2679 = vpack.c.b16 %v2639, %v2635
        %v2680 = vpack.c.b16 %v2644, %v2640
        %v2681 = vpack.c.b16 %v2645, %v2641
        %v2682 = vpack.c.b16 %v2646, %v2642
        %v2683 = vpack.c.b16 %v2647, %v2643
        %v2684 = vpack.c.b16 %v2652, %v2648
        %v2685 = vpack.c.b16 %v2653, %v2649
        %v2686 = vpack.c.b16 %v2654, %v2650
        %v2687 = vpack.c.b16 %v2655, %v2651
        %2720 = vmatprep.subr.bf16.mxu0 %v2657
        %2721 = vmatpush1.bf16.msra.mxu0 %v2656
        %2722 = vmatprep.subr.bf16.mxu0 %v2661
        %2723 = vmatpush1.bf16.msra.mxu0 %v2660
        %2724 = vmatprep.subr.bf16.mxu0 %v2665
        %2725 = vmatpush1.bf16.msra.mxu0 %v2664
        %2726 = vmatprep.subr.bf16.mxu0 %v2669
        %2727 = vmatpush1.bf16.msra.mxu0 %v2668
        %2728 = vmatprep.subr.bf16.mxu0 %v2673
        %2729 = vmatpush1.bf16.msra.mxu0 %v2672
        %2730 = vmatprep.subr.bf16.mxu0 %v2677
        %2731 = vmatpush1.bf16.msra.mxu0 %v2676
        %2732 = vmatprep.subr.bf16.mxu0 %v2681
        %2733 = vmatpush1.bf16.msra.mxu0 %v2680
        %2734 = vmatprep.subr.bf16.mxu0 %v2685
        %2735 = vmatpush1.bf16.msra.mxu0 %v2684
        %2736 = vmatprep.subr.bf16.mxu0 0
        %2737 = vmatpush1.bf16.msra.mxu0 0
        %2738 = vmatprep.subr.bf16.mxu0 0
        %2739 = vmatpush1.bf16.msra.mxu0 0
        %2740 = vmatprep.subr.bf16.mxu0 0
        %2741 = vmatpush1.bf16.msra.mxu0 0
        %2742 = vmatprep.subr.bf16.mxu0 0
        %2743 = vmatpush1.bf16.msra.mxu0 0
        %2744 = vmatprep.subr.bf16.mxu0 0
        %2745 = vmatpush1.bf16.msra.mxu0 0
        %2746 = vmatprep.subr.bf16.mxu0 0
        %2747 = vmatpush1.bf16.msra.mxu0 0
        %2748 = vmatprep.subr.bf16.mxu0 0
        %2749 = vmatpush1.bf16.msra.mxu0 0
        %2750 = vmatprep.subr.bf16.mxu0 0
        %2751 = vmatpush1.bf16.msra.mxu0 0
        %2752 = vmatprep.mubr.bf16.mxu0 0
        %2753 = vmatmul.mubr.bf16.gmra.mrb[0].mxu0 %v2527
        %v2754 = vpop.f32.mrb[0].mxu0
        %v2755 = vadd.f32 0.0, %v2754
        %v2756 = vpop.f32.mrb[0].mxu0
        %v2757 = vadd.f32 0.0, %v2756
        %v2758 = vpop.f32.mrb[0].mxu0
        %v2759 = vpop.f32.mrb[0].mxu0
        %2760 = vdwg.mxu0
        %2761 = vmatprep.subr.bf16.mxu0 %v2659
        %2762 = vmatpush1.bf16.msra.mxu0 %v2658
        %2763 = vmatprep.subr.bf16.mxu0 %v2663
        %2764 = vmatpush1.bf16.msra.mxu0 %v2662
        %2765 = vmatprep.subr.bf16.mxu0 %v2667
        %2766 = vmatpush1.bf16.msra.mxu0 %v2666
        %2767 = vmatprep.subr.bf16.mxu0 %v2671
        %2768 = vmatpush1.bf16.msra.mxu0 %v2670
        %2769 = vmatprep.subr.bf16.mxu0 %v2675
        %2770 = vmatpush1.bf16.msra.mxu0 %v2674
        %2771 = vmatprep.subr.bf16.mxu0 %v2679
        %2772 = vmatpush1.bf16.msra.mxu0 %v2678
        %2773 = vmatprep.subr.bf16.mxu0 %v2683
        %2774 = vmatpush1.bf16.msra.mxu0 %v2682
        %2775 = vmatprep.subr.bf16.mxu0 %v2687
        %2776 = vmatpush1.bf16.msra.mxu0 %v2686
        %2777 = vmatprep.subr.bf16.mxu0 0
        %2778 = vmatpush1.bf16.msra.mxu0 0
        %2779 = vmatprep.subr.bf16.mxu0 0
        %2780 = vmatpush1.bf16.msra.mxu0 0
        %2781 = vmatprep.subr.bf16.mxu0 0
        %2782 = vmatpush1.bf16.msra.mxu0 0
        %2783 = vmatprep.subr.bf16.mxu0 0
        %2784 = vmatpush1.bf16.msra.mxu0 0
        %2785 = vmatprep.subr.bf16.mxu0 0
        %2786 = vmatpush1.bf16.msra.mxu0 0
        %2787 = vmatprep.subr.bf16.mxu0 0
        %2788 = vmatpush1.bf16.msra.mxu0 0
        %2789 = vmatprep.subr.bf16.mxu0 0
        %2790 = vmatpush1.bf16.msra.mxu0 0
        %2791 = vmatprep.subr.bf16.mxu0 0
        %2792 = vmatpush1.bf16.msra.mxu0 0
        %2793 = vmatprep.mubr.bf16.mxu0 0
        %2794 = vmatmul.mubr.bf16.gmra.mrb[0].mxu0 %v2527
        %v2795 = vpop.f32.mrb[0].mxu0
        %v2796 = vadd.f32 0.0, %v2795
        %v2797 = vpop.f32.mrb[0].mxu0
        %v2798 = vadd.f32 0.0, %v2797
        %v2799 = vpop.f32.mrb[0].mxu0
        %v2800 = vpop.f32.mrb[0].mxu0
        %2801 = vdwg.mxu0
        %v2802 = vadd.f32 %v2523, %v2755
        %v2803 = vadd.f32 %v2524, %v2757
        %v2804 = vadd.f32 %v2525, %v2796
        %v2805 = vadd.f32 %v2526, %v2798
        %v2806 = vxor.u32 %v2802, 2147483648
        %v2807 = vxor.u32 %v2803, 2147483648
        %v2808 = vxor.u32 %v2804, 2147483648
        %v2809 = vmul.f32 %v2806, 1.442695
        %v2810 = vpow.pop %v2809
        %v2811 = vmul.f32 %v2807, 1.442695
        %v2812 = vpow.pop %v2811
        %v2813 = vmul.f32 %v2808, 1.442695
        %v2814 = vpow.pop %v2813
        %v2815 = vadd.f32 %v2810, 1.0
        %v2816 = vadd.f32 %v2812, 1.0
        %v2817 = vadd.f32 %v2814, 1.0
        %v2818 = vrcp.pop %v2815
        %v2819 = vmul.f32 1.0, %v2818
        %v2820 = vrcp.pop %v2816
        %v2821 = vmul.f32 1.0, %v2820
        %v2822 = vrcp.pop %v2817
        %v2823 = vmul.f32 1.0, %v2822
        %v2824 = vtanh.pop %v2805
        %v2825 = vmul.f32 %v2821, %v2519
        %v2826 = vmul.f32 %v2819, %v2824
        %v2827 = vadd.f32 %v2825, %v2826
        %v2828 = vtanh.pop %v2827
        %v2829 = vmul.f32 %v2823, %v2828
        %2830 = vst [vmem:[#allocation3 + $0x30] sm:$0xff] %v2829
        %v2831 = vld [vmem:[#allocation2 + $0xe0] sm:$0xff]
        %v2832 = vld [vmem:[#allocation2 + $0xe8] sm:$0xff]
        %v2833 = vld [vmem:[#allocation2 + $0xf0] sm:$0xff]
        %v2834 = vld [vmem:[#allocation2 + $0xf8] sm:$0xff]
        %v2835 = vpack.c.bf16 %v2829, %v2829
        %v2836 = vld [vmem:[#allocation9] sm:$0xff]
        %v2837 = vld [vmem:[#allocation9 + $0x8] sm:$0xff]
        %v2838 = vld [vmem:[#allocation9 + $0x10] sm:$0xff]
        %v2839 = vld [vmem:[#allocation9 + $0x18] sm:$0xff]
        %v2840 = vld [vmem:[#allocation9 + $0x20] sm:$0xff]
        %v2841 = vld [vmem:[#allocation9 + $0x28] sm:$0xff]
        %v2842 = vld [vmem:[#allocation9 + $0x30] sm:$0xff]
        %v2843 = vld [vmem:[#allocation9 + $0x38] sm:$0xff]
        %v2844 = vld [vmem:[#allocation9 + $0x40] sm:$0xff]
        %v2845 = vld [vmem:[#allocation9 + $0x48] sm:$0xff]
        %v2846 = vld [vmem:[#allocation9 + $0x50] sm:$0xff]
        %v2847 = vld [vmem:[#allocation9 + $0x58] sm:$0xff]
        %v2848 = vld [vmem:[#allocation9 + $0x60] sm:$0xff]
        %v2849 = vld [vmem:[#allocation9 + $0x68] sm:$0xff]
        %v2850 = vld [vmem:[#allocation9 + $0x70] sm:$0xff]
        %v2851 = vld [vmem:[#allocation9 + $0x78] sm:$0xff]
        %v2852 = vld [vmem:[#allocation9 + $0x80] sm:$0xff]
        %v2853 = vld [vmem:[#allocation9 + $0x88] sm:$0xff]
        %v2854 = vld [vmem:[#allocation9 + $0x90] sm:$0xff]
        %v2855 = vld [vmem:[#allocation9 + $0x98] sm:$0xff]
        %v2856 = vld [vmem:[#allocation9 + $0xa0] sm:$0xff]
        %v2857 = vld [vmem:[#allocation9 + $0xa8] sm:$0xff]
        %v2858 = vld [vmem:[#allocation9 + $0xb0] sm:$0xff]
        %v2859 = vld [vmem:[#allocation9 + $0xb8] sm:$0xff]
        %v2860 = vld [vmem:[#allocation9 + $0xc0] sm:$0xff]
        %v2861 = vld [vmem:[#allocation9 + $0xc8] sm:$0xff]
        %v2862 = vld [vmem:[#allocation9 + $0xd0] sm:$0xff]
        %v2863 = vld [vmem:[#allocation9 + $0xd8] sm:$0xff]
        %v2864 = vld [vmem:[#allocation9 + $0xe0] sm:$0xff]
        %v2865 = vld [vmem:[#allocation9 + $0xe8] sm:$0xff]
        %v2866 = vld [vmem:[#allocation9 + $0xf0] sm:$0xff]
        %v2867 = vld [vmem:[#allocation9 + $0xf8] sm:$0xff]
        %v2900 = vunpack.c.l.b16 %v2836
        %v2901 = vunpack.c.h.b16 %v2836
        %v2902 = vunpack.c.l.b16 %v2837
        %v2903 = vunpack.c.h.b16 %v2837
        %v2904 = vunpack.c.l.b16 %v2838
        %v2905 = vunpack.c.h.b16 %v2838
        %v2906 = vunpack.c.l.b16 %v2839
        %v2907 = vunpack.c.h.b16 %v2839
        %v2908 = vunpack.c.l.b16 %v2840
        %v2909 = vunpack.c.h.b16 %v2840
        %v2910 = vunpack.c.l.b16 %v2841
        %v2911 = vunpack.c.h.b16 %v2841
        %v2912 = vunpack.c.l.b16 %v2842
        %v2913 = vunpack.c.h.b16 %v2842
        %v2914 = vunpack.c.l.b16 %v2843
        %v2915 = vunpack.c.h.b16 %v2843
        %v2916 = vunpack.c.l.b16 %v2844
        %v2917 = vunpack.c.h.b16 %v2844
        %v2918 = vunpack.c.l.b16 %v2845
        %v2919 = vunpack.c.h.b16 %v2845
        %v2920 = vunpack.c.l.b16 %v2846
        %v2921 = vunpack.c.h.b16 %v2846
        %v2922 = vunpack.c.l.b16 %v2847
        %v2923 = vunpack.c.h.b16 %v2847
        %v2924 = vunpack.c.l.b16 %v2848
        %v2925 = vunpack.c.h.b16 %v2848
        %v2926 = vunpack.c.l.b16 %v2849
        %v2927 = vunpack.c.h.b16 %v2849
        %v2928 = vunpack.c.l.b16 %v2850
        %v2929 = vunpack.c.h.b16 %v2850
        %v2930 = vunpack.c.l.b16 %v2851
        %v2931 = vunpack.c.h.b16 %v2851
        %v2932 = vunpack.c.l.b16 %v2852
        %v2933 = vunpack.c.h.b16 %v2852
        %v2934 = vunpack.c.l.b16 %v2853
        %v2935 = vunpack.c.h.b16 %v2853
        %v2936 = vunpack.c.l.b16 %v2854
        %v2937 = vunpack.c.h.b16 %v2854
        %v2938 = vunpack.c.l.b16 %v2855
        %v2939 = vunpack.c.h.b16 %v2855
        %v2940 = vunpack.c.l.b16 %v2856
        %v2941 = vunpack.c.h.b16 %v2856
        %v2942 = vunpack.c.l.b16 %v2857
        %v2943 = vunpack.c.h.b16 %v2857
        %v2944 = vunpack.c.l.b16 %v2858
        %v2945 = vunpack.c.h.b16 %v2858
        %v2946 = vunpack.c.l.b16 %v2859
        %v2947 = vunpack.c.h.b16 %v2859
        %v2948 = vunpack.c.l.b16 %v2860
        %v2949 = vunpack.c.h.b16 %v2860
        %v2950 = vunpack.c.l.b16 %v2861
        %v2951 = vunpack.c.h.b16 %v2861
        %v2952 = vunpack.c.l.b16 %v2862
        %v2953 = vunpack.c.h.b16 %v2862
        %v2954 = vunpack.c.l.b16 %v2863
        %v2955 = vunpack.c.h.b16 %v2863
        %v2956 = vunpack.c.l.b16 %v2864
        %v2957 = vunpack.c.h.b16 %v2864
        %v2958 = vunpack.c.l.b16 %v2865
        %v2959 = vunpack.c.h.b16 %v2865
        %v2960 = vunpack.c.l.b16 %v2866
        %v2961 = vunpack.c.h.b16 %v2866
        %v2962 = vunpack.c.l.b16 %v2867
        %v2963 = vunpack.c.h.b16 %v2867
        %v2964 = vpack.c.b16 %v2904, %v2900
        %v2965 = vpack.c.b16 %v2905, %v2901
        %v2966 = vpack.c.b16 %v2906, %v2902
        %v2967 = vpack.c.b16 %v2907, %v2903
        %v2968 = vpack.c.b16 %v2912, %v2908
        %v2969 = vpack.c.b16 %v2913, %v2909
        %v2970 = vpack.c.b16 %v2914, %v2910
        %v2971 = vpack.c.b16 %v2915, %v2911
        %v2972 = vpack.c.b16 %v2920, %v2916
        %v2973 = vpack.c.b16 %v2921, %v2917
        %v2974 = vpack.c.b16 %v2922, %v2918
        %v2975 = vpack.c.b16 %v2923, %v2919
        %v2976 = vpack.c.b16 %v2928, %v2924
        %v2977 = vpack.c.b16 %v2929, %v2925
        %v2978 = vpack.c.b16 %v2930, %v2926
        %v2979 = vpack.c.b16 %v2931, %v2927
        %v2980 = vpack.c.b16 %v2936, %v2932
        %v2981 = vpack.c.b16 %v2937, %v2933
        %v2982 = vpack.c.b16 %v2938, %v2934
        %v2983 = vpack.c.b16 %v2939, %v2935
        %v2984 = vpack.c.b16 %v2944, %v2940
        %v2985 = vpack.c.b16 %v2945, %v2941
        %v2986 = vpack.c.b16 %v2946, %v2942
        %v2987 = vpack.c.b16 %v2947, %v2943
        %v2988 = vpack.c.b16 %v2952, %v2948
        %v2989 = vpack.c.b16 %v2953, %v2949
        %v2990 = vpack.c.b16 %v2954, %v2950
        %v2991 = vpack.c.b16 %v2955, %v2951
        %v2992 = vpack.c.b16 %v2960, %v2956
        %v2993 = vpack.c.b16 %v2961, %v2957
        %v2994 = vpack.c.b16 %v2962, %v2958
        %v2995 = vpack.c.b16 %v2963, %v2959
        %3028 = vmatprep.subr.bf16.mxu0 %v2965
        %3029 = vmatpush1.bf16.msra.mxu0 %v2964
        %3030 = vmatprep.subr.bf16.mxu0 %v2969
        %3031 = vmatpush1.bf16.msra.mxu0 %v2968
        %3032 = vmatprep.subr.bf16.mxu0 %v2973
        %3033 = vmatpush1.bf16.msra.mxu0 %v2972
        %3034 = vmatprep.subr.bf16.mxu0 %v2977
        %3035 = vmatpush1.bf16.msra.mxu0 %v2976
        %3036 = vmatprep.subr.bf16.mxu0 %v2981
        %3037 = vmatpush1.bf16.msra.mxu0 %v2980
        %3038 = vmatprep.subr.bf16.mxu0 %v2985
        %3039 = vmatpush1.bf16.msra.mxu0 %v2984
        %3040 = vmatprep.subr.bf16.mxu0 %v2989
        %3041 = vmatpush1.bf16.msra.mxu0 %v2988
        %3042 = vmatprep.subr.bf16.mxu0 %v2993
        %3043 = vmatpush1.bf16.msra.mxu0 %v2992
        %3044 = vmatprep.subr.bf16.mxu0 0
        %3045 = vmatpush1.bf16.msra.mxu0 0
        %3046 = vmatprep.subr.bf16.mxu0 0
        %3047 = vmatpush1.bf16.msra.mxu0 0
        %3048 = vmatprep.subr.bf16.mxu0 0
        %3049 = vmatpush1.bf16.msra.mxu0 0
        %3050 = vmatprep.subr.bf16.mxu0 0
        %3051 = vmatpush1.bf16.msra.mxu0 0
        %3052 = vmatprep.subr.bf16.mxu0 0
        %3053 = vmatpush1.bf16.msra.mxu0 0
        %3054 = vmatprep.subr.bf16.mxu0 0
        %3055 = vmatpush1.bf16.msra.mxu0 0
        %3056 = vmatprep.subr.bf16.mxu0 0
        %3057 = vmatpush1.bf16.msra.mxu0 0
        %3058 = vmatprep.subr.bf16.mxu0 0
        %3059 = vmatpush1.bf16.msra.mxu0 0
        %3060 = vmatprep.mubr.bf16.mxu0 0
        %3061 = vmatmul.mubr.bf16.gmra.mrb[0].mxu0 %v2835
        %v3062 = vpop.f32.mrb[0].mxu0
        %v3063 = vadd.f32 0.0, %v3062
        %v3064 = vpop.f32.mrb[0].mxu0
        %v3065 = vadd.f32 0.0, %v3064
        %v3066 = vpop.f32.mrb[0].mxu0
        %v3067 = vpop.f32.mrb[0].mxu0
        %3068 = vdwg.mxu0
        %3069 = vmatprep.subr.bf16.mxu0 %v2967
        %3070 = vmatpush1.bf16.msra.mxu0 %v2966
        %3071 = vmatprep.subr.bf16.mxu0 %v2971
        %3072 = vmatpush1.bf16.msra.mxu0 %v2970
        %3073 = vmatprep.subr.bf16.mxu0 %v2975
        %3074 = vmatpush1.bf16.msra.mxu0 %v2974
        %3075 = vmatprep.subr.bf16.mxu0 %v2979
        %3076 = vmatpush1.bf16.msra.mxu0 %v2978
        %3077 = vmatprep.subr.bf16.mxu0 %v2983
        %3078 = vmatpush1.bf16.msra.mxu0 %v2982
        %3079 = vmatprep.subr.bf16.mxu0 %v2987
        %3080 = vmatpush1.bf16.msra.mxu0 %v2986
        %3081 = vmatprep.subr.bf16.mxu0 %v2991
        %3082 = vmatpush1.bf16.msra.mxu0 %v2990
        %3083 = vmatprep.subr.bf16.mxu0 %v2995
        %3084 = vmatpush1.bf16.msra.mxu0 %v2994
        %3085 = vmatprep.subr.bf16.mxu0 0
        %3086 = vmatpush1.bf16.msra.mxu0 0
        %3087 = vmatprep.subr.bf16.mxu0 0
        %3088 = vmatpush1.bf16.msra.mxu0 0
        %3089 = vmatprep.subr.bf16.mxu0 0
        %3090 = vmatpush1.bf16.msra.mxu0 0
        %3091 = vmatprep.subr.bf16.mxu0 0
        %3092 = vmatpush1.bf16.msra.mxu0 0
        %3093 = vmatprep.subr.bf16.mxu0 0
        %3094 = vmatpush1.bf16.msra.mxu0 0
        %3095 = vmatprep.subr.bf16.mxu0 0
        %3096 = vmatpush1.bf16.msra.mxu0 0
        %3097 = vmatprep.subr.bf16.mxu0 0
        %3098 = vmatpush1.bf16.msra.mxu0 0
        %3099 = vmatprep.subr.bf16.mxu0 0
        %3100 = vmatpush1.bf16.msra.mxu0 0
        %3101 = vmatprep.mubr.bf16.mxu0 0
        %3102 = vmatmul.mubr.bf16.gmra.mrb[0].mxu0 %v2835
        %v3103 = vpop.f32.mrb[0].mxu0
        %v3104 = vadd.f32 0.0, %v3103
        %v3105 = vpop.f32.mrb[0].mxu0
        %v3106 = vadd.f32 0.0, %v3105
        %v3107 = vpop.f32.mrb[0].mxu0
        %v3108 = vpop.f32.mrb[0].mxu0
        %3109 = vdwg.mxu0
        %v3110 = vadd.f32 %v2831, %v3063
        %v3111 = vadd.f32 %v2832, %v3065
        %v3112 = vadd.f32 %v2833, %v3104
        %v3113 = vadd.f32 %v2834, %v3106
        %v3114 = vxor.u32 %v3110, 2147483648
        %v3115 = vxor.u32 %v3111, 2147483648
        %v3116 = vxor.u32 %v3112, 2147483648
        %v3117 = vmul.f32 %v3114, 1.442695
        %v3118 = vpow.pop %v3117
        %v3119 = vmul.f32 %v3115, 1.442695
        %v3120 = vpow.pop %v3119
        %v3121 = vmul.f32 %v3116, 1.442695
        %v3122 = vpow.pop %v3121
        %v3123 = vadd.f32 %v3118, 1.0
        %v3124 = vadd.f32 %v3120, 1.0
        %v3125 = vadd.f32 %v3122, 1.0
        %v3126 = vrcp.pop %v3123
        %v3127 = vmul.f32 1.0, %v3126
        %v3128 = vrcp.pop %v3124
        %v3129 = vmul.f32 1.0, %v3128
        %v3130 = vrcp.pop %v3125
        %v3131 = vmul.f32 1.0, %v3130
        %v3132 = vtanh.pop %v3113
        %v3133 = vmul.f32 %v3129, %v2827
        %v3134 = vmul.f32 %v3127, %v3132
        %v3135 = vadd.f32 %v3133, %v3134
        %v3136 = vtanh.pop %v3135
        %v3137 = vmul.f32 %v3131, %v3136
        %3138 = vst [vmem:[#allocation3 + $0x38] sm:$0xff] %v3137
        %v3139 = vld [vmem:[%s4] sm:$0x1]
        %v3140 = vld [vmem:[#allocation4] sm:$0x1]
        %v3141 = vld [vmem:[#allocation3] sm:$0xff]
        %v3143 = vlaneseq
        %v3144 = vshrl.u32 %v3143, 7
        %v3145 = vsub.s32 0, %v3144
        %v3146 = vrot.slane %v3139, %v3145
        %v3148 = vmul.f32 %v3141, %v3146
        %3149 = vadd.xlane.f32.xlu0 %v3148
        %v3150 = vpop.xlane.xlu0 %3149
        %v3152 = vlaneseq
        %v3153 = vshrl.u32 %v3152, 7
        %v3154 = vsub.s32 0, %v3153
        %v3155 = vrot.slane %v3140, %v3154
        %v3157 = vadd.f32 %v3150, %v3155
        %v3158 = vld [vmem:[#allocation3 + $0x8] sm:$0xff]
        %v3159 = vmul.f32 %v3158, %v3146
        %3160 = vadd.xlane.f32.xlu0 %v3159
        %v3161 = vpop.xlane.xlu0 %3160
        %v3162 = vadd.f32 %v3161, %v3155
        %v3163 = vld [vmem:[#allocation3 + $0x10] sm:$0xff]
        %v3164 = vmul.f32 %v3163, %v3146
        %3165 = vadd.xlane.f32.xlu0 %v3164
        %v3166 = vpop.xlane.xlu0 %3165
        %v3167 = vadd.f32 %v3166, %v3155
        %v3168 = vld [vmem:[#allocation3 + $0x18] sm:$0xff]
        %v3169 = vmul.f32 %v3168, %v3146
        %3170 = vadd.xlane.f32.xlu0 %v3169
        %v3171 = vpop.xlane.xlu0 %3170
        %v3172 = vadd.f32 %v3171, %v3155
        %v3173 = vld [vmem:[#allocation3 + $0x20] sm:$0xff]
        %v3174 = vmul.f32 %v3173, %v3146
        %3175 = vadd.xlane.f32.xlu0 %v3174
        %v3176 = vpop.xlane.xlu0 %3175
        %v3177 = vadd.f32 %v3176, %v3155
        %v3178 = vld [vmem:[#allocation3 + $0x28] sm:$0xff]
        %v3179 = vmul.f32 %v3178, %v3146
        %3180 = vadd.xlane.f32.xlu0 %v3179
        %v3181 = vpop.xlane.xlu0 %3180
        %v3182 = vadd.f32 %v3181, %v3155
        %v3183 = vld [vmem:[#allocation3 + $0x30] sm:$0xff]
        %v3184 = vmul.f32 %v3183, %v3146
        %3185 = vadd.xlane.f32.xlu0 %v3184
        %v3186 = vpop.xlane.xlu0 %3185
        %v3187 = vadd.f32 %v3186, %v3155
        %v3188 = vld [vmem:[#allocation3 + $0x38] sm:$0xff]
        %v3189 = vmul.f32 %v3188, %v3146
        %3190 = vadd.xlane.f32.xlu0 %v3189
        %v3191 = vpop.xlane.xlu0 %3190
        %v3192 = vadd.f32 %v3191, %v3155
        %v3193 = vmax.f32 %v3157, %v3162
        %v3194 = vmax.f32 %v3193, %v3167
        %v3195 = vmax.f32 %v3194, %v3172
        %v3196 = vmax.f32 %v3195, %v3177
        %v3197 = vmax.f32 %v3196, %v3182
        %v3198 = vmax.f32 %v3197, %v3187
        %v3199 = vmax.f32 %v3198, %v3192
        %v3200 = vsub.f32 %v3157, %v3199
        %v3201 = vmul.f32 %v3200, 1.442695
        %v3202 = vpow.pop %v3201
        %v3203 = vsub.f32 %v3162, %v3199
        %v3204 = vmul.f32 %v3203, 1.442695
        %v3205 = vpow.pop %v3204
        %v3206 = vsub.f32 %v3167, %v3199
        %v3207 = vmul.f32 %v3206, 1.442695
        %v3208 = vpow.pop %v3207
        %v3209 = vsub.f32 %v3172, %v3199
        %v3210 = vmul.f32 %v3209, 1.442695
        %v3211 = vpow.pop %v3210
        %v3212 = vsub.f32 %v3177, %v3199
        %v3213 = vmul.f32 %v3212, 1.442695
        %v3214 = vpow.pop %v3213
        %v3215 = vsub.f32 %v3182, %v3199
        %v3216 = vmul.f32 %v3215, 1.442695
        %v3217 = vpow.pop %v3216
        %v3218 = vsub.f32 %v3187, %v3199
        %v3219 = vmul.f32 %v3218, 1.442695
        %v3220 = vpow.pop %v3219
        %v3221 = vsub.f32 %v3192, %v3199
        %v3222 = vmul.f32 %v3221, 1.442695
        %v3223 = vpow.pop %v3222
        %v3224 = vadd.f32 %v3202, %v3205
        %v3225 = vadd.f32 %v3224, %v3208
        %v3226 = vadd.f32 %v3225, %v3211
        %v3227 = vadd.f32 %v3226, %v3214
        %v3228 = vadd.f32 %v3227, %v3217
        %v3229 = vadd.f32 %v3228, %v3220
        %v3230 = vadd.f32 %v3229, %v3223
        %v3231 = vrcp.pop %v3230
        %v3232 = vmul.f32 %v3202, %v3231
        %3234 = vset.pattern.permute.xlu0 0
        %3235 = vperm.xlu0 %3234, %v3232
        %v3236 = vpop.permute.xlu0 %3235
        %v3238 = vmul.f32 %v3236, %v3141
        %v3239 = vadd.f32 %v3238, 0.0
        %v3240 = vmul.f32 %v3205, %v3231
        %3242 = vset.pattern.permute.xlu0 0
        %3243 = vperm.xlu0 %3242, %v3240
        %v3244 = vpop.permute.xlu0 %3243
        %v3246 = vmul.f32 %v3244, %v3158
        %v3247 = vadd.f32 %v3239, %v3246
        %v3248 = vmul.f32 %v3208, %v3231
        %3250 = vset.pattern.permute.xlu0 0
        %3251 = vperm.xlu0 %3250, %v3248
        %v3252 = vpop.permute.xlu0 %3251
        %v3254 = vmul.f32 %v3252, %v3163
        %v3255 = vadd.f32 %v3247, %v3254
        %v3256 = vmul.f32 %v3211, %v3231
        %3258 = vset.pattern.permute.xlu0 0
        %3259 = vperm.xlu0 %3258, %v3256
        %v3260 = vpop.permute.xlu0 %3259
        %v3262 = vmul.f32 %v3260, %v3168
        %v3263 = vadd.f32 %v3255, %v3262
        %v3264 = vmul.f32 %v3214, %v3231
        %3266 = vset.pattern.permute.xlu0 0
        %3267 = vperm.xlu0 %3266, %v3264
        %v3268 = vpop.permute.xlu0 %3267
        %v3270 = vmul.f32 %v3268, %v3173
        %v3271 = vadd.f32 %v3263, %v3270
        %v3272 = vmul.f32 %v3217, %v3231
        %3274 = vset.pattern.permute.xlu0 0
        %3275 = vperm.xlu0 %3274, %v3272
        %v3276 = vpop.permute.xlu0 %3275
        %v3278 = vmul.f32 %v3276, %v3178
        %v3279 = vadd.f32 %v3271, %v3278
        %v3280 = vmul.f32 %v3220, %v3231
        %3282 = vset.pattern.permute.xlu0 0
        %3283 = vperm.xlu0 %3282, %v3280
        %v3284 = vpop.permute.xlu0 %3283
        %v3286 = vmul.f32 %v3284, %v3183
        %v3287 = vadd.f32 %v3279, %v3286
        %v3288 = vmul.f32 %v3223, %v3231
        %3290 = vset.pattern.permute.xlu0 0
        %3291 = vperm.xlu0 %3290, %v3288
        %v3292 = vpop.permute.xlu0 %3291
        %v3294 = vmul.f32 %v3292, %v3188
        %v3295 = vadd.f32 %v3287, %v3294
        %v3296 = vld [vmem:[%s6] sm:$0x3]
        %v3297 = vlaneseq
        %v3298 = vshrl.u32 %v3297, 7
        %v3299 = vsub.s32 0, %v3298
        %v3300 = vrot.slane %v3296, %v3299
        %v3301 = vmul.f32 %v3295, %v3300
        %3302 = vadd.xlane.f32.xlu0 %v3301
        %v3303 = vpop.xlane.xlu0 %3302
        %v3304 = vlaneseq
        %v3305 = vshrl.u32 %v3304, 7
        %v3306 = vsub.s32 1, %v3305
        %v3307 = vrot.slane %v3296, %v3306
        %v3308 = vmul.f32 %v3295, %v3307
        %3309 = vadd.xlane.f32.xlu0 %v3308
        %v3310 = vpop.xlane.xlu0 %3309
        %vm3311 = vcmask 7168
        %v3312 = vsel %vm3311, %v3303, %v3310
        %v3313 = vld [vmem:[%s7] sm:$0x1]
        %v3315 = vlaneseq
        %v3316 = vshrl.u32 %v3315, 7
        %v3317 = vsub.s32 0, %v3316
        %v3318 = vrot.slane %v3313, %v3317
        %v3320 = vadd.f32 %v3312, %v3318
        %vm3321 = vcmask 15360
        %3322 = vst.msk [vmem:[%s353] sm:$0xff] %vm3321, %v3320
        %p3323 = scmp.lt.s32.totalorder %s25, 1
        %s3324 = scalar_select %p3323, %s25, 1
        %s3325 = smul.addr %s3324, 8
        %s3326 = scalar_lea.vmem %s8, %s3325
        // Predicated region
        $region65: #{tpu_custom_call.1} parent=51 // pred_check
          %p3327 = pneg %p216
        $region66: #{tpu_custom_call.1} parent=51 // pred_check_branch
          %3329 = sbr.rel (%p3327) target = $region68
        $region67: #{tpu_custom_call.1} parent=51 // pred_region
          _
        $region68: #{tpu_custom_call.1} parent=51 // pred_fallthru
          _
      $region52: #{tpu_custom_call.1} parent=5 // pred_fallthru
        _
      %p3330 = scmp.le.s32.totalorder 2, %s20
      // Predicated region
      $region69: #{tpu_custom_call.1} parent=5 // pred_check
        %p3331 = pneg %p3330
      $region70: #{tpu_custom_call.1} parent=5 // pred_check_branch
        %3333 = sbr.rel (%p3331) target = $region72
      $region71: #{tpu_custom_call.1} parent=5 // pred_region
        %s3334 = ssub.s32 %s20, 2
        // Predicated region
        $region73: #{tpu_custom_call.1} parent=71 // pred_check
          %p3335 = pneg %p222
        $region74: #{tpu_custom_call.1} parent=71 // pred_check_branch
          %3337 = sbr.rel (%p3335) target = $region76
        $region75: #{tpu_custom_call.1} parent=71 // pred_region
          %p3338 = scmp.lt.s32.totalorder %s26, 1
          %s3339 = scalar_select %p3338, %s26, 1
          %s3340 = smul.addr %s3339, 8
          %s3341 = scalar_lea.vmem %s8, %s3340
        $region76: #{tpu_custom_call.1} parent=71 // pred_fallthru
          _
      $region72: #{tpu_custom_call.1} parent=5 // pred_fallthru
        _
    $region6: #{tpu_custom_call.1} parent=1 // loop_footer
      %s24 = sadd.s32 1, %s20
    $region7: #{tpu_custom_call.1} parent=1 // loop_footer_branch
      %19 = sbr.rel target = $region3
    $region8: #{tpu_custom_call.1} parent=1 // loop_exit
      _
    %3342 = vsyncpa [#allocation6], 1
    %s3343 = scalar_lea.sflag [#allocation6], 1
    %3344 = vsyncpa %s3343, 1
    %3345 = vsyncpa [#allocation8], 1

</llo_original>
